<compile_context>
chip_gen: v5e
topology: v5e:2x2
jax: 0.10.0
libtpu: 0.0.40
codegen_flags: <defaults>
</compile_context>

<pallas_src>
import math

import jax
import jax.numpy as jnp
import numpy as np
from jax.experimental import pallas as pl
from jax.experimental.pallas import tpu as pltpu

# ----------------------------- model hyper-params ---------------------------
D_MODEL = 32          # small stand-in for 512
NHEAD = 4             # small stand-in for 8
NUM_ENC_LAYERS = 2    # small stand-in for 6
NUM_DEC_LAYERS = 2    # small stand-in for 6
DIM_FF = 64           # small stand-in for 2048
OUT_CHANNELS = 8
LN_EPS = 1e-5
SRC_LEN = 3           # fixed by memory_mask shape (4, 3) in the module
TGT_LEN = 4           # fixed by tgt_mask shape (4, 4) in the module
HEAD_DIM = D_MODEL // NHEAD


# ------------------------------ fused Pallas kernel -------------------------
def _fused_transformer_kernel(*refs):
    (obs_ref,
     e_ln1_g, e_ln1_b, e_wqkv, e_bqkv, e_wo, e_bo,
     e_ln2_g, e_ln2_b, e_w1, e_b1, e_w2, e_b2,
     d_ln1_g, d_ln1_b, d_sa_wqkv, d_sa_bqkv, d_sa_wo, d_sa_bo,
     d_ln2_g, d_ln2_b, d_ca_wqkv, d_ca_bqkv, d_ca_wo, d_ca_bo,
     d_ln3_g, d_ln3_b, d_w1, d_b1, d_w2, d_b2,
     enc_norm_g, enc_norm_b, dec_norm_g, dec_norm_b, head_w, head_b,
     rep_enc, rep_enc_t, rep_dec, rep_dec_t, hm_enc, hm_dec,
     enc_mask, dec_self_mask, dec_cross_mask,
     out_ref) = refs

    scale = 1.0 / math.sqrt(HEAD_DIM)

    def layer_norm(x, g, b):
        mu = jnp.mean(x, axis=-1, keepdims=True)
        xc = x - mu
        var = jnp.mean(xc * xc, axis=-1, keepdims=True)
        return xc * jax.lax.rsqrt(var + LN_EPS) * g + b

    def mha(x_q, x_kv, wqkv, bqkv, wo, bo, amask, hmask, rep, rep_t, is_self):
        # ---- fused QKV projection (q from x_q, k/v from x_kv) ----
        if is_self:
            qkv = jnp.dot(x_q, wqkv, preferred_element_type=jnp.float32) + bqkv
            q = qkv[:, :D_MODEL]
            k = qkv[:, D_MODEL:2 * D_MODEL]
            v = qkv[:, 2 * D_MODEL:]
        else:
            q = (jnp.dot(x_q, wqkv[:, :D_MODEL],
                         preferred_element_type=jnp.float32) + bqkv[:, :D_MODEL])
            kv = (jnp.dot(x_kv, wqkv[:, D_MODEL:],
                          preferred_element_type=jnp.float32) + bqkv[:, D_MODEL:])
            k = kv[:, :D_MODEL]
            v = kv[:, D_MODEL:]
        # ---- merged-head attention: one score matmul, one PV matmul ----
        # replicate queries once per head (rows grouped by head), zero non-head lanes
        q_stack = jnp.dot(rep, q, preferred_element_type=jnp.float32) * hmask
        # all (head, batch, position) scores in a single MXU pass: [H*Mq, Mk]
        s = jax.lax.dot_general(q_stack, k, (((1,), (1,)), ((), ())),
                                preferred_element_type=jnp.float32) * scale
        # block-diagonal additive mask: per-batch blocks + causal/memory mask
        s = s + amask
        s_max = jnp.max(s, axis=-1, keepdims=True)
        p = jnp.exp(s - s_max)
        # no row is fully masked with the module's masks, so the denominator > 0
        p = p / jnp.sum(p, axis=-1, keepdims=True)
        o_stack = jnp.dot(p, v, preferred_element_type=jnp.float32) * hmask
        # collapse the head groups back to [Mq, D] (each lane owned by one head)
        o = jnp.dot(rep_t, o_stack, preferred_element_type=jnp.float32)
        return jnp.dot(o, wo, preferred_element_type=jnp.float32) + bo

    def ffn(x, w1, b1, w2, b2):
        h = jnp.dot(x, w1, preferred_element_type=jnp.float32) + b1
        h = jnp.maximum(h, 0.0)                      # ReLU
        return jnp.dot(h, w2, preferred_element_type=jnp.float32) + b2

    # ------------------------------- encoder --------------------------------
    mem = obs_ref[...]
    am_e, hm_e = enc_mask[...], hm_enc[...]
    rep_e, rep_e_t = rep_enc[...], rep_enc_t[...]
    for l in range(NUM_ENC_LAYERS):
        h = layer_norm(mem, e_ln1_g[l], e_ln1_b[l])
        mem = mem + mha(h, h, e_wqkv[l], e_bqkv[l], e_wo[l], e_bo[l],
                        am_e, hm_e, rep_e, rep_e_t, True)
        h = layer_norm(mem, e_ln2_g[l], e_ln2_b[l])
        mem = mem + ffn(h, e_w1[l], e_b1[l], e_w2[l], e_b2[l])
    mem = layer_norm(mem, enc_norm_g[...], enc_norm_b[...])

    # ------------------------------- decoder --------------------------------
    mdec = out_ref.shape[0]
    x = jnp.zeros((mdec, D_MODEL), jnp.float32)      # tgt = zeros, as in the module
    am_sa, am_ca, hm_d = dec_self_mask[...], dec_cross_mask[...], hm_dec[...]
    rep_d, rep_d_t = rep_dec[...], rep_dec_t[...]
    for l in range(NUM_DEC_LAYERS):
        h = layer_norm(x, d_ln1_g[l], d_ln1_b[l])
        x = x + mha(h, h, d_sa_wqkv[l], d_sa_bqkv[l], d_sa_wo[l], d_sa_bo[l],
                    am_sa, hm_d, rep_d, rep_d_t, True)
        h = layer_norm(x, d_ln2_g[l], d_ln2_b[l])
        x = x + mha(h, mem, d_ca_wqkv[l], d_ca_bqkv[l], d_ca_wo[l], d_ca_bo[l],
                    am_ca, hm_d, rep_d, rep_d_t, False)
        h = layer_norm(x, d_ln3_g[l], d_ln3_b[l])
        x = x + ffn(h, d_w1[l], d_b1[l], d_w2[l], d_b2[l])
    x = layer_norm(x, dec_norm_g[...], dec_norm_b[...])

    # --------------------------------- head ---------------------------------
    out_ref[...] = (jnp.dot(x, head_w[...], preferred_element_type=jnp.float32)
                    + head_b[...])


# --------------------- static helpers for merged-head attention -------------
def _attention_constants(batch):
    menc = batch * SRC_LEN
    mdec = batch * TGT_LEN

    def rep(m):                        # [H*m, m]: vertically stacked identities
        return np.tile(np.eye(m, dtype=np.float32), (NHEAD, 1))

    def head_mask(m):                  # [H*m, D]: ones on the owning head's lanes
        hm = np.zeros((NHEAD * m, D_MODEL), np.float32)
        for h in range(NHEAD):
            hm[h * m:(h + 1) * m, h * HEAD_DIM:(h + 1) * HEAD_DIM] = 1.0
        return hm

    def stacked_mask(sq, sk, base):    # [H*B*sq, B*sk] additive mask
        mq, mk = batch * sq, batch * sk
        mask = np.full((mq, mk), -np.inf, np.float32)
        for b in range(batch):
            mask[b * sq:(b + 1) * sq, b * sk:(b + 1) * sk] = base
        return np.tile(mask, (NHEAD, 1))

    # masks exactly as the PyTorch module builds them
    enc_base = np.zeros((SRC_LEN, SRC_LEN), np.float32)
    tgt_base = np.where(np.tril(np.ones((TGT_LEN, TGT_LEN), bool), 0),
                        0.0, -np.inf).astype(np.float32)
    mem_base = np.where(np.tril(np.ones((TGT_LEN, SRC_LEN), bool), 1),
                        0.0, -np.inf).astype(np.float32)

    return dict(
        rep_enc=jnp.asarray(rep(menc)), rep_enc_t=jnp.asarray(rep(menc).T),
        rep_dec=jnp.asarray(rep(mdec)), rep_dec_t=jnp.asarray(rep(mdec).T),
        hm_enc=jnp.asarray(head_mask(menc)), hm_dec=jnp.asarray(head_mask(mdec)),
        enc_mask=jnp.asarray(stacked_mask(SRC_LEN, SRC_LEN, enc_base)),
        dec_self_mask=jnp.asarray(stacked_mask(TGT_LEN, TGT_LEN, tgt_base)),
        dec_cross_mask=jnp.asarray(stacked_mask(TGT_LEN, SRC_LEN, mem_base)),
    )


_ENC_KEYS = ("ln1_g", "ln1_b", "wqkv", "bqkv", "wo", "bo",
             "ln2_g", "ln2_b", "w1", "b1", "w2", "b2")
_DEC_KEYS = ("ln1_g", "ln1_b", "sa_wqkv", "sa_bqkv", "sa_wo", "sa_bo",
             "ln2_g", "ln2_b", "ca_wqkv", "ca_bqkv", "ca_wo", "ca_bo",
             "ln3_g", "ln3_b", "w1", "b1", "w2", "b2")
_CONST_KEYS = ("rep_enc", "rep_enc_t", "rep_dec", "rep_dec_t",
               "hm_enc", "hm_dec", "enc_mask", "dec_self_mask", "dec_cross_mask")


def dexterous_transformer_forward(params, observation_embedding):
    B, S, D = observation_embedding.shape
    assert S == SRC_LEN and D == D_MODEL
    menc = B * SRC_LEN
    mdec = B * TGT_LEN
    consts = _attention_constants(B)
    flat = ([observation_embedding.reshape(menc, D_MODEL)]
            + [params["enc"][k] for k in _ENC_KEYS]
            + [params["dec"][k] for k in _DEC_KEYS]
            + [params["enc_norm_g"], params["enc_norm_b"],
               params["dec_norm_g"], params["dec_norm_b"],
               params["head_w"], params["head_b"]]
            + [consts[k] for k in _CONST_KEYS])
    vmem = pl.BlockSpec(memory_space=pltpu.MemorySpace.VMEM)
    out = pl.pallas_call(
        _fused_transformer_kernel,
        out_shape=jax.ShapeDtypeStruct((mdec, OUT_CHANNELS), jnp.float32),
        in_specs=[vmem] * len(flat),
        out_specs=vmem,
    )(*flat)
    return out.reshape(B, TGT_LEN, OUT_CHANNELS)


# ------------------------------ parameter init ------------------------------
def _dense(key, d_in, d_out, scale=0.05):
    kw, kb = jax.random.split(key)
    return (scale * jax.random.normal(kw, (d_in, d_out), jnp.float32),
            scale * jax.random.normal(kb, (1, d_out), jnp.float32))


def _ln_params(key):
    kg, kb = jax.random.split(key)
    return (1.0 + 0.1 * jax.random.normal(kg, (1, D_MODEL), jnp.float32),
            0.1 * jax.random.normal(kb, (1, D_MODEL), jnp.float32))


def _enc_layer_params(key):
    ks = jax.random.split(key, 6)
    wqkv, bqkv = _dense(ks[0], D_MODEL, 3 * D_MODEL)
    wo, bo = _dense(ks[1], D_MODEL, D_MODEL)
    w1, b1 = _dense(ks[2], D_MODEL, DIM_FF)
    w2, b2 = _dense(ks[3], DIM_FF, D_MODEL)
    ln1_g, ln1_b = _ln_params(ks[4])
    ln2_g, ln2_b = _ln_params(ks[5])
    return dict(ln1_g=ln1_g, ln1_b=ln1_b, wqkv=wqkv, bqkv=bqkv, wo=wo, bo=bo,
                ln2_g=ln2_g, ln2_b=ln2_b, w1=w1, b1=b1, w2=w2, b2=b2)


def _dec_layer_params(key):
    ks = jax.random.split(key, 9)
    sa_wqkv, sa_bqkv = _dense(ks[0], D_MODEL, 3 * D_MODEL)
    sa_wo, sa_bo = _dense(ks[1], D_MODEL, D_MODEL)
    ca_wqkv, ca_bqkv = _dense(ks[2], D_MODEL, 3 * D_MODEL)
    ca_wo, ca_bo = _dense(ks[3], D_MODEL, D_MODEL)
    w1, b1 = _dense(ks[4], D_MODEL, DIM_FF)
    w2, b2 = _dense(ks[5], DIM_FF, D_MODEL)
    ln1_g, ln1_b = _ln_params(ks[6])
    ln2_g, ln2_b = _ln_params(ks[7])
    ln3_g, ln3_b = _ln_params(ks[8])
    return dict(ln1_g=ln1_g, ln1_b=ln1_b,
                sa_wqkv=sa_wqkv, sa_bqkv=sa_bqkv, sa_wo=sa_wo, sa_bo=sa_bo,
                ln2_g=ln2_g, ln2_b=ln2_b,
                ca_wqkv=ca_wqkv, ca_bqkv=ca_bqkv, ca_wo=ca_wo, ca_bo=ca_bo,
                ln3_g=ln3_g, ln3_b=ln3_b, w1=w1, b1=b1, w2=w2, b2=b2)


def _stack(layer_dicts):
    return {k: jnp.stack([d[k] for d in layer_dicts], axis=0)
            for k in layer_dicts[0]}


def init_params(key):
    keys = jax.random.split(key, NUM_ENC_LAYERS + NUM_DEC_LAYERS + 3)
    enc = _stack([_enc_layer_params(keys[i]) for i in range(NUM_ENC_LAYERS)])
    dec = _stack([_dec_layer_params(keys[NUM_ENC_LAYERS + i])
                  for i in range(NUM_DEC_LAYERS)])
    enc_norm_g, enc_norm_b = _ln_params(keys[-3])
    dec_norm_g, dec_norm_b = _ln_params(keys[-2])
    head_w, head_b = _dense(keys[-1], D_MODEL, OUT_CHANNELS)
    return dict(enc=enc, dec=dec,
                enc_norm_g=enc_norm_g, enc_norm_b=enc_norm_b,
                dec_norm_g=dec_norm_g, dec_norm_b=dec_norm_b,
                head_w=head_w, head_b=head_b)


# ------------------------- pure-JAX reference (sanity) ----------------------
def ref_forward(params, obs):
    tgt_mask = jnp.where(jnp.tril(jnp.ones((TGT_LEN, TGT_LEN), bool), 0), 0.0, -jnp.inf)
    mem_mask = jnp.where(jnp.tril(jnp.ones((TGT_LEN, SRC_LEN), bool), 1), 0.0, -jnp.inf)

    def ln(x, g, b):
        mu = x.mean(-1, keepdims=True)
        var = ((x - mu) ** 2).mean(-1, keepdims=True)
        return (x - mu) / jnp.sqrt(var + LN_EPS) * g + b

    def mha(xq, xkv, wqkv, bqkv, wo, bo, mask):
        B, Sq, D = xq.shape
        Sk = xkv.shape[1]
        hd = D // NHEAD
        wq, wk, wv = wqkv[:, :D], wqkv[:, D:2 * D], wqkv[:, 2 * D:]
        bq, bk, bv = bqkv[:, :D], bqkv[:, D:2 * D], bqkv[:, 2 * D:]
        q = (xq @ wq + bq).reshape(B, Sq, NHEAD, hd).transpose(0, 2, 1, 3)
        k = (xkv @ wk + bk).reshape(B, Sk, NHEAD, hd).transpose(0, 2, 1, 3)
        v = (xkv @ wv + bv).reshape(B, Sk, NHEAD, hd).transpose(0, 2, 1, 3)
        s = jnp.einsum("bhqd,bhkd->bhqk", q, k) / math.sqrt(hd) + mask
        a = jax.nn.softmax(s, axis=-1)
        o = jnp.einsum("bhqk,bhkd->bhqd", a, v).transpose(0, 2, 1, 3).reshape(B, Sq, D)
        return o @ wo + bo

    def ff(x, w1, b1, w2, b2):
        return jnp.maximum(x @ w1 + b1, 0.0) @ w2 + b2

    enc, dec = params["enc"], params["dec"]
    mem = obs
    for l in range(NUM_ENC_LAYERS):
        h = ln(mem, enc["ln1_g"][l], enc["ln1_b"][l])
        mem = mem + mha(h, h, enc["wqkv"][l], enc["bqkv"][l],
                        enc["wo"][l], enc["bo"][l], 0.0)
        h = ln(mem, enc["ln2_g"][l], enc["ln2_b"][l])
        mem = mem + ff(h, enc["w1"][l], enc["b1"][l], enc["w2"][l], enc["b2"][l])
    mem = ln(mem, params["enc_norm_g"], params["enc_norm_b"])

    x = jnp.zeros((obs.shape[0], TGT_LEN, D_MODEL), jnp.float32)
    for l in range(NUM_DEC_LAYERS):
        h = ln(x, dec["ln1_g"][l], dec["ln1_b"][l])
        x = x + mha(h, h, dec["sa_wqkv"][l], dec["sa_bqkv"][l],
                    dec["sa_wo"][l], dec["sa_bo"][l], tgt_mask)
        h = ln(x, dec["ln2_g"][l], dec["ln2_b"][l])
        x = x + mha(h, mem, dec["ca_wqkv"][l], dec["ca_bqkv"][l],
                    dec["ca_wo"][l], dec["ca_bo"][l], mem_mask)
        h = ln(x, dec["ln3_g"][l], dec["ln3_b"][l])
        x = x + ff(h, dec["w1"][l], dec["b1"][l], dec["w2"][l], dec["b2"][l])
    x = ln(x, params["dec_norm_g"], params["dec_norm_b"])
    return x @ params["head_w"] + params["head_b"]


# ------------------------------------ main -----------------------------------
if __name__ == "__main__":
    key = jax.random.PRNGKey(0)
    k_param, k_input = jax.random.split(key)
    params = init_params(k_param)

    # observation_embedding: [batch, src_seq=3, d_model]
    obs = jax.random.normal(k_input, (2, SRC_LEN, D_MODEL), jnp.float32)

    fwd = jax.jit(dexterous_transformer_forward)
    out = jax.block_until_ready(fwd(params, obs))

    assert out.shape == (2, TGT_LEN, OUT_CHANNELS), out.shape
    assert bool(jnp.all(jnp.isfinite(out)))

    ref = ref_forward(params, obs)
    max_err = float(jnp.max(jnp.abs(out - ref)))
    assert jnp.allclose(out, ref, rtol=3e-3, atol=3e-3), max_err

    print("KERNEL_OK")
</pallas_src>

<mosaic_0001>
module attributes {stable_mosaic.version = 11 : i64} {
  func.func @_fused_transformer_kernel(%arg0: memref<6x32xf32, #tpu.memory_space<vmem>>, %arg1: memref<2x1x32xf32, #tpu.memory_space<vmem>>, %arg2: memref<2x1x32xf32, #tpu.memory_space<vmem>>, %arg3: memref<2x32x96xf32, #tpu.memory_space<vmem>>, %arg4: memref<2x1x96xf32, #tpu.memory_space<vmem>>, %arg5: memref<2x32x32xf32, #tpu.memory_space<vmem>>, %arg6: memref<2x1x32xf32, #tpu.memory_space<vmem>>, %arg7: memref<2x1x32xf32, #tpu.memory_space<vmem>>, %arg8: memref<2x1x32xf32, #tpu.memory_space<vmem>>, %arg9: memref<2x32x64xf32, #tpu.memory_space<vmem>>, %arg10: memref<2x1x64xf32, #tpu.memory_space<vmem>>, %arg11: memref<2x64x32xf32, #tpu.memory_space<vmem>>, %arg12: memref<2x1x32xf32, #tpu.memory_space<vmem>>, %arg13: memref<2x1x32xf32, #tpu.memory_space<vmem>>, %arg14: memref<2x1x32xf32, #tpu.memory_space<vmem>>, %arg15: memref<2x32x96xf32, #tpu.memory_space<vmem>>, %arg16: memref<2x1x96xf32, #tpu.memory_space<vmem>>, %arg17: memref<2x32x32xf32, #tpu.memory_space<vmem>>, %arg18: memref<2x1x32xf32, #tpu.memory_space<vmem>>, %arg19: memref<2x1x32xf32, #tpu.memory_space<vmem>>, %arg20: memref<2x1x32xf32, #tpu.memory_space<vmem>>, %arg21: memref<2x32x96xf32, #tpu.memory_space<vmem>>, %arg22: memref<2x1x96xf32, #tpu.memory_space<vmem>>, %arg23: memref<2x32x32xf32, #tpu.memory_space<vmem>>, %arg24: memref<2x1x32xf32, #tpu.memory_space<vmem>>, %arg25: memref<2x1x32xf32, #tpu.memory_space<vmem>>, %arg26: memref<2x1x32xf32, #tpu.memory_space<vmem>>, %arg27: memref<2x32x64xf32, #tpu.memory_space<vmem>>, %arg28: memref<2x1x64xf32, #tpu.memory_space<vmem>>, %arg29: memref<2x64x32xf32, #tpu.memory_space<vmem>>, %arg30: memref<2x1x32xf32, #tpu.memory_space<vmem>>, %arg31: memref<1x32xf32, #tpu.memory_space<vmem>>, %arg32: memref<1x32xf32, #tpu.memory_space<vmem>>, %arg33: memref<1x32xf32, #tpu.memory_space<vmem>>, %arg34: memref<1x32xf32, #tpu.memory_space<vmem>>, %arg35: memref<32x8xf32, #tpu.memory_space<vmem>>, %arg36: memref<1x8xf32, #tpu.memory_space<vmem>>, %arg37: memref<24x6xf32, #tpu.memory_space<vmem>>, %arg38: memref<6x24xf32, #tpu.memory_space<vmem>>, %arg39: memref<32x8xf32, #tpu.memory_space<vmem>>, %arg40: memref<8x32xf32, #tpu.memory_space<vmem>>, %arg41: memref<24x32xf32, #tpu.memory_space<vmem>>, %arg42: memref<32x32xf32, #tpu.memory_space<vmem>>, %arg43: memref<24x6xf32, #tpu.memory_space<vmem>>, %arg44: memref<32x8xf32, #tpu.memory_space<vmem>>, %arg45: memref<32x6xf32, #tpu.memory_space<vmem>>, %arg46: memref<8x8xf32, #tpu.memory_space<vmem>>) attributes {dimension_semantics = [], scalar_prefetch = 0 : i64, scratch_operands = 0 : i64, tpu.core_type = #tpu.core_type<tc>} {
    %c0 = arith.constant 0 : index
    %c0_0 = arith.constant 0 : index
    %0 = vector.load %arg0[%c0, %c0_0] : memref<6x32xf32, #tpu.memory_space<vmem>>, vector<6x32xf32>
    %c0_1 = arith.constant 0 : index
    %c0_2 = arith.constant 0 : index
    %1 = vector.load %arg43[%c0_1, %c0_2] : memref<24x6xf32, #tpu.memory_space<vmem>>, vector<24x6xf32>
    %c0_3 = arith.constant 0 : index
    %c0_4 = arith.constant 0 : index
    %2 = vector.load %arg41[%c0_3, %c0_4] : memref<24x32xf32, #tpu.memory_space<vmem>>, vector<24x32xf32>
    %c0_5 = arith.constant 0 : index
    %c0_6 = arith.constant 0 : index
    %3 = vector.load %arg37[%c0_5, %c0_6] : memref<24x6xf32, #tpu.memory_space<vmem>>, vector<24x6xf32>
    %c0_7 = arith.constant 0 : index
    %c0_8 = arith.constant 0 : index
    %4 = vector.load %arg38[%c0_7, %c0_8] : memref<6x24xf32, #tpu.memory_space<vmem>>, vector<6x24xf32>
    %c0_9 = arith.constant 0 : index
    %c0_10 = arith.constant 0 : index
    %c0_11 = arith.constant 0 : index
    %5 = vector.load %arg1[%c0_9, %c0_10, %c0_11] : memref<2x1x32xf32, #tpu.memory_space<vmem>>, vector<1x1x32xf32>
    %6 = vector.shape_cast %5 : vector<1x1x32xf32> to vector<1x32xf32>
    %c0_12 = arith.constant 0 : index
    %c0_13 = arith.constant 0 : index
    %c0_14 = arith.constant 0 : index
    %7 = vector.load %arg2[%c0_12, %c0_13, %c0_14] : memref<2x1x32xf32, #tpu.memory_space<vmem>>, vector<1x1x32xf32>
    %8 = vector.shape_cast %7 : vector<1x1x32xf32> to vector<1x32xf32>
    %cst = arith.constant dense<0.000000e+00> : vector<6xf32>
    %9 = vector.multi_reduction <add>, %0, %cst [1] : vector<6x32xf32> to vector<6xf32>
    %10 = vector.shape_cast %9 : vector<6xf32> to vector<6x1xf32>
    %cst_15 = arith.constant 3.200000e+01 : f32
    %11 = vector.broadcast %cst_15 : f32 to vector<6x1xf32>
    %12 = arith.divf %10, %11 : vector<6x1xf32>
    %13 = vector.broadcast %12 : vector<6x1xf32> to vector<6x32xf32>
    %14 = arith.subf %0, %13 : vector<6x32xf32>
    %15 = arith.mulf %14, %14 : vector<6x32xf32>
    %cst_16 = arith.constant dense<0.000000e+00> : vector<6xf32>
    %16 = vector.multi_reduction <add>, %15, %cst_16 [1] : vector<6x32xf32> to vector<6xf32>
    %17 = vector.shape_cast %16 : vector<6xf32> to vector<6x1xf32>
    %cst_17 = arith.constant 3.200000e+01 : f32
    %18 = vector.broadcast %cst_17 : f32 to vector<6x1xf32>
    %19 = arith.divf %17, %18 : vector<6x1xf32>
    %cst_18 = arith.constant 9.99999974E-6 : f32
    %20 = vector.broadcast %cst_18 : f32 to vector<6x1xf32>
    %21 = arith.addf %19, %20 : vector<6x1xf32>
    %22 = math.rsqrt %21 : vector<6x1xf32>
    %23 = vector.broadcast %22 : vector<6x1xf32> to vector<6x32xf32>
    %24 = arith.mulf %14, %23 : vector<6x32xf32>
    %25 = vector.broadcast %6 : vector<1x32xf32> to vector<6x32xf32>
    %26 = arith.mulf %24, %25 : vector<6x32xf32>
    %27 = vector.broadcast %8 : vector<1x32xf32> to vector<6x32xf32>
    %28 = arith.addf %26, %27 : vector<6x32xf32>
    %c0_19 = arith.constant 0 : index
    %c0_20 = arith.constant 0 : index
    %c0_21 = arith.constant 0 : index
    %29 = vector.load %arg3[%c0_19, %c0_20, %c0_21] : memref<2x32x96xf32, #tpu.memory_space<vmem>>, vector<1x32x96xf32>
    %30 = vector.shape_cast %29 : vector<1x32x96xf32> to vector<32x96xf32>
    %c0_22 = arith.constant 0 : index
    %c0_23 = arith.constant 0 : index
    %c0_24 = arith.constant 0 : index
    %31 = vector.load %arg4[%c0_22, %c0_23, %c0_24] : memref<2x1x96xf32, #tpu.memory_space<vmem>>, vector<1x1x96xf32>
    %32 = vector.shape_cast %31 : vector<1x1x96xf32> to vector<1x96xf32>
    %c0_25 = arith.constant 0 : index
    %c0_26 = arith.constant 0 : index
    %c0_27 = arith.constant 0 : index
    %33 = vector.load %arg5[%c0_25, %c0_26, %c0_27] : memref<2x32x32xf32, #tpu.memory_space<vmem>>, vector<1x32x32xf32>
    %34 = vector.shape_cast %33 : vector<1x32x32xf32> to vector<32x32xf32>
    %c0_28 = arith.constant 0 : index
    %c0_29 = arith.constant 0 : index
    %c0_30 = arith.constant 0 : index
    %35 = vector.load %arg6[%c0_28, %c0_29, %c0_30] : memref<2x1x32xf32, #tpu.memory_space<vmem>>, vector<1x1x32xf32>
    %36 = vector.shape_cast %35 : vector<1x1x32xf32> to vector<1x32xf32>
    %cst_31 = arith.constant dense<0.000000e+00> : vector<6x96xf32>
    %37 = tpu.matmul %28, %30, %cst_31 {dimension_numbers = #tpu.dot_dimension_numbers<[1], [0], [0], [1], [0, 0, 1, 1], [], []>} : vector<6x32xf32>, vector<32x96xf32>, vector<6x96xf32> -> vector<6x96xf32>
    %38 = vector.broadcast %32 : vector<1x96xf32> to vector<6x96xf32>
    %39 = arith.addf %37, %38 : vector<6x96xf32>
    %40 = vector.extract_strided_slice %39 {offsets = [0, 0], sizes = [6, 32], strides = [1, 1]} : vector<6x96xf32> to vector<6x32xf32>
    %41 = vector.extract_strided_slice %39 {offsets = [0, 32], sizes = [6, 32], strides = [1, 1]} : vector<6x96xf32> to vector<6x32xf32>
    %42 = vector.extract_strided_slice %39 {offsets = [0, 64], sizes = [6, 32], strides = [1, 1]} : vector<6x96xf32> to vector<6x32xf32>
    %cst_32 = arith.constant dense<0.000000e+00> : vector<24x32xf32>
    %43 = tpu.matmul %3, %40, %cst_32 {dimension_numbers = #tpu.dot_dimension_numbers<[1], [0], [0], [1], [0, 0, 1, 1], [], []>} : vector<24x6xf32>, vector<6x32xf32>, vector<24x32xf32> -> vector<24x32xf32>
    %44 = arith.mulf %43, %2 : vector<24x32xf32>
    %cst_33 = arith.constant dense<0.000000e+00> : vector<24x6xf32>
    %45 = tpu.matmul %44, %41, %cst_33 {dimension_numbers = #tpu.dot_dimension_numbers<[1], [1], [0], [0], [0, 0, 1, 0], [], []>} : vector<24x32xf32>, vector<6x32xf32>, vector<24x6xf32> -> vector<24x6xf32>
    %cst_34 = arith.constant 0.353553385 : f32
    %46 = vector.broadcast %cst_34 : f32 to vector<24x6xf32>
    %47 = arith.mulf %45, %46 : vector<24x6xf32>
    %48 = arith.addf %47, %1 : vector<24x6xf32>
    %cst_35 = arith.constant dense<0xFF800000> : vector<24xf32>
    %49 = vector.multi_reduction <maximumf>, %48, %cst_35 [1] : vector<24x6xf32> to vector<24xf32>
    %50 = vector.shape_cast %49 : vector<24xf32> to vector<24x1xf32>
    %51 = vector.broadcast %50 : vector<24x1xf32> to vector<24x6xf32>
    %52 = arith.subf %48, %51 : vector<24x6xf32>
    %53 = math.exp %52 : vector<24x6xf32>
    %cst_36 = arith.constant dense<0.000000e+00> : vector<24xf32>
    %54 = vector.multi_reduction <add>, %53, %cst_36 [1] : vector<24x6xf32> to vector<24xf32>
    %55 = vector.shape_cast %54 : vector<24xf32> to vector<24x1xf32>
    %56 = vector.broadcast %55 : vector<24x1xf32> to vector<24x6xf32>
    %57 = arith.divf %53, %56 : vector<24x6xf32>
    %cst_37 = arith.constant dense<0.000000e+00> : vector<24x32xf32>
    %58 = tpu.matmul %57, %42, %cst_37 {dimension_numbers = #tpu.dot_dimension_numbers<[1], [0], [0], [1], [0, 0, 1, 1], [], []>} : vector<24x6xf32>, vector<6x32xf32>, vector<24x32xf32> -> vector<24x32xf32>
    %59 = arith.mulf %58, %2 : vector<24x32xf32>
    %cst_38 = arith.constant dense<0.000000e+00> : vector<6x32xf32>
    %60 = tpu.matmul %4, %59, %cst_38 {dimension_numbers = #tpu.dot_dimension_numbers<[1], [0], [0], [1], [0, 0, 1, 1], [], []>} : vector<6x24xf32>, vector<24x32xf32>, vector<6x32xf32> -> vector<6x32xf32>
    %cst_39 = arith.constant dense<0.000000e+00> : vector<6x32xf32>
    %61 = tpu.matmul %60, %34, %cst_39 {dimension_numbers = #tpu.dot_dimension_numbers<[1], [0], [0], [1], [0, 0, 1, 1], [], []>} : vector<6x32xf32>, vector<32x32xf32>, vector<6x32xf32> -> vector<6x32xf32>
    %62 = vector.broadcast %36 : vector<1x32xf32> to vector<6x32xf32>
    %63 = arith.addf %61, %62 : vector<6x32xf32>
    %64 = arith.addf %0, %63 : vector<6x32xf32>
    %c0_40 = arith.constant 0 : index
    %c0_41 = arith.constant 0 : index
    %c0_42 = arith.constant 0 : index
    %65 = vector.load %arg7[%c0_40, %c0_41, %c0_42] : memref<2x1x32xf32, #tpu.memory_space<vmem>>, vector<1x1x32xf32>
    %66 = vector.shape_cast %65 : vector<1x1x32xf32> to vector<1x32xf32>
    %c0_43 = arith.constant 0 : index
    %c0_44 = arith.constant 0 : index
    %c0_45 = arith.constant 0 : index
    %67 = vector.load %arg8[%c0_43, %c0_44, %c0_45] : memref<2x1x32xf32, #tpu.memory_space<vmem>>, vector<1x1x32xf32>
    %68 = vector.shape_cast %67 : vector<1x1x32xf32> to vector<1x32xf32>
    %cst_46 = arith.constant dense<0.000000e+00> : vector<6xf32>
    %69 = vector.multi_reduction <add>, %64, %cst_46 [1] : vector<6x32xf32> to vector<6xf32>
    %70 = vector.shape_cast %69 : vector<6xf32> to vector<6x1xf32>
    %cst_47 = arith.constant 3.200000e+01 : f32
    %71 = vector.broadcast %cst_47 : f32 to vector<6x1xf32>
    %72 = arith.divf %70, %71 : vector<6x1xf32>
    %73 = vector.broadcast %72 : vector<6x1xf32> to vector<6x32xf32>
    %74 = arith.subf %64, %73 : vector<6x32xf32>
    %75 = arith.mulf %74, %74 : vector<6x32xf32>
    %cst_48 = arith.constant dense<0.000000e+00> : vector<6xf32>
    %76 = vector.multi_reduction <add>, %75, %cst_48 [1] : vector<6x32xf32> to vector<6xf32>
    %77 = vector.shape_cast %76 : vector<6xf32> to vector<6x1xf32>
    %cst_49 = arith.constant 3.200000e+01 : f32
    %78 = vector.broadcast %cst_49 : f32 to vector<6x1xf32>
    %79 = arith.divf %77, %78 : vector<6x1xf32>
    %cst_50 = arith.constant 9.99999974E-6 : f32
    %80 = vector.broadcast %cst_50 : f32 to vector<6x1xf32>
    %81 = arith.addf %79, %80 : vector<6x1xf32>
    %82 = math.rsqrt %81 : vector<6x1xf32>
    %83 = vector.broadcast %82 : vector<6x1xf32> to vector<6x32xf32>
    %84 = arith.mulf %74, %83 : vector<6x32xf32>
    %85 = vector.broadcast %66 : vector<1x32xf32> to vector<6x32xf32>
    %86 = arith.mulf %84, %85 : vector<6x32xf32>
    %87 = vector.broadcast %68 : vector<1x32xf32> to vector<6x32xf32>
    %88 = arith.addf %86, %87 : vector<6x32xf32>
    %c0_51 = arith.constant 0 : index
    %c0_52 = arith.constant 0 : index
    %c0_53 = arith.constant 0 : index
    %89 = vector.load %arg9[%c0_51, %c0_52, %c0_53] : memref<2x32x64xf32, #tpu.memory_space<vmem>>, vector<1x32x64xf32>
    %90 = vector.shape_cast %89 : vector<1x32x64xf32> to vector<32x64xf32>
    %c0_54 = arith.constant 0 : index
    %c0_55 = arith.constant 0 : index
    %c0_56 = arith.constant 0 : index
    %91 = vector.load %arg10[%c0_54, %c0_55, %c0_56] : memref<2x1x64xf32, #tpu.memory_space<vmem>>, vector<1x1x64xf32>
    %92 = vector.shape_cast %91 : vector<1x1x64xf32> to vector<1x64xf32>
    %c0_57 = arith.constant 0 : index
    %c0_58 = arith.constant 0 : index
    %c0_59 = arith.constant 0 : index
    %93 = vector.load %arg11[%c0_57, %c0_58, %c0_59] : memref<2x64x32xf32, #tpu.memory_space<vmem>>, vector<1x64x32xf32>
    %94 = vector.shape_cast %93 : vector<1x64x32xf32> to vector<64x32xf32>
    %c0_60 = arith.constant 0 : index
    %c0_61 = arith.constant 0 : index
    %c0_62 = arith.constant 0 : index
    %95 = vector.load %arg12[%c0_60, %c0_61, %c0_62] : memref<2x1x32xf32, #tpu.memory_space<vmem>>, vector<1x1x32xf32>
    %96 = vector.shape_cast %95 : vector<1x1x32xf32> to vector<1x32xf32>
    %cst_63 = arith.constant dense<0.000000e+00> : vector<6x64xf32>
    %97 = tpu.matmul %88, %90, %cst_63 {dimension_numbers = #tpu.dot_dimension_numbers<[1], [0], [0], [1], [0, 0, 1, 1], [], []>} : vector<6x32xf32>, vector<32x64xf32>, vector<6x64xf32> -> vector<6x64xf32>
    %98 = vector.broadcast %92 : vector<1x64xf32> to vector<6x64xf32>
    %99 = arith.addf %97, %98 : vector<6x64xf32>
    %cst_64 = arith.constant 0.000000e+00 : f32
    %100 = vector.broadcast %cst_64 : f32 to vector<6x64xf32>
    %101 = arith.maximumf %99, %100 : vector<6x64xf32>
    %cst_65 = arith.constant dense<0.000000e+00> : vector<6x32xf32>
    %102 = tpu.matmul %101, %94, %cst_65 {dimension_numbers = #tpu.dot_dimension_numbers<[1], [0], [0], [1], [0, 0, 1, 1], [], []>} : vector<6x64xf32>, vector<64x32xf32>, vector<6x32xf32> -> vector<6x32xf32>
    %103 = vector.broadcast %96 : vector<1x32xf32> to vector<6x32xf32>
    %104 = arith.addf %102, %103 : vector<6x32xf32>
    %105 = arith.addf %64, %104 : vector<6x32xf32>
    %c1 = arith.constant 1 : index
    %c0_66 = arith.constant 0 : index
    %c0_67 = arith.constant 0 : index
    %106 = vector.load %arg1[%c1, %c0_66, %c0_67] : memref<2x1x32xf32, #tpu.memory_space<vmem>>, vector<1x1x32xf32>
    %107 = vector.shape_cast %106 : vector<1x1x32xf32> to vector<1x32xf32>
    %c1_68 = arith.constant 1 : index
    %c0_69 = arith.constant 0 : index
    %c0_70 = arith.constant 0 : index
    %108 = vector.load %arg2[%c1_68, %c0_69, %c0_70] : memref<2x1x32xf32, #tpu.memory_space<vmem>>, vector<1x1x32xf32>
    %109 = vector.shape_cast %108 : vector<1x1x32xf32> to vector<1x32xf32>
    %cst_71 = arith.constant dense<0.000000e+00> : vector<6xf32>
    %110 = vector.multi_reduction <add>, %105, %cst_71 [1] : vector<6x32xf32> to vector<6xf32>
    %111 = vector.shape_cast %110 : vector<6xf32> to vector<6x1xf32>
    %cst_72 = arith.constant 3.200000e+01 : f32
    %112 = vector.broadcast %cst_72 : f32 to vector<6x1xf32>
    %113 = arith.divf %111, %112 : vector<6x1xf32>
    %114 = vector.broadcast %113 : vector<6x1xf32> to vector<6x32xf32>
    %115 = arith.subf %105, %114 : vector<6x32xf32>
    %116 = arith.mulf %115, %115 : vector<6x32xf32>
    %cst_73 = arith.constant dense<0.000000e+00> : vector<6xf32>
    %117 = vector.multi_reduction <add>, %116, %cst_73 [1] : vector<6x32xf32> to vector<6xf32>
    %118 = vector.shape_cast %117 : vector<6xf32> to vector<6x1xf32>
    %cst_74 = arith.constant 3.200000e+01 : f32
    %119 = vector.broadcast %cst_74 : f32 to vector<6x1xf32>
    %120 = arith.divf %118, %119 : vector<6x1xf32>
    %cst_75 = arith.constant 9.99999974E-6 : f32
    %121 = vector.broadcast %cst_75 : f32 to vector<6x1xf32>
    %122 = arith.addf %120, %121 : vector<6x1xf32>
    %123 = math.rsqrt %122 : vector<6x1xf32>
    %124 = vector.broadcast %123 : vector<6x1xf32> to vector<6x32xf32>
    %125 = arith.mulf %115, %124 : vector<6x32xf32>
    %126 = vector.broadcast %107 : vector<1x32xf32> to vector<6x32xf32>
    %127 = arith.mulf %125, %126 : vector<6x32xf32>
    %128 = vector.broadcast %109 : vector<1x32xf32> to vector<6x32xf32>
    %129 = arith.addf %127, %128 : vector<6x32xf32>
    %c1_76 = arith.constant 1 : index
    %c0_77 = arith.constant 0 : index
    %c0_78 = arith.constant 0 : index
    %130 = vector.load %arg3[%c1_76, %c0_77, %c0_78] : memref<2x32x96xf32, #tpu.memory_space<vmem>>, vector<1x32x96xf32>
    %131 = vector.shape_cast %130 : vector<1x32x96xf32> to vector<32x96xf32>
    %c1_79 = arith.constant 1 : index
    %c0_80 = arith.constant 0 : index
    %c0_81 = arith.constant 0 : index
    %132 = vector.load %arg4[%c1_79, %c0_80, %c0_81] : memref<2x1x96xf32, #tpu.memory_space<vmem>>, vector<1x1x96xf32>
    %133 = vector.shape_cast %132 : vector<1x1x96xf32> to vector<1x96xf32>
    %c1_82 = arith.constant 1 : index
    %c0_83 = arith.constant 0 : index
    %c0_84 = arith.constant 0 : index
    %134 = vector.load %arg5[%c1_82, %c0_83, %c0_84] : memref<2x32x32xf32, #tpu.memory_space<vmem>>, vector<1x32x32xf32>
    %135 = vector.shape_cast %134 : vector<1x32x32xf32> to vector<32x32xf32>
    %c1_85 = arith.constant 1 : index
    %c0_86 = arith.constant 0 : index
    %c0_87 = arith.constant 0 : index
    %136 = vector.load %arg6[%c1_85, %c0_86, %c0_87] : memref<2x1x32xf32, #tpu.memory_space<vmem>>, vector<1x1x32xf32>
    %137 = vector.shape_cast %136 : vector<1x1x32xf32> to vector<1x32xf32>
    %cst_88 = arith.constant dense<0.000000e+00> : vector<6x96xf32>
    %138 = tpu.matmul %129, %131, %cst_88 {dimension_numbers = #tpu.dot_dimension_numbers<[1], [0], [0], [1], [0, 0, 1, 1], [], []>} : vector<6x32xf32>, vector<32x96xf32>, vector<6x96xf32> -> vector<6x96xf32>
    %139 = vector.broadcast %133 : vector<1x96xf32> to vector<6x96xf32>
    %140 = arith.addf %138, %139 : vector<6x96xf32>
    %141 = vector.extract_strided_slice %140 {offsets = [0, 0], sizes = [6, 32], strides = [1, 1]} : vector<6x96xf32> to vector<6x32xf32>
    %142 = vector.extract_strided_slice %140 {offsets = [0, 32], sizes = [6, 32], strides = [1, 1]} : vector<6x96xf32> to vector<6x32xf32>
    %143 = vector.extract_strided_slice %140 {offsets = [0, 64], sizes = [6, 32], strides = [1, 1]} : vector<6x96xf32> to vector<6x32xf32>
    %cst_89 = arith.constant dense<0.000000e+00> : vector<24x32xf32>
    %144 = tpu.matmul %3, %141, %cst_89 {dimension_numbers = #tpu.dot_dimension_numbers<[1], [0], [0], [1], [0, 0, 1, 1], [], []>} : vector<24x6xf32>, vector<6x32xf32>, vector<24x32xf32> -> vector<24x32xf32>
    %145 = arith.mulf %144, %2 : vector<24x32xf32>
    %cst_90 = arith.constant dense<0.000000e+00> : vector<24x6xf32>
    %146 = tpu.matmul %145, %142, %cst_90 {dimension_numbers = #tpu.dot_dimension_numbers<[1], [1], [0], [0], [0, 0, 1, 0], [], []>} : vector<24x32xf32>, vector<6x32xf32>, vector<24x6xf32> -> vector<24x6xf32>
    %cst_91 = arith.constant 0.353553385 : f32
    %147 = vector.broadcast %cst_91 : f32 to vector<24x6xf32>
    %148 = arith.mulf %146, %147 : vector<24x6xf32>
    %149 = arith.addf %148, %1 : vector<24x6xf32>
    %cst_92 = arith.constant dense<0xFF800000> : vector<24xf32>
    %150 = vector.multi_reduction <maximumf>, %149, %cst_92 [1] : vector<24x6xf32> to vector<24xf32>
    %151 = vector.shape_cast %150 : vector<24xf32> to vector<24x1xf32>
    %152 = vector.broadcast %151 : vector<24x1xf32> to vector<24x6xf32>
    %153 = arith.subf %149, %152 : vector<24x6xf32>
    %154 = math.exp %153 : vector<24x6xf32>
    %cst_93 = arith.constant dense<0.000000e+00> : vector<24xf32>
    %155 = vector.multi_reduction <add>, %154, %cst_93 [1] : vector<24x6xf32> to vector<24xf32>
    %156 = vector.shape_cast %155 : vector<24xf32> to vector<24x1xf32>
    %157 = vector.broadcast %156 : vector<24x1xf32> to vector<24x6xf32>
    %158 = arith.divf %154, %157 : vector<24x6xf32>
    %cst_94 = arith.constant dense<0.000000e+00> : vector<24x32xf32>
    %159 = tpu.matmul %158, %143, %cst_94 {dimension_numbers = #tpu.dot_dimension_numbers<[1], [0], [0], [1], [0, 0, 1, 1], [], []>} : vector<24x6xf32>, vector<6x32xf32>, vector<24x32xf32> -> vector<24x32xf32>
    %160 = arith.mulf %159, %2 : vector<24x32xf32>
    %cst_95 = arith.constant dense<0.000000e+00> : vector<6x32xf32>
    %161 = tpu.matmul %4, %160, %cst_95 {dimension_numbers = #tpu.dot_dimension_numbers<[1], [0], [0], [1], [0, 0, 1, 1], [], []>} : vector<6x24xf32>, vector<24x32xf32>, vector<6x32xf32> -> vector<6x32xf32>
    %cst_96 = arith.constant dense<0.000000e+00> : vector<6x32xf32>
    %162 = tpu.matmul %161, %135, %cst_96 {dimension_numbers = #tpu.dot_dimension_numbers<[1], [0], [0], [1], [0, 0, 1, 1], [], []>} : vector<6x32xf32>, vector<32x32xf32>, vector<6x32xf32> -> vector<6x32xf32>
    %163 = vector.broadcast %137 : vector<1x32xf32> to vector<6x32xf32>
    %164 = arith.addf %162, %163 : vector<6x32xf32>
    %165 = arith.addf %105, %164 : vector<6x32xf32>
    %c1_97 = arith.constant 1 : index
    %c0_98 = arith.constant 0 : index
    %c0_99 = arith.constant 0 : index
    %166 = vector.load %arg7[%c1_97, %c0_98, %c0_99] : memref<2x1x32xf32, #tpu.memory_space<vmem>>, vector<1x1x32xf32>
    %167 = vector.shape_cast %166 : vector<1x1x32xf32> to vector<1x32xf32>
    %c1_100 = arith.constant 1 : index
    %c0_101 = arith.constant 0 : index
    %c0_102 = arith.constant 0 : index
    %168 = vector.load %arg8[%c1_100, %c0_101, %c0_102] : memref<2x1x32xf32, #tpu.memory_space<vmem>>, vector<1x1x32xf32>
    %169 = vector.shape_cast %168 : vector<1x1x32xf32> to vector<1x32xf32>
    %cst_103 = arith.constant dense<0.000000e+00> : vector<6xf32>
    %170 = vector.multi_reduction <add>, %165, %cst_103 [1] : vector<6x32xf32> to vector<6xf32>
    %171 = vector.shape_cast %170 : vector<6xf32> to vector<6x1xf32>
    %cst_104 = arith.constant 3.200000e+01 : f32
    %172 = vector.broadcast %cst_104 : f32 to vector<6x1xf32>
    %173 = arith.divf %171, %172 : vector<6x1xf32>
    %174 = vector.broadcast %173 : vector<6x1xf32> to vector<6x32xf32>
    %175 = arith.subf %165, %174 : vector<6x32xf32>
    %176 = arith.mulf %175, %175 : vector<6x32xf32>
    %cst_105 = arith.constant dense<0.000000e+00> : vector<6xf32>
    %177 = vector.multi_reduction <add>, %176, %cst_105 [1] : vector<6x32xf32> to vector<6xf32>
    %178 = vector.shape_cast %177 : vector<6xf32> to vector<6x1xf32>
    %cst_106 = arith.constant 3.200000e+01 : f32
    %179 = vector.broadcast %cst_106 : f32 to vector<6x1xf32>
    %180 = arith.divf %178, %179 : vector<6x1xf32>
    %cst_107 = arith.constant 9.99999974E-6 : f32
    %181 = vector.broadcast %cst_107 : f32 to vector<6x1xf32>
    %182 = arith.addf %180, %181 : vector<6x1xf32>
    %183 = math.rsqrt %182 : vector<6x1xf32>
    %184 = vector.broadcast %183 : vector<6x1xf32> to vector<6x32xf32>
    %185 = arith.mulf %175, %184 : vector<6x32xf32>
    %186 = vector.broadcast %167 : vector<1x32xf32> to vector<6x32xf32>
    %187 = arith.mulf %185, %186 : vector<6x32xf32>
    %188 = vector.broadcast %169 : vector<1x32xf32> to vector<6x32xf32>
    %189 = arith.addf %187, %188 : vector<6x32xf32>
    %c1_108 = arith.constant 1 : index
    %c0_109 = arith.constant 0 : index
    %c0_110 = arith.constant 0 : index
    %190 = vector.load %arg9[%c1_108, %c0_109, %c0_110] : memref<2x32x64xf32, #tpu.memory_space<vmem>>, vector<1x32x64xf32>
    %191 = vector.shape_cast %190 : vector<1x32x64xf32> to vector<32x64xf32>
    %c1_111 = arith.constant 1 : index
    %c0_112 = arith.constant 0 : index
    %c0_113 = arith.constant 0 : index
    %192 = vector.load %arg10[%c1_111, %c0_112, %c0_113] : memref<2x1x64xf32, #tpu.memory_space<vmem>>, vector<1x1x64xf32>
    %193 = vector.shape_cast %192 : vector<1x1x64xf32> to vector<1x64xf32>
    %c1_114 = arith.constant 1 : index
    %c0_115 = arith.constant 0 : index
    %c0_116 = arith.constant 0 : index
    %194 = vector.load %arg11[%c1_114, %c0_115, %c0_116] : memref<2x64x32xf32, #tpu.memory_space<vmem>>, vector<1x64x32xf32>
    %195 = vector.shape_cast %194 : vector<1x64x32xf32> to vector<64x32xf32>
    %c1_117 = arith.constant 1 : index
    %c0_118 = arith.constant 0 : index
    %c0_119 = arith.constant 0 : index
    %196 = vector.load %arg12[%c1_117, %c0_118, %c0_119] : memref<2x1x32xf32, #tpu.memory_space<vmem>>, vector<1x1x32xf32>
    %197 = vector.shape_cast %196 : vector<1x1x32xf32> to vector<1x32xf32>
    %cst_120 = arith.constant dense<0.000000e+00> : vector<6x64xf32>
    %198 = tpu.matmul %189, %191, %cst_120 {dimension_numbers = #tpu.dot_dimension_numbers<[1], [0], [0], [1], [0, 0, 1, 1], [], []>} : vector<6x32xf32>, vector<32x64xf32>, vector<6x64xf32> -> vector<6x64xf32>
    %199 = vector.broadcast %193 : vector<1x64xf32> to vector<6x64xf32>
    %200 = arith.addf %198, %199 : vector<6x64xf32>
    %cst_121 = arith.constant 0.000000e+00 : f32
    %201 = vector.broadcast %cst_121 : f32 to vector<6x64xf32>
    %202 = arith.maximumf %200, %201 : vector<6x64xf32>
    %cst_122 = arith.constant dense<0.000000e+00> : vector<6x32xf32>
    %203 = tpu.matmul %202, %195, %cst_122 {dimension_numbers = #tpu.dot_dimension_numbers<[1], [0], [0], [1], [0, 0, 1, 1], [], []>} : vector<6x64xf32>, vector<64x32xf32>, vector<6x32xf32> -> vector<6x32xf32>
    %204 = vector.broadcast %197 : vector<1x32xf32> to vector<6x32xf32>
    %205 = arith.addf %203, %204 : vector<6x32xf32>
    %206 = arith.addf %165, %205 : vector<6x32xf32>
    %c0_123 = arith.constant 0 : index
    %c0_124 = arith.constant 0 : index
    %207 = vector.load %arg31[%c0_123, %c0_124] : memref<1x32xf32, #tpu.memory_space<vmem>>, vector<1x32xf32>
    %c0_125 = arith.constant 0 : index
    %c0_126 = arith.constant 0 : index
    %208 = vector.load %arg32[%c0_125, %c0_126] : memref<1x32xf32, #tpu.memory_space<vmem>>, vector<1x32xf32>
    %cst_127 = arith.constant dense<0.000000e+00> : vector<6xf32>
    %209 = vector.multi_reduction <add>, %206, %cst_127 [1] : vector<6x32xf32> to vector<6xf32>
    %210 = vector.shape_cast %209 : vector<6xf32> to vector<6x1xf32>
    %cst_128 = arith.constant 3.200000e+01 : f32
    %211 = vector.broadcast %cst_128 : f32 to vector<6x1xf32>
    %212 = arith.divf %210, %211 : vector<6x1xf32>
    %213 = vector.broadcast %212 : vector<6x1xf32> to vector<6x32xf32>
    %214 = arith.subf %206, %213 : vector<6x32xf32>
    %215 = arith.mulf %214, %214 : vector<6x32xf32>
    %cst_129 = arith.constant dense<0.000000e+00> : vector<6xf32>
    %216 = vector.multi_reduction <add>, %215, %cst_129 [1] : vector<6x32xf32> to vector<6xf32>
    %217 = vector.shape_cast %216 : vector<6xf32> to vector<6x1xf32>
    %cst_130 = arith.constant 3.200000e+01 : f32
    %218 = vector.broadcast %cst_130 : f32 to vector<6x1xf32>
    %219 = arith.divf %217, %218 : vector<6x1xf32>
    %cst_131 = arith.constant 9.99999974E-6 : f32
    %220 = vector.broadcast %cst_131 : f32 to vector<6x1xf32>
    %221 = arith.addf %219, %220 : vector<6x1xf32>
    %222 = math.rsqrt %221 : vector<6x1xf32>
    %223 = vector.broadcast %222 : vector<6x1xf32> to vector<6x32xf32>
    %224 = arith.mulf %214, %223 : vector<6x32xf32>
    %225 = vector.broadcast %207 : vector<1x32xf32> to vector<6x32xf32>
    %226 = arith.mulf %224, %225 : vector<6x32xf32>
    %227 = vector.broadcast %208 : vector<1x32xf32> to vector<6x32xf32>
    %228 = arith.addf %226, %227 : vector<6x32xf32>
    %cst_132 = arith.constant 0.000000e+00 : f32
    %229 = vector.broadcast %cst_132 : f32 to vector<8x32xf32>
    %c0_133 = arith.constant 0 : index
    %c0_134 = arith.constant 0 : index
    %230 = vector.load %arg44[%c0_133, %c0_134] : memref<32x8xf32, #tpu.memory_space<vmem>>, vector<32x8xf32>
    %c0_135 = arith.constant 0 : index
    %c0_136 = arith.constant 0 : index
    %231 = vector.load %arg45[%c0_135, %c0_136] : memref<32x6xf32, #tpu.memory_space<vmem>>, vector<32x6xf32>
    %c0_137 = arith.constant 0 : index
    %c0_138 = arith.constant 0 : index
    %232 = vector.load %arg42[%c0_137, %c0_138] : memref<32x32xf32, #tpu.memory_space<vmem>>, vector<32x32xf32>
    %c0_139 = arith.constant 0 : index
    %c0_140 = arith.constant 0 : index
    %233 = vector.load %arg39[%c0_139, %c0_140] : memref<32x8xf32, #tpu.memory_space<vmem>>, vector<32x8xf32>
    %c0_141 = arith.constant 0 : index
    %c0_142 = arith.constant 0 : index
    %234 = vector.load %arg40[%c0_141, %c0_142] : memref<8x32xf32, #tpu.memory_space<vmem>>, vector<8x32xf32>
    %c0_143 = arith.constant 0 : index
    %c0_144 = arith.constant 0 : index
    %c0_145 = arith.constant 0 : index
    %235 = vector.load %arg13[%c0_143, %c0_144, %c0_145] : memref<2x1x32xf32, #tpu.memory_space<vmem>>, vector<1x1x32xf32>
    %236 = vector.shape_cast %235 : vector<1x1x32xf32> to vector<1x32xf32>
    %c0_146 = arith.constant 0 : index
    %c0_147 = arith.constant 0 : index
    %c0_148 = arith.constant 0 : index
    %237 = vector.load %arg14[%c0_146, %c0_147, %c0_148] : memref<2x1x32xf32, #tpu.memory_space<vmem>>, vector<1x1x32xf32>
    %238 = vector.shape_cast %237 : vector<1x1x32xf32> to vector<1x32xf32>
    %cst_149 = arith.constant dense<0.000000e+00> : vector<8xf32>
    %239 = vector.multi_reduction <add>, %229, %cst_149 [1] : vector<8x32xf32> to vector<8xf32>
    %240 = vector.shape_cast %239 : vector<8xf32> to vector<8x1xf32>
    %cst_150 = arith.constant 3.200000e+01 : f32
    %241 = vector.broadcast %cst_150 : f32 to vector<8x1xf32>
    %242 = arith.divf %240, %241 : vector<8x1xf32>
    %243 = vector.broadcast %242 : vector<8x1xf32> to vector<8x32xf32>
    %244 = arith.subf %229, %243 : vector<8x32xf32>
    %245 = arith.mulf %244, %244 : vector<8x32xf32>
    %cst_151 = arith.constant dense<0.000000e+00> : vector<8xf32>
    %246 = vector.multi_reduction <add>, %245, %cst_151 [1] : vector<8x32xf32> to vector<8xf32>
    %247 = vector.shape_cast %246 : vector<8xf32> to vector<8x1xf32>
    %cst_152 = arith.constant 3.200000e+01 : f32
    %248 = vector.broadcast %cst_152 : f32 to vector<8x1xf32>
    %249 = arith.divf %247, %248 : vector<8x1xf32>
    %cst_153 = arith.constant 9.99999974E-6 : f32
    %250 = vector.broadcast %cst_153 : f32 to vector<8x1xf32>
    %251 = arith.addf %249, %250 : vector<8x1xf32>
    %252 = math.rsqrt %251 : vector<8x1xf32>
    %253 = vector.broadcast %252 : vector<8x1xf32> to vector<8x32xf32>
    %254 = arith.mulf %244, %253 : vector<8x32xf32>
    %255 = vector.broadcast %236 : vector<1x32xf32> to vector<8x32xf32>
    %256 = arith.mulf %254, %255 : vector<8x32xf32>
    %257 = vector.broadcast %238 : vector<1x32xf32> to vector<8x32xf32>
    %258 = arith.addf %256, %257 : vector<8x32xf32>
    %c0_154 = arith.constant 0 : index
    %c0_155 = arith.constant 0 : index
    %c0_156 = arith.constant 0 : index
    %259 = vector.load %arg15[%c0_154, %c0_155, %c0_156] : memref<2x32x96xf32, #tpu.memory_space<vmem>>, vector<1x32x96xf32>
    %260 = vector.shape_cast %259 : vector<1x32x96xf32> to vector<32x96xf32>
    %c0_157 = arith.constant 0 : index
    %c0_158 = arith.constant 0 : index
    %c0_159 = arith.constant 0 : index
    %261 = vector.load %arg16[%c0_157, %c0_158, %c0_159] : memref<2x1x96xf32, #tpu.memory_space<vmem>>, vector<1x1x96xf32>
    %262 = vector.shape_cast %261 : vector<1x1x96xf32> to vector<1x96xf32>
    %c0_160 = arith.constant 0 : index
    %c0_161 = arith.constant 0 : index
    %c0_162 = arith.constant 0 : index
    %263 = vector.load %arg17[%c0_160, %c0_161, %c0_162] : memref<2x32x32xf32, #tpu.memory_space<vmem>>, vector<1x32x32xf32>
    %264 = vector.shape_cast %263 : vector<1x32x32xf32> to vector<32x32xf32>
    %c0_163 = arith.constant 0 : index
    %c0_164 = arith.constant 0 : index
    %c0_165 = arith.constant 0 : index
    %265 = vector.load %arg18[%c0_163, %c0_164, %c0_165] : memref<2x1x32xf32, #tpu.memory_space<vmem>>, vector<1x1x32xf32>
    %266 = vector.shape_cast %265 : vector<1x1x32xf32> to vector<1x32xf32>
    %cst_166 = arith.constant dense<0.000000e+00> : vector<8x96xf32>
    %267 = tpu.matmul %258, %260, %cst_166 {dimension_numbers = #tpu.dot_dimension_numbers<[1], [0], [0], [1], [0, 0, 1, 1], [], []>} : vector<8x32xf32>, vector<32x96xf32>, vector<8x96xf32> -> vector<8x96xf32>
    %268 = vector.broadcast %262 : vector<1x96xf32> to vector<8x96xf32>
    %269 = arith.addf %267, %268 : vector<8x96xf32>
    %270 = vector.extract_strided_slice %269 {offsets = [0, 0], sizes = [8, 32], strides = [1, 1]} : vector<8x96xf32> to vector<8x32xf32>
    %271 = vector.extract_strided_slice %269 {offsets = [0, 32], sizes = [8, 32], strides = [1, 1]} : vector<8x96xf32> to vector<8x32xf32>
    %272 = vector.extract_strided_slice %269 {offsets = [0, 64], sizes = [8, 32], strides = [1, 1]} : vector<8x96xf32> to vector<8x32xf32>
    %cst_167 = arith.constant dense<0.000000e+00> : vector<32x32xf32>
    %273 = tpu.matmul %233, %270, %cst_167 {dimension_numbers = #tpu.dot_dimension_numbers<[1], [0], [0], [1], [0, 0, 1, 1], [], []>} : vector<32x8xf32>, vector<8x32xf32>, vector<32x32xf32> -> vector<32x32xf32>
    %274 = arith.mulf %273, %232 : vector<32x32xf32>
    %cst_168 = arith.constant dense<0.000000e+00> : vector<32x8xf32>
    %275 = tpu.matmul %274, %271, %cst_168 {dimension_numbers = #tpu.dot_dimension_numbers<[1], [1], [0], [0], [0, 0, 1, 0], [], []>} : vector<32x32xf32>, vector<8x32xf32>, vector<32x8xf32> -> vector<32x8xf32>
    %cst_169 = arith.constant 0.353553385 : f32
    %276 = vector.broadcast %cst_169 : f32 to vector<32x8xf32>
    %277 = arith.mulf %275, %276 : vector<32x8xf32>
    %278 = arith.addf %277, %230 : vector<32x8xf32>
    %cst_170 = arith.constant dense<0xFF800000> : vector<32xf32>
    %279 = vector.multi_reduction <maximumf>, %278, %cst_170 [1] : vector<32x8xf32> to vector<32xf32>
    %280 = vector.shape_cast %279 : vector<32xf32> to vector<32x1xf32>
    %281 = vector.broadcast %280 : vector<32x1xf32> to vector<32x8xf32>
    %282 = arith.subf %278, %281 : vector<32x8xf32>
    %283 = math.exp %282 : vector<32x8xf32>
    %cst_171 = arith.constant dense<0.000000e+00> : vector<32xf32>
    %284 = vector.multi_reduction <add>, %283, %cst_171 [1] : vector<32x8xf32> to vector<32xf32>
    %285 = vector.shape_cast %284 : vector<32xf32> to vector<32x1xf32>
    %286 = vector.broadcast %285 : vector<32x1xf32> to vector<32x8xf32>
    %287 = arith.divf %283, %286 : vector<32x8xf32>
    %cst_172 = arith.constant dense<0.000000e+00> : vector<32x32xf32>
    %288 = tpu.matmul %287, %272, %cst_172 {dimension_numbers = #tpu.dot_dimension_numbers<[1], [0], [0], [1], [0, 0, 1, 1], [], []>} : vector<32x8xf32>, vector<8x32xf32>, vector<32x32xf32> -> vector<32x32xf32>
    %289 = arith.mulf %288, %232 : vector<32x32xf32>
    %cst_173 = arith.constant dense<0.000000e+00> : vector<8x32xf32>
    %290 = tpu.matmul %234, %289, %cst_173 {dimension_numbers = #tpu.dot_dimension_numbers<[1], [0], [0], [1], [0, 0, 1, 1], [], []>} : vector<8x32xf32>, vector<32x32xf32>, vector<8x32xf32> -> vector<8x32xf32>
    %cst_174 = arith.constant dense<0.000000e+00> : vector<8x32xf32>
    %291 = tpu.matmul %290, %264, %cst_174 {dimension_numbers = #tpu.dot_dimension_numbers<[1], [0], [0], [1], [0, 0, 1, 1], [], []>} : vector<8x32xf32>, vector<32x32xf32>, vector<8x32xf32> -> vector<8x32xf32>
    %292 = vector.broadcast %266 : vector<1x32xf32> to vector<8x32xf32>
    %293 = arith.addf %291, %292 : vector<8x32xf32>
    %294 = arith.addf %229, %293 : vector<8x32xf32>
    %c0_175 = arith.constant 0 : index
    %c0_176 = arith.constant 0 : index
    %c0_177 = arith.constant 0 : index
    %295 = vector.load %arg19[%c0_175, %c0_176, %c0_177] : memref<2x1x32xf32, #tpu.memory_space<vmem>>, vector<1x1x32xf32>
    %296 = vector.shape_cast %295 : vector<1x1x32xf32> to vector<1x32xf32>
    %c0_178 = arith.constant 0 : index
    %c0_179 = arith.constant 0 : index
    %c0_180 = arith.constant 0 : index
    %297 = vector.load %arg20[%c0_178, %c0_179, %c0_180] : memref<2x1x32xf32, #tpu.memory_space<vmem>>, vector<1x1x32xf32>
    %298 = vector.shape_cast %297 : vector<1x1x32xf32> to vector<1x32xf32>
    %cst_181 = arith.constant dense<0.000000e+00> : vector<8xf32>
    %299 = vector.multi_reduction <add>, %294, %cst_181 [1] : vector<8x32xf32> to vector<8xf32>
    %300 = vector.shape_cast %299 : vector<8xf32> to vector<8x1xf32>
    %cst_182 = arith.constant 3.200000e+01 : f32
    %301 = vector.broadcast %cst_182 : f32 to vector<8x1xf32>
    %302 = arith.divf %300, %301 : vector<8x1xf32>
    %303 = vector.broadcast %302 : vector<8x1xf32> to vector<8x32xf32>
    %304 = arith.subf %294, %303 : vector<8x32xf32>
    %305 = arith.mulf %304, %304 : vector<8x32xf32>
    %cst_183 = arith.constant dense<0.000000e+00> : vector<8xf32>
    %306 = vector.multi_reduction <add>, %305, %cst_183 [1] : vector<8x32xf32> to vector<8xf32>
    %307 = vector.shape_cast %306 : vector<8xf32> to vector<8x1xf32>
    %cst_184 = arith.constant 3.200000e+01 : f32
    %308 = vector.broadcast %cst_184 : f32 to vector<8x1xf32>
    %309 = arith.divf %307, %308 : vector<8x1xf32>
    %cst_185 = arith.constant 9.99999974E-6 : f32
    %310 = vector.broadcast %cst_185 : f32 to vector<8x1xf32>
    %311 = arith.addf %309, %310 : vector<8x1xf32>
    %312 = math.rsqrt %311 : vector<8x1xf32>
    %313 = vector.broadcast %312 : vector<8x1xf32> to vector<8x32xf32>
    %314 = arith.mulf %304, %313 : vector<8x32xf32>
    %315 = vector.broadcast %296 : vector<1x32xf32> to vector<8x32xf32>
    %316 = arith.mulf %314, %315 : vector<8x32xf32>
    %317 = vector.broadcast %298 : vector<1x32xf32> to vector<8x32xf32>
    %318 = arith.addf %316, %317 : vector<8x32xf32>
    %c0_186 = arith.constant 0 : index
    %c0_187 = arith.constant 0 : index
    %c0_188 = arith.constant 0 : index
    %319 = vector.load %arg21[%c0_186, %c0_187, %c0_188] : memref<2x32x96xf32, #tpu.memory_space<vmem>>, vector<1x32x96xf32>
    %320 = vector.shape_cast %319 : vector<1x32x96xf32> to vector<32x96xf32>
    %c0_189 = arith.constant 0 : index
    %c0_190 = arith.constant 0 : index
    %c0_191 = arith.constant 0 : index
    %321 = vector.load %arg22[%c0_189, %c0_190, %c0_191] : memref<2x1x96xf32, #tpu.memory_space<vmem>>, vector<1x1x96xf32>
    %322 = vector.shape_cast %321 : vector<1x1x96xf32> to vector<1x96xf32>
    %c0_192 = arith.constant 0 : index
    %c0_193 = arith.constant 0 : index
    %c0_194 = arith.constant 0 : index
    %323 = vector.load %arg23[%c0_192, %c0_193, %c0_194] : memref<2x32x32xf32, #tpu.memory_space<vmem>>, vector<1x32x32xf32>
    %324 = vector.shape_cast %323 : vector<1x32x32xf32> to vector<32x32xf32>
    %c0_195 = arith.constant 0 : index
    %c0_196 = arith.constant 0 : index
    %c0_197 = arith.constant 0 : index
    %325 = vector.load %arg24[%c0_195, %c0_196, %c0_197] : memref<2x1x32xf32, #tpu.memory_space<vmem>>, vector<1x1x32xf32>
    %326 = vector.shape_cast %325 : vector<1x1x32xf32> to vector<1x32xf32>
    %327 = vector.extract_strided_slice %320 {offsets = [0, 0], sizes = [32, 32], strides = [1, 1]} : vector<32x96xf32> to vector<32x32xf32>
    %cst_198 = arith.constant dense<0.000000e+00> : vector<8x32xf32>
    %328 = tpu.matmul %318, %327, %cst_198 {dimension_numbers = #tpu.dot_dimension_numbers<[1], [0], [0], [1], [0, 0, 1, 1], [], []>} : vector<8x32xf32>, vector<32x32xf32>, vector<8x32xf32> -> vector<8x32xf32>
    %329 = vector.extract_strided_slice %322 {offsets = [0, 0], sizes = [1, 32], strides = [1, 1]} : vector<1x96xf32> to vector<1x32xf32>
    %330 = vector.broadcast %329 : vector<1x32xf32> to vector<8x32xf32>
    %331 = arith.addf %328, %330 : vector<8x32xf32>
    %332 = vector.extract_strided_slice %320 {offsets = [0, 32], sizes = [32, 64], strides = [1, 1]} : vector<32x96xf32> to vector<32x64xf32>
    %cst_199 = arith.constant dense<0.000000e+00> : vector<6x64xf32>
    %333 = tpu.matmul %228, %332, %cst_199 {dimension_numbers = #tpu.dot_dimension_numbers<[1], [0], [0], [1], [0, 0, 1, 1], [], []>} : vector<6x32xf32>, vector<32x64xf32>, vector<6x64xf32> -> vector<6x64xf32>
    %334 = vector.extract_strided_slice %322 {offsets = [0, 32], sizes = [1, 64], strides = [1, 1]} : vector<1x96xf32> to vector<1x64xf32>
    %335 = vector.broadcast %334 : vector<1x64xf32> to vector<6x64xf32>
    %336 = arith.addf %333, %335 : vector<6x64xf32>
    %337 = vector.extract_strided_slice %336 {offsets = [0, 0], sizes = [6, 32], strides = [1, 1]} : vector<6x64xf32> to vector<6x32xf32>
    %338 = vector.extract_strided_slice %336 {offsets = [0, 32], sizes = [6, 32], strides = [1, 1]} : vector<6x64xf32> to vector<6x32xf32>
    %cst_200 = arith.constant dense<0.000000e+00> : vector<32x32xf32>
    %339 = tpu.matmul %233, %331, %cst_200 {dimension_numbers = #tpu.dot_dimension_numbers<[1], [0], [0], [1], [0, 0, 1, 1], [], []>} : vector<32x8xf32>, vector<8x32xf32>, vector<32x32xf32> -> vector<32x32xf32>
    %340 = arith.mulf %339, %232 : vector<32x32xf32>
    %cst_201 = arith.constant dense<0.000000e+00> : vector<32x6xf32>
    %341 = tpu.matmul %340, %337, %cst_201 {dimension_numbers = #tpu.dot_dimension_numbers<[1], [1], [0], [0], [0, 0, 1, 0], [], []>} : vector<32x32xf32>, vector<6x32xf32>, vector<32x6xf32> -> vector<32x6xf32>
    %cst_202 = arith.constant 0.353553385 : f32
    %342 = vector.broadcast %cst_202 : f32 to vector<32x6xf32>
    %343 = arith.mulf %341, %342 : vector<32x6xf32>
    %344 = arith.addf %343, %231 : vector<32x6xf32>
    %cst_203 = arith.constant dense<0xFF800000> : vector<32xf32>
    %345 = vector.multi_reduction <maximumf>, %344, %cst_203 [1] : vector<32x6xf32> to vector<32xf32>
    %346 = vector.shape_cast %345 : vector<32xf32> to vector<32x1xf32>
    %347 = vector.broadcast %346 : vector<32x1xf32> to vector<32x6xf32>
    %348 = arith.subf %344, %347 : vector<32x6xf32>
    %349 = math.exp %348 : vector<32x6xf32>
    %cst_204 = arith.constant dense<0.000000e+00> : vector<32xf32>
    %350 = vector.multi_reduction <add>, %349, %cst_204 [1] : vector<32x6xf32> to vector<32xf32>
    %351 = vector.shape_cast %350 : vector<32xf32> to vector<32x1xf32>
    %352 = vector.broadcast %351 : vector<32x1xf32> to vector<32x6xf32>
    %353 = arith.divf %349, %352 : vector<32x6xf32>
    %cst_205 = arith.constant dense<0.000000e+00> : vector<32x32xf32>
    %354 = tpu.matmul %353, %338, %cst_205 {dimension_numbers = #tpu.dot_dimension_numbers<[1], [0], [0], [1], [0, 0, 1, 1], [], []>} : vector<32x6xf32>, vector<6x32xf32>, vector<32x32xf32> -> vector<32x32xf32>
    %355 = arith.mulf %354, %232 : vector<32x32xf32>
    %cst_206 = arith.constant dense<0.000000e+00> : vector<8x32xf32>
    %356 = tpu.matmul %234, %355, %cst_206 {dimension_numbers = #tpu.dot_dimension_numbers<[1], [0], [0], [1], [0, 0, 1, 1], [], []>} : vector<8x32xf32>, vector<32x32xf32>, vector<8x32xf32> -> vector<8x32xf32>
    %cst_207 = arith.constant dense<0.000000e+00> : vector<8x32xf32>
    %357 = tpu.matmul %356, %324, %cst_207 {dimension_numbers = #tpu.dot_dimension_numbers<[1], [0], [0], [1], [0, 0, 1, 1], [], []>} : vector<8x32xf32>, vector<32x32xf32>, vector<8x32xf32> -> vector<8x32xf32>
    %358 = vector.broadcast %326 : vector<1x32xf32> to vector<8x32xf32>
    %359 = arith.addf %357, %358 : vector<8x32xf32>
    %360 = arith.addf %294, %359 : vector<8x32xf32>
    %c0_208 = arith.constant 0 : index
    %c0_209 = arith.constant 0 : index
    %c0_210 = arith.constant 0 : index
    %361 = vector.load %arg25[%c0_208, %c0_209, %c0_210] : memref<2x1x32xf32, #tpu.memory_space<vmem>>, vector<1x1x32xf32>
    %362 = vector.shape_cast %361 : vector<1x1x32xf32> to vector<1x32xf32>
    %c0_211 = arith.constant 0 : index
    %c0_212 = arith.constant 0 : index
    %c0_213 = arith.constant 0 : index
    %363 = vector.load %arg26[%c0_211, %c0_212, %c0_213] : memref<2x1x32xf32, #tpu.memory_space<vmem>>, vector<1x1x32xf32>
    %364 = vector.shape_cast %363 : vector<1x1x32xf32> to vector<1x32xf32>
    %cst_214 = arith.constant dense<0.000000e+00> : vector<8xf32>
    %365 = vector.multi_reduction <add>, %360, %cst_214 [1] : vector<8x32xf32> to vector<8xf32>
    %366 = vector.shape_cast %365 : vector<8xf32> to vector<8x1xf32>
    %cst_215 = arith.constant 3.200000e+01 : f32
    %367 = vector.broadcast %cst_215 : f32 to vector<8x1xf32>
    %368 = arith.divf %366, %367 : vector<8x1xf32>
    %369 = vector.broadcast %368 : vector<8x1xf32> to vector<8x32xf32>
    %370 = arith.subf %360, %369 : vector<8x32xf32>
    %371 = arith.mulf %370, %370 : vector<8x32xf32>
    %cst_216 = arith.constant dense<0.000000e+00> : vector<8xf32>
    %372 = vector.multi_reduction <add>, %371, %cst_216 [1] : vector<8x32xf32> to vector<8xf32>
    %373 = vector.shape_cast %372 : vector<8xf32> to vector<8x1xf32>
    %cst_217 = arith.constant 3.200000e+01 : f32
    %374 = vector.broadcast %cst_217 : f32 to vector<8x1xf32>
    %375 = arith.divf %373, %374 : vector<8x1xf32>
    %cst_218 = arith.constant 9.99999974E-6 : f32
    %376 = vector.broadcast %cst_218 : f32 to vector<8x1xf32>
    %377 = arith.addf %375, %376 : vector<8x1xf32>
    %378 = math.rsqrt %377 : vector<8x1xf32>
    %379 = vector.broadcast %378 : vector<8x1xf32> to vector<8x32xf32>
    %380 = arith.mulf %370, %379 : vector<8x32xf32>
    %381 = vector.broadcast %362 : vector<1x32xf32> to vector<8x32xf32>
    %382 = arith.mulf %380, %381 : vector<8x32xf32>
    %383 = vector.broadcast %364 : vector<1x32xf32> to vector<8x32xf32>
    %384 = arith.addf %382, %383 : vector<8x32xf32>
    %c0_219 = arith.constant 0 : index
    %c0_220 = arith.constant 0 : index
    %c0_221 = arith.constant 0 : index
    %385 = vector.load %arg27[%c0_219, %c0_220, %c0_221] : memref<2x32x64xf32, #tpu.memory_space<vmem>>, vector<1x32x64xf32>
    %386 = vector.shape_cast %385 : vector<1x32x64xf32> to vector<32x64xf32>
    %c0_222 = arith.constant 0 : index
    %c0_223 = arith.constant 0 : index
    %c0_224 = arith.constant 0 : index
    %387 = vector.load %arg28[%c0_222, %c0_223, %c0_224] : memref<2x1x64xf32, #tpu.memory_space<vmem>>, vector<1x1x64xf32>
    %388 = vector.shape_cast %387 : vector<1x1x64xf32> to vector<1x64xf32>
    %c0_225 = arith.constant 0 : index
    %c0_226 = arith.constant 0 : index
    %c0_227 = arith.constant 0 : index
    %389 = vector.load %arg29[%c0_225, %c0_226, %c0_227] : memref<2x64x32xf32, #tpu.memory_space<vmem>>, vector<1x64x32xf32>
    %390 = vector.shape_cast %389 : vector<1x64x32xf32> to vector<64x32xf32>
    %c0_228 = arith.constant 0 : index
    %c0_229 = arith.constant 0 : index
    %c0_230 = arith.constant 0 : index
    %391 = vector.load %arg30[%c0_228, %c0_229, %c0_230] : memref<2x1x32xf32, #tpu.memory_space<vmem>>, vector<1x1x32xf32>
    %392 = vector.shape_cast %391 : vector<1x1x32xf32> to vector<1x32xf32>
    %cst_231 = arith.constant dense<0.000000e+00> : vector<8x64xf32>
    %393 = tpu.matmul %384, %386, %cst_231 {dimension_numbers = #tpu.dot_dimension_numbers<[1], [0], [0], [1], [0, 0, 1, 1], [], []>} : vector<8x32xf32>, vector<32x64xf32>, vector<8x64xf32> -> vector<8x64xf32>
    %394 = vector.broadcast %388 : vector<1x64xf32> to vector<8x64xf32>
    %395 = arith.addf %393, %394 : vector<8x64xf32>
    %cst_232 = arith.constant 0.000000e+00 : f32
    %396 = vector.broadcast %cst_232 : f32 to vector<8x64xf32>
    %397 = arith.maximumf %395, %396 : vector<8x64xf32>
    %cst_233 = arith.constant dense<0.000000e+00> : vector<8x32xf32>
    %398 = tpu.matmul %397, %390, %cst_233 {dimension_numbers = #tpu.dot_dimension_numbers<[1], [0], [0], [1], [0, 0, 1, 1], [], []>} : vector<8x64xf32>, vector<64x32xf32>, vector<8x32xf32> -> vector<8x32xf32>
    %399 = vector.broadcast %392 : vector<1x32xf32> to vector<8x32xf32>
    %400 = arith.addf %398, %399 : vector<8x32xf32>
    %401 = arith.addf %360, %400 : vector<8x32xf32>
    %c1_234 = arith.constant 1 : index
    %c0_235 = arith.constant 0 : index
    %c0_236 = arith.constant 0 : index
    %402 = vector.load %arg13[%c1_234, %c0_235, %c0_236] : memref<2x1x32xf32, #tpu.memory_space<vmem>>, vector<1x1x32xf32>
    %403 = vector.shape_cast %402 : vector<1x1x32xf32> to vector<1x32xf32>
    %c1_237 = arith.constant 1 : index
    %c0_238 = arith.constant 0 : index
    %c0_239 = arith.constant 0 : index
    %404 = vector.load %arg14[%c1_237, %c0_238, %c0_239] : memref<2x1x32xf32, #tpu.memory_space<vmem>>, vector<1x1x32xf32>
    %405 = vector.shape_cast %404 : vector<1x1x32xf32> to vector<1x32xf32>
    %cst_240 = arith.constant dense<0.000000e+00> : vector<8xf32>
    %406 = vector.multi_reduction <add>, %401, %cst_240 [1] : vector<8x32xf32> to vector<8xf32>
    %407 = vector.shape_cast %406 : vector<8xf32> to vector<8x1xf32>
    %cst_241 = arith.constant 3.200000e+01 : f32
    %408 = vector.broadcast %cst_241 : f32 to vector<8x1xf32>
    %409 = arith.divf %407, %408 : vector<8x1xf32>
    %410 = vector.broadcast %409 : vector<8x1xf32> to vector<8x32xf32>
    %411 = arith.subf %401, %410 : vector<8x32xf32>
    %412 = arith.mulf %411, %411 : vector<8x32xf32>
    %cst_242 = arith.constant dense<0.000000e+00> : vector<8xf32>
    %413 = vector.multi_reduction <add>, %412, %cst_242 [1] : vector<8x32xf32> to vector<8xf32>
    %414 = vector.shape_cast %413 : vector<8xf32> to vector<8x1xf32>
    %cst_243 = arith.constant 3.200000e+01 : f32
    %415 = vector.broadcast %cst_243 : f32 to vector<8x1xf32>
    %416 = arith.divf %414, %415 : vector<8x1xf32>
    %cst_244 = arith.constant 9.99999974E-6 : f32
    %417 = vector.broadcast %cst_244 : f32 to vector<8x1xf32>
    %418 = arith.addf %416, %417 : vector<8x1xf32>
    %419 = math.rsqrt %418 : vector<8x1xf32>
    %420 = vector.broadcast %419 : vector<8x1xf32> to vector<8x32xf32>
    %421 = arith.mulf %411, %420 : vector<8x32xf32>
    %422 = vector.broadcast %403 : vector<1x32xf32> to vector<8x32xf32>
    %423 = arith.mulf %421, %422 : vector<8x32xf32>
    %424 = vector.broadcast %405 : vector<1x32xf32> to vector<8x32xf32>
    %425 = arith.addf %423, %424 : vector<8x32xf32>
    %c1_245 = arith.constant 1 : index
    %c0_246 = arith.constant 0 : index
    %c0_247 = arith.constant 0 : index
    %426 = vector.load %arg15[%c1_245, %c0_246, %c0_247] : memref<2x32x96xf32, #tpu.memory_space<vmem>>, vector<1x32x96xf32>
    %427 = vector.shape_cast %426 : vector<1x32x96xf32> to vector<32x96xf32>
    %c1_248 = arith.constant 1 : index
    %c0_249 = arith.constant 0 : index
    %c0_250 = arith.constant 0 : index
    %428 = vector.load %arg16[%c1_248, %c0_249, %c0_250] : memref<2x1x96xf32, #tpu.memory_space<vmem>>, vector<1x1x96xf32>
    %429 = vector.shape_cast %428 : vector<1x1x96xf32> to vector<1x96xf32>
    %c1_251 = arith.constant 1 : index
    %c0_252 = arith.constant 0 : index
    %c0_253 = arith.constant 0 : index
    %430 = vector.load %arg17[%c1_251, %c0_252, %c0_253] : memref<2x32x32xf32, #tpu.memory_space<vmem>>, vector<1x32x32xf32>
    %431 = vector.shape_cast %430 : vector<1x32x32xf32> to vector<32x32xf32>
    %c1_254 = arith.constant 1 : index
    %c0_255 = arith.constant 0 : index
    %c0_256 = arith.constant 0 : index
    %432 = vector.load %arg18[%c1_254, %c0_255, %c0_256] : memref<2x1x32xf32, #tpu.memory_space<vmem>>, vector<1x1x32xf32>
    %433 = vector.shape_cast %432 : vector<1x1x32xf32> to vector<1x32xf32>
    %cst_257 = arith.constant dense<0.000000e+00> : vector<8x96xf32>
    %434 = tpu.matmul %425, %427, %cst_257 {dimension_numbers = #tpu.dot_dimension_numbers<[1], [0], [0], [1], [0, 0, 1, 1], [], []>} : vector<8x32xf32>, vector<32x96xf32>, vector<8x96xf32> -> vector<8x96xf32>
    %435 = vector.broadcast %429 : vector<1x96xf32> to vector<8x96xf32>
    %436 = arith.addf %434, %435 : vector<8x96xf32>
    %437 = vector.extract_strided_slice %436 {offsets = [0, 0], sizes = [8, 32], strides = [1, 1]} : vector<8x96xf32> to vector<8x32xf32>
    %438 = vector.extract_strided_slice %436 {offsets = [0, 32], sizes = [8, 32], strides = [1, 1]} : vector<8x96xf32> to vector<8x32xf32>
    %439 = vector.extract_strided_slice %436 {offsets = [0, 64], sizes = [8, 32], strides = [1, 1]} : vector<8x96xf32> to vector<8x32xf32>
    %cst_258 = arith.constant dense<0.000000e+00> : vector<32x32xf32>
    %440 = tpu.matmul %233, %437, %cst_258 {dimension_numbers = #tpu.dot_dimension_numbers<[1], [0], [0], [1], [0, 0, 1, 1], [], []>} : vector<32x8xf32>, vector<8x32xf32>, vector<32x32xf32> -> vector<32x32xf32>
    %441 = arith.mulf %440, %232 : vector<32x32xf32>
    %cst_259 = arith.constant dense<0.000000e+00> : vector<32x8xf32>
    %442 = tpu.matmul %441, %438, %cst_259 {dimension_numbers = #tpu.dot_dimension_numbers<[1], [1], [0], [0], [0, 0, 1, 0], [], []>} : vector<32x32xf32>, vector<8x32xf32>, vector<32x8xf32> -> vector<32x8xf32>
    %cst_260 = arith.constant 0.353553385 : f32
    %443 = vector.broadcast %cst_260 : f32 to vector<32x8xf32>
    %444 = arith.mulf %442, %443 : vector<32x8xf32>
    %445 = arith.addf %444, %230 : vector<32x8xf32>
    %cst_261 = arith.constant dense<0xFF800000> : vector<32xf32>
    %446 = vector.multi_reduction <maximumf>, %445, %cst_261 [1] : vector<32x8xf32> to vector<32xf32>
    %447 = vector.shape_cast %446 : vector<32xf32> to vector<32x1xf32>
    %448 = vector.broadcast %447 : vector<32x1xf32> to vector<32x8xf32>
    %449 = arith.subf %445, %448 : vector<32x8xf32>
    %450 = math.exp %449 : vector<32x8xf32>
    %cst_262 = arith.constant dense<0.000000e+00> : vector<32xf32>
    %451 = vector.multi_reduction <add>, %450, %cst_262 [1] : vector<32x8xf32> to vector<32xf32>
    %452 = vector.shape_cast %451 : vector<32xf32> to vector<32x1xf32>
    %453 = vector.broadcast %452 : vector<32x1xf32> to vector<32x8xf32>
    %454 = arith.divf %450, %453 : vector<32x8xf32>
    %cst_263 = arith.constant dense<0.000000e+00> : vector<32x32xf32>
    %455 = tpu.matmul %454, %439, %cst_263 {dimension_numbers = #tpu.dot_dimension_numbers<[1], [0], [0], [1], [0, 0, 1, 1], [], []>} : vector<32x8xf32>, vector<8x32xf32>, vector<32x32xf32> -> vector<32x32xf32>
    %456 = arith.mulf %455, %232 : vector<32x32xf32>
    %cst_264 = arith.constant dense<0.000000e+00> : vector<8x32xf32>
    %457 = tpu.matmul %234, %456, %cst_264 {dimension_numbers = #tpu.dot_dimension_numbers<[1], [0], [0], [1], [0, 0, 1, 1], [], []>} : vector<8x32xf32>, vector<32x32xf32>, vector<8x32xf32> -> vector<8x32xf32>
    %cst_265 = arith.constant dense<0.000000e+00> : vector<8x32xf32>
    %458 = tpu.matmul %457, %431, %cst_265 {dimension_numbers = #tpu.dot_dimension_numbers<[1], [0], [0], [1], [0, 0, 1, 1], [], []>} : vector<8x32xf32>, vector<32x32xf32>, vector<8x32xf32> -> vector<8x32xf32>
    %459 = vector.broadcast %433 : vector<1x32xf32> to vector<8x32xf32>
    %460 = arith.addf %458, %459 : vector<8x32xf32>
    %461 = arith.addf %401, %460 : vector<8x32xf32>
    %c1_266 = arith.constant 1 : index
    %c0_267 = arith.constant 0 : index
    %c0_268 = arith.constant 0 : index
    %462 = vector.load %arg19[%c1_266, %c0_267, %c0_268] : memref<2x1x32xf32, #tpu.memory_space<vmem>>, vector<1x1x32xf32>
    %463 = vector.shape_cast %462 : vector<1x1x32xf32> to vector<1x32xf32>
    %c1_269 = arith.constant 1 : index
    %c0_270 = arith.constant 0 : index
    %c0_271 = arith.constant 0 : index
    %464 = vector.load %arg20[%c1_269, %c0_270, %c0_271] : memref<2x1x32xf32, #tpu.memory_space<vmem>>, vector<1x1x32xf32>
    %465 = vector.shape_cast %464 : vector<1x1x32xf32> to vector<1x32xf32>
    %cst_272 = arith.constant dense<0.000000e+00> : vector<8xf32>
    %466 = vector.multi_reduction <add>, %461, %cst_272 [1] : vector<8x32xf32> to vector<8xf32>
    %467 = vector.shape_cast %466 : vector<8xf32> to vector<8x1xf32>
    %cst_273 = arith.constant 3.200000e+01 : f32
    %468 = vector.broadcast %cst_273 : f32 to vector<8x1xf32>
    %469 = arith.divf %467, %468 : vector<8x1xf32>
    %470 = vector.broadcast %469 : vector<8x1xf32> to vector<8x32xf32>
    %471 = arith.subf %461, %470 : vector<8x32xf32>
    %472 = arith.mulf %471, %471 : vector<8x32xf32>
    %cst_274 = arith.constant dense<0.000000e+00> : vector<8xf32>
    %473 = vector.multi_reduction <add>, %472, %cst_274 [1] : vector<8x32xf32> to vector<8xf32>
    %474 = vector.shape_cast %473 : vector<8xf32> to vector<8x1xf32>
    %cst_275 = arith.constant 3.200000e+01 : f32
    %475 = vector.broadcast %cst_275 : f32 to vector<8x1xf32>
    %476 = arith.divf %474, %475 : vector<8x1xf32>
    %cst_276 = arith.constant 9.99999974E-6 : f32
    %477 = vector.broadcast %cst_276 : f32 to vector<8x1xf32>
    %478 = arith.addf %476, %477 : vector<8x1xf32>
    %479 = math.rsqrt %478 : vector<8x1xf32>
    %480 = vector.broadcast %479 : vector<8x1xf32> to vector<8x32xf32>
    %481 = arith.mulf %471, %480 : vector<8x32xf32>
    %482 = vector.broadcast %463 : vector<1x32xf32> to vector<8x32xf32>
    %483 = arith.mulf %481, %482 : vector<8x32xf32>
    %484 = vector.broadcast %465 : vector<1x32xf32> to vector<8x32xf32>
    %485 = arith.addf %483, %484 : vector<8x32xf32>
    %c1_277 = arith.constant 1 : index
    %c0_278 = arith.constant 0 : index
    %c0_279 = arith.constant 0 : index
    %486 = vector.load %arg21[%c1_277, %c0_278, %c0_279] : memref<2x32x96xf32, #tpu.memory_space<vmem>>, vector<1x32x96xf32>
    %487 = vector.shape_cast %486 : vector<1x32x96xf32> to vector<32x96xf32>
    %c1_280 = arith.constant 1 : index
    %c0_281 = arith.constant 0 : index
    %c0_282 = arith.constant 0 : index
    %488 = vector.load %arg22[%c1_280, %c0_281, %c0_282] : memref<2x1x96xf32, #tpu.memory_space<vmem>>, vector<1x1x96xf32>
    %489 = vector.shape_cast %488 : vector<1x1x96xf32> to vector<1x96xf32>
    %c1_283 = arith.constant 1 : index
    %c0_284 = arith.constant 0 : index
    %c0_285 = arith.constant 0 : index
    %490 = vector.load %arg23[%c1_283, %c0_284, %c0_285] : memref<2x32x32xf32, #tpu.memory_space<vmem>>, vector<1x32x32xf32>
    %491 = vector.shape_cast %490 : vector<1x32x32xf32> to vector<32x32xf32>
    %c1_286 = arith.constant 1 : index
    %c0_287 = arith.constant 0 : index
    %c0_288 = arith.constant 0 : index
    %492 = vector.load %arg24[%c1_286, %c0_287, %c0_288] : memref<2x1x32xf32, #tpu.memory_space<vmem>>, vector<1x1x32xf32>
    %493 = vector.shape_cast %492 : vector<1x1x32xf32> to vector<1x32xf32>
    %494 = vector.extract_strided_slice %487 {offsets = [0, 0], sizes = [32, 32], strides = [1, 1]} : vector<32x96xf32> to vector<32x32xf32>
    %cst_289 = arith.constant dense<0.000000e+00> : vector<8x32xf32>
    %495 = tpu.matmul %485, %494, %cst_289 {dimension_numbers = #tpu.dot_dimension_numbers<[1], [0], [0], [1], [0, 0, 1, 1], [], []>} : vector<8x32xf32>, vector<32x32xf32>, vector<8x32xf32> -> vector<8x32xf32>
    %496 = vector.extract_strided_slice %489 {offsets = [0, 0], sizes = [1, 32], strides = [1, 1]} : vector<1x96xf32> to vector<1x32xf32>
    %497 = vector.broadcast %496 : vector<1x32xf32> to vector<8x32xf32>
    %498 = arith.addf %495, %497 : vector<8x32xf32>
    %499 = vector.extract_strided_slice %487 {offsets = [0, 32], sizes = [32, 64], strides = [1, 1]} : vector<32x96xf32> to vector<32x64xf32>
    %cst_290 = arith.constant dense<0.000000e+00> : vector<6x64xf32>
    %500 = tpu.matmul %228, %499, %cst_290 {dimension_numbers = #tpu.dot_dimension_numbers<[1], [0], [0], [1], [0, 0, 1, 1], [], []>} : vector<6x32xf32>, vector<32x64xf32>, vector<6x64xf32> -> vector<6x64xf32>
    %501 = vector.extract_strided_slice %489 {offsets = [0, 32], sizes = [1, 64], strides = [1, 1]} : vector<1x96xf32> to vector<1x64xf32>
    %502 = vector.broadcast %501 : vector<1x64xf32> to vector<6x64xf32>
    %503 = arith.addf %500, %502 : vector<6x64xf32>
    %504 = vector.extract_strided_slice %503 {offsets = [0, 0], sizes = [6, 32], strides = [1, 1]} : vector<6x64xf32> to vector<6x32xf32>
    %505 = vector.extract_strided_slice %503 {offsets = [0, 32], sizes = [6, 32], strides = [1, 1]} : vector<6x64xf32> to vector<6x32xf32>
    %cst_291 = arith.constant dense<0.000000e+00> : vector<32x32xf32>
    %506 = tpu.matmul %233, %498, %cst_291 {dimension_numbers = #tpu.dot_dimension_numbers<[1], [0], [0], [1], [0, 0, 1, 1], [], []>} : vector<32x8xf32>, vector<8x32xf32>, vector<32x32xf32> -> vector<32x32xf32>
    %507 = arith.mulf %506, %232 : vector<32x32xf32>
    %cst_292 = arith.constant dense<0.000000e+00> : vector<32x6xf32>
    %508 = tpu.matmul %507, %504, %cst_292 {dimension_numbers = #tpu.dot_dimension_numbers<[1], [1], [0], [0], [0, 0, 1, 0], [], []>} : vector<32x32xf32>, vector<6x32xf32>, vector<32x6xf32> -> vector<32x6xf32>
    %cst_293 = arith.constant 0.353553385 : f32
    %509 = vector.broadcast %cst_293 : f32 to vector<32x6xf32>
    %510 = arith.mulf %508, %509 : vector<32x6xf32>
    %511 = arith.addf %510, %231 : vector<32x6xf32>
    %cst_294 = arith.constant dense<0xFF800000> : vector<32xf32>
    %512 = vector.multi_reduction <maximumf>, %511, %cst_294 [1] : vector<32x6xf32> to vector<32xf32>
    %513 = vector.shape_cast %512 : vector<32xf32> to vector<32x1xf32>
    %514 = vector.broadcast %513 : vector<32x1xf32> to vector<32x6xf32>
    %515 = arith.subf %511, %514 : vector<32x6xf32>
    %516 = math.exp %515 : vector<32x6xf32>
    %cst_295 = arith.constant dense<0.000000e+00> : vector<32xf32>
    %517 = vector.multi_reduction <add>, %516, %cst_295 [1] : vector<32x6xf32> to vector<32xf32>
    %518 = vector.shape_cast %517 : vector<32xf32> to vector<32x1xf32>
    %519 = vector.broadcast %518 : vector<32x1xf32> to vector<32x6xf32>
    %520 = arith.divf %516, %519 : vector<32x6xf32>
    %cst_296 = arith.constant dense<0.000000e+00> : vector<32x32xf32>
    %521 = tpu.matmul %520, %505, %cst_296 {dimension_numbers = #tpu.dot_dimension_numbers<[1], [0], [0], [1], [0, 0, 1, 1], [], []>} : vector<32x6xf32>, vector<6x32xf32>, vector<32x32xf32> -> vector<32x32xf32>
    %522 = arith.mulf %521, %232 : vector<32x32xf32>
    %cst_297 = arith.constant dense<0.000000e+00> : vector<8x32xf32>
    %523 = tpu.matmul %234, %522, %cst_297 {dimension_numbers = #tpu.dot_dimension_numbers<[1], [0], [0], [1], [0, 0, 1, 1], [], []>} : vector<8x32xf32>, vector<32x32xf32>, vector<8x32xf32> -> vector<8x32xf32>
    %cst_298 = arith.constant dense<0.000000e+00> : vector<8x32xf32>
    %524 = tpu.matmul %523, %491, %cst_298 {dimension_numbers = #tpu.dot_dimension_numbers<[1], [0], [0], [1], [0, 0, 1, 1], [], []>} : vector<8x32xf32>, vector<32x32xf32>, vector<8x32xf32> -> vector<8x32xf32>
    %525 = vector.broadcast %493 : vector<1x32xf32> to vector<8x32xf32>
    %526 = arith.addf %524, %525 : vector<8x32xf32>
    %527 = arith.addf %461, %526 : vector<8x32xf32>
    %c1_299 = arith.constant 1 : index
    %c0_300 = arith.constant 0 : index
    %c0_301 = arith.constant 0 : index
    %528 = vector.load %arg25[%c1_299, %c0_300, %c0_301] : memref<2x1x32xf32, #tpu.memory_space<vmem>>, vector<1x1x32xf32>
    %529 = vector.shape_cast %528 : vector<1x1x32xf32> to vector<1x32xf32>
    %c1_302 = arith.constant 1 : index
    %c0_303 = arith.constant 0 : index
    %c0_304 = arith.constant 0 : index
    %530 = vector.load %arg26[%c1_302, %c0_303, %c0_304] : memref<2x1x32xf32, #tpu.memory_space<vmem>>, vector<1x1x32xf32>
    %531 = vector.shape_cast %530 : vector<1x1x32xf32> to vector<1x32xf32>
    %cst_305 = arith.constant dense<0.000000e+00> : vector<8xf32>
    %532 = vector.multi_reduction <add>, %527, %cst_305 [1] : vector<8x32xf32> to vector<8xf32>
    %533 = vector.shape_cast %532 : vector<8xf32> to vector<8x1xf32>
    %cst_306 = arith.constant 3.200000e+01 : f32
    %534 = vector.broadcast %cst_306 : f32 to vector<8x1xf32>
    %535 = arith.divf %533, %534 : vector<8x1xf32>
    %536 = vector.broadcast %535 : vector<8x1xf32> to vector<8x32xf32>
    %537 = arith.subf %527, %536 : vector<8x32xf32>
    %538 = arith.mulf %537, %537 : vector<8x32xf32>
    %cst_307 = arith.constant dense<0.000000e+00> : vector<8xf32>
    %539 = vector.multi_reduction <add>, %538, %cst_307 [1] : vector<8x32xf32> to vector<8xf32>
    %540 = vector.shape_cast %539 : vector<8xf32> to vector<8x1xf32>
    %cst_308 = arith.constant 3.200000e+01 : f32
    %541 = vector.broadcast %cst_308 : f32 to vector<8x1xf32>
    %542 = arith.divf %540, %541 : vector<8x1xf32>
    %cst_309 = arith.constant 9.99999974E-6 : f32
    %543 = vector.broadcast %cst_309 : f32 to vector<8x1xf32>
    %544 = arith.addf %542, %543 : vector<8x1xf32>
    %545 = math.rsqrt %544 : vector<8x1xf32>
    %546 = vector.broadcast %545 : vector<8x1xf32> to vector<8x32xf32>
    %547 = arith.mulf %537, %546 : vector<8x32xf32>
    %548 = vector.broadcast %529 : vector<1x32xf32> to vector<8x32xf32>
    %549 = arith.mulf %547, %548 : vector<8x32xf32>
    %550 = vector.broadcast %531 : vector<1x32xf32> to vector<8x32xf32>
    %551 = arith.addf %549, %550 : vector<8x32xf32>
    %c1_310 = arith.constant 1 : index
    %c0_311 = arith.constant 0 : index
    %c0_312 = arith.constant 0 : index
    %552 = vector.load %arg27[%c1_310, %c0_311, %c0_312] : memref<2x32x64xf32, #tpu.memory_space<vmem>>, vector<1x32x64xf32>
    %553 = vector.shape_cast %552 : vector<1x32x64xf32> to vector<32x64xf32>
    %c1_313 = arith.constant 1 : index
    %c0_314 = arith.constant 0 : index
    %c0_315 = arith.constant 0 : index
    %554 = vector.load %arg28[%c1_313, %c0_314, %c0_315] : memref<2x1x64xf32, #tpu.memory_space<vmem>>, vector<1x1x64xf32>
    %555 = vector.shape_cast %554 : vector<1x1x64xf32> to vector<1x64xf32>
    %c1_316 = arith.constant 1 : index
    %c0_317 = arith.constant 0 : index
    %c0_318 = arith.constant 0 : index
    %556 = vector.load %arg29[%c1_316, %c0_317, %c0_318] : memref<2x64x32xf32, #tpu.memory_space<vmem>>, vector<1x64x32xf32>
    %557 = vector.shape_cast %556 : vector<1x64x32xf32> to vector<64x32xf32>
    %c1_319 = arith.constant 1 : index
    %c0_320 = arith.constant 0 : index
    %c0_321 = arith.constant 0 : index
    %558 = vector.load %arg30[%c1_319, %c0_320, %c0_321] : memref<2x1x32xf32, #tpu.memory_space<vmem>>, vector<1x1x32xf32>
    %559 = vector.shape_cast %558 : vector<1x1x32xf32> to vector<1x32xf32>
    %cst_322 = arith.constant dense<0.000000e+00> : vector<8x64xf32>
    %560 = tpu.matmul %551, %553, %cst_322 {dimension_numbers = #tpu.dot_dimension_numbers<[1], [0], [0], [1], [0, 0, 1, 1], [], []>} : vector<8x32xf32>, vector<32x64xf32>, vector<8x64xf32> -> vector<8x64xf32>
    %561 = vector.broadcast %555 : vector<1x64xf32> to vector<8x64xf32>
    %562 = arith.addf %560, %561 : vector<8x64xf32>
    %cst_323 = arith.constant 0.000000e+00 : f32
    %563 = vector.broadcast %cst_323 : f32 to vector<8x64xf32>
    %564 = arith.maximumf %562, %563 : vector<8x64xf32>
    %cst_324 = arith.constant dense<0.000000e+00> : vector<8x32xf32>
    %565 = tpu.matmul %564, %557, %cst_324 {dimension_numbers = #tpu.dot_dimension_numbers<[1], [0], [0], [1], [0, 0, 1, 1], [], []>} : vector<8x64xf32>, vector<64x32xf32>, vector<8x32xf32> -> vector<8x32xf32>
    %566 = vector.broadcast %559 : vector<1x32xf32> to vector<8x32xf32>
    %567 = arith.addf %565, %566 : vector<8x32xf32>
    %568 = arith.addf %527, %567 : vector<8x32xf32>
    %c0_325 = arith.constant 0 : index
    %c0_326 = arith.constant 0 : index
    %569 = vector.load %arg33[%c0_325, %c0_326] : memref<1x32xf32, #tpu.memory_space<vmem>>, vector<1x32xf32>
    %c0_327 = arith.constant 0 : index
    %c0_328 = arith.constant 0 : index
    %570 = vector.load %arg34[%c0_327, %c0_328] : memref<1x32xf32, #tpu.memory_space<vmem>>, vector<1x32xf32>
    %cst_329 = arith.constant dense<0.000000e+00> : vector<8xf32>
    %571 = vector.multi_reduction <add>, %568, %cst_329 [1] : vector<8x32xf32> to vector<8xf32>
    %572 = vector.shape_cast %571 : vector<8xf32> to vector<8x1xf32>
    %cst_330 = arith.constant 3.200000e+01 : f32
    %573 = vector.broadcast %cst_330 : f32 to vector<8x1xf32>
    %574 = arith.divf %572, %573 : vector<8x1xf32>
    %575 = vector.broadcast %574 : vector<8x1xf32> to vector<8x32xf32>
    %576 = arith.subf %568, %575 : vector<8x32xf32>
    %577 = arith.mulf %576, %576 : vector<8x32xf32>
    %cst_331 = arith.constant dense<0.000000e+00> : vector<8xf32>
    %578 = vector.multi_reduction <add>, %577, %cst_331 [1] : vector<8x32xf32> to vector<8xf32>
    %579 = vector.shape_cast %578 : vector<8xf32> to vector<8x1xf32>
    %cst_332 = arith.constant 3.200000e+01 : f32
    %580 = vector.broadcast %cst_332 : f32 to vector<8x1xf32>
    %581 = arith.divf %579, %580 : vector<8x1xf32>
    %cst_333 = arith.constant 9.99999974E-6 : f32
    %582 = vector.broadcast %cst_333 : f32 to vector<8x1xf32>
    %583 = arith.addf %581, %582 : vector<8x1xf32>
    %584 = math.rsqrt %583 : vector<8x1xf32>
    %585 = vector.broadcast %584 : vector<8x1xf32> to vector<8x32xf32>
    %586 = arith.mulf %576, %585 : vector<8x32xf32>
    %587 = vector.broadcast %569 : vector<1x32xf32> to vector<8x32xf32>
    %588 = arith.mulf %586, %587 : vector<8x32xf32>
    %589 = vector.broadcast %570 : vector<1x32xf32> to vector<8x32xf32>
    %590 = arith.addf %588, %589 : vector<8x32xf32>
    %c0_334 = arith.constant 0 : index
    %c0_335 = arith.constant 0 : index
    %591 = vector.load %arg35[%c0_334, %c0_335] : memref<32x8xf32, #tpu.memory_space<vmem>>, vector<32x8xf32>
    %cst_336 = arith.constant dense<0.000000e+00> : vector<8x8xf32>
    %592 = tpu.matmul %590, %591, %cst_336 {dimension_numbers = #tpu.dot_dimension_numbers<[1], [0], [0], [1], [0, 0, 1, 1], [], []>} : vector<8x32xf32>, vector<32x8xf32>, vector<8x8xf32> -> vector<8x8xf32>
    %c0_337 = arith.constant 0 : index
    %c0_338 = arith.constant 0 : index
    %593 = vector.load %arg36[%c0_337, %c0_338] : memref<1x8xf32, #tpu.memory_space<vmem>>, vector<1x8xf32>
    %594 = vector.broadcast %593 : vector<1x8xf32> to vector<8x8xf32>
    %595 = arith.addf %592, %594 : vector<8x8xf32>
    %c0_339 = arith.constant 0 : index
    %c0_340 = arith.constant 0 : index
    %596 = vector.load %arg46[%c0_339, %c0_340] : memref<8x8xf32, #tpu.memory_space<vmem>>, vector<8x8xf32>
    tpu.vector_store %arg46[%c0_339, %c0_340], %595 {strides = array<i32>} : memref<8x8xf32, #tpu.memory_space<vmem>>, vector<8x8xf32>,
    return
  }
}

</mosaic_0001>

<llo_original>
// kernel: dexterous_transformer_forward.1
$region0: #{dexterous_transformer_forward.1}
  #allocation0 [shape = 'u32[]', space=smem, size = 0x4, offset = 0x4, fixed_abs, tag = 'smem constant byte address 0x4 - core index']
  #allocation1 [shape = 'u32[72,128]{1,0:T(1,128)}', space=vmem, size = 0x9000, scoped, tag = 'internal scratch']
  %s0 = inlined_call_operand.smem [shape: u32[47], index: -1, kind: input, shape index: {}]
  %s1 = sld [smem:[%s0]]
  %s2 = scalar_lea.smem %s0, 1
  %s3 = sld [smem:[%s2]]
  %s4 = scalar_lea.smem %s0, 2
  %s5 = sld [smem:[%s4]]
  %s6 = scalar_lea.smem %s0, 3
  %s7 = sld [smem:[%s6]]
  %s8 = scalar_lea.smem %s0, 4
  %s9 = sld [smem:[%s8]]
  %s10 = scalar_lea.smem %s0, 5
  %s11 = sld [smem:[%s10]]
  %s12 = scalar_lea.smem %s0, 6
  %s13 = sld [smem:[%s12]]
  %s14 = scalar_lea.smem %s0, 7
  %s15 = sld [smem:[%s14]]
  %s16 = scalar_lea.smem %s0, 8
  %s17 = sld [smem:[%s16]]
  %s18 = scalar_lea.smem %s0, 9
  %s19 = sld [smem:[%s18]]
  %s20 = scalar_lea.smem %s0, 10
  %s21 = sld [smem:[%s20]]
  %s22 = scalar_lea.smem %s0, 11
  %s23 = sld [smem:[%s22]]
  %s24 = scalar_lea.smem %s0, 12
  %s25 = sld [smem:[%s24]]
  %s26 = scalar_lea.smem %s0, 13
  %s27 = sld [smem:[%s26]]
  %s28 = scalar_lea.smem %s0, 14
  %s29 = sld [smem:[%s28]]
  %s30 = scalar_lea.smem %s0, 15
  %s31 = sld [smem:[%s30]]
  %s32 = scalar_lea.smem %s0, 16
  %s33 = sld [smem:[%s32]]
  %s34 = scalar_lea.smem %s0, 17
  %s35 = sld [smem:[%s34]]
  %s36 = scalar_lea.smem %s0, 18
  %s37 = sld [smem:[%s36]]
  %s38 = scalar_lea.smem %s0, 19
  %s39 = sld [smem:[%s38]]
  %s40 = scalar_lea.smem %s0, 20
  %s41 = sld [smem:[%s40]]
  %s42 = scalar_lea.smem %s0, 21
  %s43 = sld [smem:[%s42]]
  %s44 = scalar_lea.smem %s0, 22
  %s45 = sld [smem:[%s44]]
  %s46 = scalar_lea.smem %s0, 23
  %s47 = sld [smem:[%s46]]
  %s48 = scalar_lea.smem %s0, 24
  %s49 = sld [smem:[%s48]]
  %s50 = scalar_lea.smem %s0, 25
  %s51 = sld [smem:[%s50]]
  %s52 = scalar_lea.smem %s0, 26
  %s53 = sld [smem:[%s52]]
  %s54 = scalar_lea.smem %s0, 27
  %s55 = sld [smem:[%s54]]
  %s56 = scalar_lea.smem %s0, 28
  %s57 = sld [smem:[%s56]]
  %s58 = scalar_lea.smem %s0, 29
  %s59 = sld [smem:[%s58]]
  %s60 = scalar_lea.smem %s0, 30
  %s61 = sld [smem:[%s60]]
  %s62 = scalar_lea.smem %s0, 31
  %s63 = sld [smem:[%s62]]
  %s64 = scalar_lea.smem %s0, 32
  %s65 = sld [smem:[%s64]]
  %s66 = scalar_lea.smem %s0, 33
  %s67 = sld [smem:[%s66]]
  %s68 = scalar_lea.smem %s0, 34
  %s69 = sld [smem:[%s68]]
  %s70 = scalar_lea.smem %s0, 35
  %s71 = sld [smem:[%s70]]
  %s72 = scalar_lea.smem %s0, 36
  %s73 = sld [smem:[%s72]]
  %s74 = scalar_lea.smem %s0, 37
  %s75 = sld [smem:[%s74]]
  %s76 = scalar_lea.smem %s0, 38
  %s77 = sld [smem:[%s76]]
  %s78 = scalar_lea.smem %s0, 39
  %s79 = sld [smem:[%s78]]
  %s80 = scalar_lea.smem %s0, 40
  %s81 = sld [smem:[%s80]]
  %s82 = scalar_lea.smem %s0, 41
  %s83 = sld [smem:[%s82]]
  %s84 = scalar_lea.smem %s0, 42
  %s85 = sld [smem:[%s84]]
  %s86 = scalar_lea.smem %s0, 43
  %s87 = sld [smem:[%s86]]
  %s88 = scalar_lea.smem %s0, 44
  %s89 = sld [smem:[%s88]]
  %s90 = scalar_lea.smem %s0, 45
  %s91 = sld [smem:[%s90]]
  %s92 = scalar_lea.smem %s0, 46
  %s93 = sld [smem:[%s92]]
  %s94 = sld [smem:[#allocation0]]
  $region334: #{dexterous_transformer_forward.1} parent=0
    _
  %s96 = ssub.s32 1, %s94
  %s97 = scalar_select 0, %s96, %s94
  $region1: #{dexterous_transformer_forward.1} parent=0
    #allocation2 [shape = 'u8[1024]{0}', space=vmem, size = 0x400, scoped, tag = 'input window, operand 1, single buffered']
    #allocation3 [shape = 's32[1]{0}', space=sflag, size = 0x4, scoped, tag = 'scoped memory for dexterous_transformer_forward.1']
    #allocation4 [shape = 's32[1]{0}', space=sflag, size = 0x4, scoped, tag = 'scoped memory for dexterous_transformer_forward.1']
    #allocation5 [shape = 'u8[1024]{0}', space=vmem, size = 0x400, scoped, tag = 'input window, operand 2, single buffered']
    #allocation6 [shape = 's32[1]{0}', space=sflag, size = 0x4, scoped, tag = 'scoped memory for dexterous_transformer_forward.1']
    #allocation7 [shape = 'u8[1024]{0}', space=vmem, size = 0x400, scoped, tag = 'input window, operand 4, single buffered']
    #allocation8 [shape = 'u8[1024]{0}', space=vmem, size = 0x400, scoped, tag = 'input window, operand 6, single buffered']
    #allocation9 [shape = 's32[1]{0}', space=sflag, size = 0x4, scoped, tag = 'scoped memory for dexterous_transformer_forward.1']
    #allocation10 [shape = 'u8[1024]{0}', space=vmem, size = 0x400, scoped, tag = 'input window, operand 7, single buffered']
    #allocation11 [shape = 'u8[1024]{0}', space=vmem, size = 0x400, scoped, tag = 'input window, operand 8, single buffered']
    #allocation12 [shape = 's32[1]{0}', space=sflag, size = 0x4, scoped, tag = 'scoped memory for dexterous_transformer_forward.1']
    #allocation13 [shape = 'u8[1024]{0}', space=vmem, size = 0x400, scoped, tag = 'input window, operand 10, single buffered']
    #allocation14 [shape = 'u8[1024]{0}', space=vmem, size = 0x400, scoped, tag = 'input window, operand 12, single buffered']
    #allocation15 [shape = 's32[1]{0}', space=sflag, size = 0x4, scoped, tag = 'scoped memory for dexterous_transformer_forward.1']
    #allocation16 [shape = 'u8[1024]{0}', space=vmem, size = 0x400, scoped, tag = 'input window, operand 13, single buffered']
    #allocation17 [shape = 'u8[1024]{0}', space=vmem, size = 0x400, scoped, tag = 'input window, operand 14, single buffered']
    #allocation18 [shape = 's32[1]{0}', space=sflag, size = 0x4, scoped, tag = 'scoped memory for dexterous_transformer_forward.1']
    #allocation19 [shape = 'u8[1024]{0}', space=vmem, size = 0x400, scoped, tag = 'input window, operand 16, single buffered']
    #allocation20 [shape = 'u8[1024]{0}', space=vmem, size = 0x400, scoped, tag = 'input window, operand 18, single buffered']
    #allocation21 [shape = 's32[1]{0}', space=sflag, size = 0x4, scoped, tag = 'scoped memory for dexterous_transformer_forward.1']
    #allocation22 [shape = 'u8[1024]{0}', space=vmem, size = 0x400, scoped, tag = 'input window, operand 19, single buffered']
    #allocation23 [shape = 'u8[1024]{0}', space=vmem, size = 0x400, scoped, tag = 'input window, operand 20, single buffered']
    #allocation24 [shape = 's32[1]{0}', space=sflag, size = 0x4, scoped, tag = 'scoped memory for dexterous_transformer_forward.1']
    #allocation25 [shape = 'u8[32768]{0}', space=vmem, size = 0x8000, scoped, tag = 'input window, operand 21, single buffered']
    #allocation26 [shape = 'u8[1024]{0}', space=vmem, size = 0x400, scoped, tag = 'input window, operand 22, single buffered']
    #allocation27 [shape = 's32[1]{0}', space=sflag, size = 0x4, scoped, tag = 'scoped memory for dexterous_transformer_forward.1']
    #allocation28 [shape = 'u8[32768]{0}', space=vmem, size = 0x8000, scoped, tag = 'input window, operand 23, single buffered']
    #allocation29 [shape = 'u8[1024]{0}', space=vmem, size = 0x400, scoped, tag = 'input window, operand 24, single buffered']
    #allocation30 [shape = 's32[1]{0}', space=sflag, size = 0x4, scoped, tag = 'scoped memory for dexterous_transformer_forward.1']
    #allocation31 [shape = 'u8[1024]{0}', space=vmem, size = 0x400, scoped, tag = 'input window, operand 25, single buffered']
    #allocation32 [shape = 'u8[1024]{0}', space=vmem, size = 0x400, scoped, tag = 'input window, operand 26, single buffered']
    #allocation33 [shape = 's32[1]{0}', space=sflag, size = 0x4, scoped, tag = 'scoped memory for dexterous_transformer_forward.1']
    #allocation34 [shape = 'u8[32768]{0}', space=vmem, size = 0x8000, scoped, tag = 'input window, operand 27, single buffered']
    #allocation35 [shape = 'u8[1024]{0}', space=vmem, size = 0x400, scoped, tag = 'input window, operand 28, single buffered']
    #allocation36 [shape = 's32[1]{0}', space=sflag, size = 0x4, scoped, tag = 'scoped memory for dexterous_transformer_forward.1']
    #allocation37 [shape = 'u8[1024]{0}', space=vmem, size = 0x400, scoped, tag = 'input window, operand 30, single buffered']
    #allocation38 [shape = 'u8[512]{0}', space=vmem, size = 0x400, scoped, tag = 'input window, operand 31, single buffered']
    #allocation39 [shape = 's32[1]{0}', space=sflag, size = 0x4, scoped, tag = 'scoped memory for dexterous_transformer_forward.1']
    #allocation40 [shape = 'u8[512]{0}', space=vmem, size = 0x400, scoped, tag = 'input window, operand 32, single buffered']
    #allocation41 [shape = 'u8[512]{0}', space=vmem, size = 0x400, scoped, tag = 'input window, operand 33, single buffered']
    #allocation42 [shape = 's32[1]{0}', space=sflag, size = 0x4, scoped, tag = 'scoped memory for dexterous_transformer_forward.1']
    #allocation43 [shape = 'u8[512]{0}', space=vmem, size = 0x400, scoped, tag = 'input window, operand 34, single buffered']
    #allocation44 [shape = 'u8[512]{0}', space=vmem, size = 0x400, scoped, tag = 'input window, operand 36, single buffered']
    #allocation45 [shape = 's32[1]{0}', space=sflag, size = 0x4, scoped, tag = 'scoped memory for dexterous_transformer_forward.1']
    #allocation46 [shape = 'u8[12288]{0}', space=vmem, size = 0x3000, scoped, tag = 'input window, operand 37, single buffered']
    #allocation47 [shape = 'u8[4096]{0}', space=vmem, size = 0x1000, scoped, tag = 'input window, operand 38, single buffered']
    #allocation48 [shape = 's32[1]{0}', space=sflag, size = 0x4, scoped, tag = 'scoped memory for dexterous_transformer_forward.1']
    #allocation49 [shape = 'u8[16384]{0}', space=vmem, size = 0x4000, scoped, tag = 'input window, operand 39, single buffered']
    #allocation50 [shape = 'u8[12288]{0}', space=vmem, size = 0x3000, scoped, tag = 'input window, operand 41, single buffered']
    #allocation51 [shape = 's32[1]{0}', space=sflag, size = 0x4, scoped, tag = 'scoped memory for dexterous_transformer_forward.1']
    #allocation52 [shape = 'u8[16384]{0}', space=vmem, size = 0x4000, scoped, tag = 'input window, operand 42, single buffered']
    #allocation53 [shape = 'u8[16384]{0}', space=vmem, size = 0x4000, scoped, tag = 'input window, operand 44, single buffered']
    #allocation54 [shape = 's32[1]{0}', space=sflag, size = 0x4, scoped, tag = 'scoped memory for dexterous_transformer_forward.1']
    #allocation55 [shape = 'u8[16384]{0}', space=vmem, size = 0x4000, scoped, tag = 'input window, operand 45, single buffered']
    #allocation56 [shape = 'u8[4096]{0}', space=vmem, size = 0x1000, scoped, tag = 'output window, operand 0, single buffered']
    %98 = vsyncpa [#allocation3], 0
    %99 = vsyncpa [#allocation6], 0
    %100 = vsyncpa [#allocation9], 0
    %101 = vsyncpa [#allocation12], 0
    %102 = vsyncpa [#allocation15], 0
    %103 = vsyncpa [#allocation18], 0
    %104 = vsyncpa [#allocation21], 0
    %105 = vsyncpa [#allocation24], 0
    %106 = vsyncpa [#allocation27], 0
    %107 = vsyncpa [#allocation30], 0
    %108 = vsyncpa [#allocation33], 0
    %109 = vsyncpa [#allocation36], 0
    %110 = vsyncpa [#allocation39], 0
    %111 = vsyncpa [#allocation42], 0
    %112 = vsyncpa [#allocation45], 0
    %113 = vsyncpa [#allocation48], 0
    %114 = vsyncpa [#allocation51], 0
    %115 = vsyncpa [#allocation54], 0
    %116 = vsyncpa [#allocation4], 0
    // Predicated region
    $region2: #{dexterous_transformer_forward.1} parent=1 // pred_check
      _
    $region3: #{dexterous_transformer_forward.1} parent=1 // pred_check_branch
      %118 = sbr.rel (0) target = $region5
    $region4: #{dexterous_transformer_forward.1} parent=1 // pred_region
      _
    $region5: #{dexterous_transformer_forward.1} parent=1 // pred_fallthru
      _
    // Predicated region
    $region6: #{dexterous_transformer_forward.1} parent=1 // pred_check
      _
    $region7: #{dexterous_transformer_forward.1} parent=1 // pred_check_branch
      %120 = sbr.rel (0) target = $region9
    $region8: #{dexterous_transformer_forward.1} parent=1 // pred_region
      %122 = vsyncadd [#allocation3], 0
      %s123 = sshll.u32 %s3, 4
      %s124 = int_to_ptr.hbm [resolvable:$true] %s123
      %s125 = sshll.u32 [#allocation2], 4
      %s126 = int_to_ptr.vmem [resolvable:$true] %s125
      %131 = dma.hbm_to_vmem [thread:$0]  %s124, 32, %s126, [#allocation3], 16, 16, 1
    $region9: #{dexterous_transformer_forward.1} parent=1 // pred_fallthru
      _
    // Predicated region
    $region10: #{dexterous_transformer_forward.1} parent=1 // pred_check
      _
    $region11: #{dexterous_transformer_forward.1} parent=1 // pred_check_branch
      %133 = sbr.rel (0) target = $region13
    $region12: #{dexterous_transformer_forward.1} parent=1 // pred_region
      %135 = vsyncadd [#allocation6], 0
      %s136 = sshll.u32 %s5, 4
      %s137 = int_to_ptr.hbm [resolvable:$true] %s136
      %s138 = sshll.u32 [#allocation5], 4
      %s139 = int_to_ptr.vmem [resolvable:$true] %s138
      %144 = dma.hbm_to_vmem [thread:$0]  %s137, 32, %s139, [#allocation6], 16, 16, 1
    $region13: #{dexterous_transformer_forward.1} parent=1 // pred_fallthru
      _
    // Predicated region
    $region14: #{dexterous_transformer_forward.1} parent=1 // pred_check
      _
    $region15: #{dexterous_transformer_forward.1} parent=1 // pred_check_branch
      %146 = sbr.rel (0) target = $region17
    $region16: #{dexterous_transformer_forward.1} parent=1 // pred_region
      _
    $region17: #{dexterous_transformer_forward.1} parent=1 // pred_fallthru
      _
    // Predicated region
    $region18: #{dexterous_transformer_forward.1} parent=1 // pred_check
      _
    $region19: #{dexterous_transformer_forward.1} parent=1 // pred_check_branch
      %148 = sbr.rel (0) target = $region21
    $region20: #{dexterous_transformer_forward.1} parent=1 // pred_region
      %150 = vsyncadd [#allocation6], 0
      %s151 = sshll.u32 %s9, 4
      %s152 = int_to_ptr.hbm [resolvable:$true] %s151
      %s153 = sshll.u32 [#allocation7], 4
      %s154 = int_to_ptr.vmem [resolvable:$true] %s153
      %159 = dma.hbm_to_vmem [thread:$0]  %s152, 32, %s154, [#allocation6], 16, 16, 1
    $region21: #{dexterous_transformer_forward.1} parent=1 // pred_fallthru
      _
    // Predicated region
    $region22: #{dexterous_transformer_forward.1} parent=1 // pred_check
      _
    $region23: #{dexterous_transformer_forward.1} parent=1 // pred_check_branch
      %161 = sbr.rel (0) target = $region25
    $region24: #{dexterous_transformer_forward.1} parent=1 // pred_region
      _
    $region25: #{dexterous_transformer_forward.1} parent=1 // pred_fallthru
      _
    // Predicated region
    $region26: #{dexterous_transformer_forward.1} parent=1 // pred_check
      _
    $region27: #{dexterous_transformer_forward.1} parent=1 // pred_check_branch
      %163 = sbr.rel (0) target = $region29
    $region28: #{dexterous_transformer_forward.1} parent=1 // pred_region
      %165 = vsyncadd [#allocation9], 0
      %s166 = sshll.u32 %s13, 4
      %s167 = int_to_ptr.hbm [resolvable:$true] %s166
      %s168 = sshll.u32 [#allocation8], 4
      %s169 = int_to_ptr.vmem [resolvable:$true] %s168
      %174 = dma.hbm_to_vmem [thread:$0]  %s167, 32, %s169, [#allocation9], 16, 16, 1
    $region29: #{dexterous_transformer_forward.1} parent=1 // pred_fallthru
      _
    // Predicated region
    $region30: #{dexterous_transformer_forward.1} parent=1 // pred_check
      _
    $region31: #{dexterous_transformer_forward.1} parent=1 // pred_check_branch
      %176 = sbr.rel (0) target = $region33
    $region32: #{dexterous_transformer_forward.1} parent=1 // pred_region
      %178 = vsyncadd [#allocation9], 0
      %s179 = sshll.u32 %s15, 4
      %s180 = int_to_ptr.hbm [resolvable:$true] %s179
      %s181 = sshll.u32 [#allocation10], 4
      %s182 = int_to_ptr.vmem [resolvable:$true] %s181
      %187 = dma.hbm_to_vmem [thread:$0]  %s180, 32, %s182, [#allocation9], 16, 16, 1
    $region33: #{dexterous_transformer_forward.1} parent=1 // pred_fallthru
      _
    // Predicated region
    $region34: #{dexterous_transformer_forward.1} parent=1 // pred_check
      _
    $region35: #{dexterous_transformer_forward.1} parent=1 // pred_check_branch
      %189 = sbr.rel (0) target = $region37
    $region36: #{dexterous_transformer_forward.1} parent=1 // pred_region
      %191 = vsyncadd [#allocation12], 0
      %s192 = sshll.u32 %s17, 4
      %s193 = int_to_ptr.hbm [resolvable:$true] %s192
      %s194 = sshll.u32 [#allocation11], 4
      %s195 = int_to_ptr.vmem [resolvable:$true] %s194
      %200 = dma.hbm_to_vmem [thread:$0]  %s193, 32, %s195, [#allocation12], 16, 16, 1
    $region37: #{dexterous_transformer_forward.1} parent=1 // pred_fallthru
      _
    // Predicated region
    $region38: #{dexterous_transformer_forward.1} parent=1 // pred_check
      _
    $region39: #{dexterous_transformer_forward.1} parent=1 // pred_check_branch
      %202 = sbr.rel (0) target = $region41
    $region40: #{dexterous_transformer_forward.1} parent=1 // pred_region
      _
    $region41: #{dexterous_transformer_forward.1} parent=1 // pred_fallthru
      _
    // Predicated region
    $region42: #{dexterous_transformer_forward.1} parent=1 // pred_check
      _
    $region43: #{dexterous_transformer_forward.1} parent=1 // pred_check_branch
      %204 = sbr.rel (0) target = $region45
    $region44: #{dexterous_transformer_forward.1} parent=1 // pred_region
      %206 = vsyncadd [#allocation12], 0
      %s207 = sshll.u32 %s21, 4
      %s208 = int_to_ptr.hbm [resolvable:$true] %s207
      %s209 = sshll.u32 [#allocation13], 4
      %s210 = int_to_ptr.vmem [resolvable:$true] %s209
      %215 = dma.hbm_to_vmem [thread:$0]  %s208, 32, %s210, [#allocation12], 16, 16, 1
    $region45: #{dexterous_transformer_forward.1} parent=1 // pred_fallthru
      _
    // Predicated region
    $region46: #{dexterous_transformer_forward.1} parent=1 // pred_check
      _
    $region47: #{dexterous_transformer_forward.1} parent=1 // pred_check_branch
      %217 = sbr.rel (0) target = $region49
    $region48: #{dexterous_transformer_forward.1} parent=1 // pred_region
      _
    $region49: #{dexterous_transformer_forward.1} parent=1 // pred_fallthru
      _
    // Predicated region
    $region50: #{dexterous_transformer_forward.1} parent=1 // pred_check
      _
    $region51: #{dexterous_transformer_forward.1} parent=1 // pred_check_branch
      %219 = sbr.rel (0) target = $region53
    $region52: #{dexterous_transformer_forward.1} parent=1 // pred_region
      %221 = vsyncadd [#allocation15], 0
      %s222 = sshll.u32 %s25, 4
      %s223 = int_to_ptr.hbm [resolvable:$true] %s222
      %s224 = sshll.u32 [#allocation14], 4
      %s225 = int_to_ptr.vmem [resolvable:$true] %s224
      %230 = dma.hbm_to_vmem [thread:$0]  %s223, 32, %s225, [#allocation15], 16, 16, 1
    $region53: #{dexterous_transformer_forward.1} parent=1 // pred_fallthru
      _
    // Predicated region
    $region54: #{dexterous_transformer_forward.1} parent=1 // pred_check
      _
    $region55: #{dexterous_transformer_forward.1} parent=1 // pred_check_branch
      %232 = sbr.rel (0) target = $region57
    $region56: #{dexterous_transformer_forward.1} parent=1 // pred_region
      %234 = vsyncadd [#allocation15], 0
      %s235 = sshll.u32 %s27, 4
      %s236 = int_to_ptr.hbm [resolvable:$true] %s235
      %s237 = sshll.u32 [#allocation16], 4
      %s238 = int_to_ptr.vmem [resolvable:$true] %s237
      %243 = dma.hbm_to_vmem [thread:$0]  %s236, 32, %s238, [#allocation15], 16, 16, 1
    $region57: #{dexterous_transformer_forward.1} parent=1 // pred_fallthru
      _
    // Predicated region
    $region58: #{dexterous_transformer_forward.1} parent=1 // pred_check
      _
    $region59: #{dexterous_transformer_forward.1} parent=1 // pred_check_branch
      %245 = sbr.rel (0) target = $region61
    $region60: #{dexterous_transformer_forward.1} parent=1 // pred_region
      %247 = vsyncadd [#allocation18], 0
      %s248 = sshll.u32 %s29, 4
      %s249 = int_to_ptr.hbm [resolvable:$true] %s248
      %s250 = sshll.u32 [#allocation17], 4
      %s251 = int_to_ptr.vmem [resolvable:$true] %s250
      %256 = dma.hbm_to_vmem [thread:$0]  %s249, 32, %s251, [#allocation18], 16, 16, 1
    $region61: #{dexterous_transformer_forward.1} parent=1 // pred_fallthru
      _
    // Predicated region
    $region62: #{dexterous_transformer_forward.1} parent=1 // pred_check
      _
    $region63: #{dexterous_transformer_forward.1} parent=1 // pred_check_branch
      %258 = sbr.rel (0) target = $region65
    $region64: #{dexterous_transformer_forward.1} parent=1 // pred_region
      _
    $region65: #{dexterous_transformer_forward.1} parent=1 // pred_fallthru
      _
    // Predicated region
    $region66: #{dexterous_transformer_forward.1} parent=1 // pred_check
      _
    $region67: #{dexterous_transformer_forward.1} parent=1 // pred_check_branch
      %260 = sbr.rel (0) target = $region69
    $region68: #{dexterous_transformer_forward.1} parent=1 // pred_region
      %262 = vsyncadd [#allocation18], 0
      %s263 = sshll.u32 %s33, 4
      %s264 = int_to_ptr.hbm [resolvable:$true] %s263
      %s265 = sshll.u32 [#allocation19], 4
      %s266 = int_to_ptr.vmem [resolvable:$true] %s265
      %271 = dma.hbm_to_vmem [thread:$0]  %s264, 32, %s266, [#allocation18], 16, 16, 1
    $region69: #{dexterous_transformer_forward.1} parent=1 // pred_fallthru
      _
    // Predicated region
    $region70: #{dexterous_transformer_forward.1} parent=1 // pred_check
      _
    $region71: #{dexterous_transformer_forward.1} parent=1 // pred_check_branch
      %273 = sbr.rel (0) target = $region73
    $region72: #{dexterous_transformer_forward.1} parent=1 // pred_region
      _
    $region73: #{dexterous_transformer_forward.1} parent=1 // pred_fallthru
      _
    // Predicated region
    $region74: #{dexterous_transformer_forward.1} parent=1 // pred_check
      _
    $region75: #{dexterous_transformer_forward.1} parent=1 // pred_check_branch
      %275 = sbr.rel (0) target = $region77
    $region76: #{dexterous_transformer_forward.1} parent=1 // pred_region
      %277 = vsyncadd [#allocation21], 0
      %s278 = sshll.u32 %s37, 4
      %s279 = int_to_ptr.hbm [resolvable:$true] %s278
      %s280 = sshll.u32 [#allocation20], 4
      %s281 = int_to_ptr.vmem [resolvable:$true] %s280
      %286 = dma.hbm_to_vmem [thread:$0]  %s279, 32, %s281, [#allocation21], 16, 16, 1
    $region77: #{dexterous_transformer_forward.1} parent=1 // pred_fallthru
      _
    // Predicated region
    $region78: #{dexterous_transformer_forward.1} parent=1 // pred_check
      _
    $region79: #{dexterous_transformer_forward.1} parent=1 // pred_check_branch
      %288 = sbr.rel (0) target = $region81
    $region80: #{dexterous_transformer_forward.1} parent=1 // pred_region
      %290 = vsyncadd [#allocation21], 0
      %s291 = sshll.u32 %s39, 4
      %s292 = int_to_ptr.hbm [resolvable:$true] %s291
      %s293 = sshll.u32 [#allocation22], 4
      %s294 = int_to_ptr.vmem [resolvable:$true] %s293
      %299 = dma.hbm_to_vmem [thread:$0]  %s292, 32, %s294, [#allocation21], 16, 16, 1
    $region81: #{dexterous_transformer_forward.1} parent=1 // pred_fallthru
      _
    // Predicated region
    $region82: #{dexterous_transformer_forward.1} parent=1 // pred_check
      _
    $region83: #{dexterous_transformer_forward.1} parent=1 // pred_check_branch
      %301 = sbr.rel (0) target = $region85
    $region84: #{dexterous_transformer_forward.1} parent=1 // pred_region
      %303 = vsyncadd [#allocation24], 0
      %s304 = sshll.u32 %s41, 4
      %s305 = int_to_ptr.hbm [resolvable:$true] %s304
      %s306 = sshll.u32 [#allocation23], 4
      %s307 = int_to_ptr.vmem [resolvable:$true] %s306
      %312 = dma.hbm_to_vmem [thread:$0]  %s305, 32, %s307, [#allocation24], 16, 16, 1
    $region85: #{dexterous_transformer_forward.1} parent=1 // pred_fallthru
      _
    // Predicated region
    $region86: #{dexterous_transformer_forward.1} parent=1 // pred_check
      _
    $region87: #{dexterous_transformer_forward.1} parent=1 // pred_check_branch
      %314 = sbr.rel (0) target = $region89
    $region88: #{dexterous_transformer_forward.1} parent=1 // pred_region
      %316 = vsyncadd [#allocation24], 0
      %s317 = sshll.u32 %s43, 4
      %s318 = int_to_ptr.hbm [resolvable:$true] %s317
      %s319 = sshll.u32 [#allocation25], 4
      %s320 = int_to_ptr.vmem [resolvable:$true] %s319
      %325 = dma.hbm_to_vmem [thread:$0]  %s318, 1024, %s320, [#allocation24], 128, 128, 8
    $region89: #{dexterous_transformer_forward.1} parent=1 // pred_fallthru
      _
    // Predicated region
    $region90: #{dexterous_transformer_forward.1} parent=1 // pred_check
      _
    $region91: #{dexterous_transformer_forward.1} parent=1 // pred_check_branch
      %327 = sbr.rel (0) target = $region93
    $region92: #{dexterous_transformer_forward.1} parent=1 // pred_region
      %329 = vsyncadd [#allocation27], 0
      %s330 = sshll.u32 %s45, 4
      %s331 = int_to_ptr.hbm [resolvable:$true] %s330
      %s332 = sshll.u32 [#allocation26], 4
      %s333 = int_to_ptr.vmem [resolvable:$true] %s332
      %338 = dma.hbm_to_vmem [thread:$0]  %s331, 32, %s333, [#allocation27], 16, 16, 1
    $region93: #{dexterous_transformer_forward.1} parent=1 // pred_fallthru
      _
    // Predicated region
    $region94: #{dexterous_transformer_forward.1} parent=1 // pred_check
      _
    $region95: #{dexterous_transformer_forward.1} parent=1 // pred_check_branch
      %340 = sbr.rel (0) target = $region97
    $region96: #{dexterous_transformer_forward.1} parent=1 // pred_region
      %342 = vsyncadd [#allocation27], 0
      %s343 = sshll.u32 %s47, 4
      %s344 = int_to_ptr.hbm [resolvable:$true] %s343
      %s345 = sshll.u32 [#allocation28], 4
      %s346 = int_to_ptr.vmem [resolvable:$true] %s345
      %351 = dma.hbm_to_vmem [thread:$0]  %s344, 1024, %s346, [#allocation27], 128, 128, 8
    $region97: #{dexterous_transformer_forward.1} parent=1 // pred_fallthru
      _
    // Predicated region
    $region98: #{dexterous_transformer_forward.1} parent=1 // pred_check
      _
    $region99: #{dexterous_transformer_forward.1} parent=1 // pred_check_branch
      %353 = sbr.rel (0) target = $region101
    $region100: #{dexterous_transformer_forward.1} parent=1 // pred_region
      %355 = vsyncadd [#allocation30], 0
      %s356 = sshll.u32 %s49, 4
      %s357 = int_to_ptr.hbm [resolvable:$true] %s356
      %s358 = sshll.u32 [#allocation29], 4
      %s359 = int_to_ptr.vmem [resolvable:$true] %s358
      %364 = dma.hbm_to_vmem [thread:$0]  %s357, 32, %s359, [#allocation30], 16, 16, 1
    $region101: #{dexterous_transformer_forward.1} parent=1 // pred_fallthru
      _
    // Predicated region
    $region102: #{dexterous_transformer_forward.1} parent=1 // pred_check
      _
    $region103: #{dexterous_transformer_forward.1} parent=1 // pred_check_branch
      %366 = sbr.rel (0) target = $region105
    $region104: #{dexterous_transformer_forward.1} parent=1 // pred_region
      %368 = vsyncadd [#allocation30], 0
      %s369 = sshll.u32 %s51, 4
      %s370 = int_to_ptr.hbm [resolvable:$true] %s369
      %s371 = sshll.u32 [#allocation31], 4
      %s372 = int_to_ptr.vmem [resolvable:$true] %s371
      %377 = dma.hbm_to_vmem [thread:$0]  %s370, 32, %s372, [#allocation30], 16, 16, 1
    $region105: #{dexterous_transformer_forward.1} parent=1 // pred_fallthru
      _
    // Predicated region
    $region106: #{dexterous_transformer_forward.1} parent=1 // pred_check
      _
    $region107: #{dexterous_transformer_forward.1} parent=1 // pred_check_branch
      %379 = sbr.rel (0) target = $region109
    $region108: #{dexterous_transformer_forward.1} parent=1 // pred_region
      %381 = vsyncadd [#allocation33], 0
      %s382 = sshll.u32 %s53, 4
      %s383 = int_to_ptr.hbm [resolvable:$true] %s382
      %s384 = sshll.u32 [#allocation32], 4
      %s385 = int_to_ptr.vmem [resolvable:$true] %s384
      %390 = dma.hbm_to_vmem [thread:$0]  %s383, 32, %s385, [#allocation33], 16, 16, 1
    $region109: #{dexterous_transformer_forward.1} parent=1 // pred_fallthru
      _
    // Predicated region
    $region110: #{dexterous_transformer_forward.1} parent=1 // pred_check
      _
    $region111: #{dexterous_transformer_forward.1} parent=1 // pred_check_branch
      %392 = sbr.rel (0) target = $region113
    $region112: #{dexterous_transformer_forward.1} parent=1 // pred_region
      %394 = vsyncadd [#allocation33], 0
      %s395 = sshll.u32 %s55, 4
      %s396 = int_to_ptr.hbm [resolvable:$true] %s395
      %s397 = sshll.u32 [#allocation34], 4
      %s398 = int_to_ptr.vmem [resolvable:$true] %s397
      %403 = dma.hbm_to_vmem [thread:$0]  %s396, 1024, %s398, [#allocation33], 128, 128, 8
    $region113: #{dexterous_transformer_forward.1} parent=1 // pred_fallthru
      _
    // Predicated region
    $region114: #{dexterous_transformer_forward.1} parent=1 // pred_check
      _
    $region115: #{dexterous_transformer_forward.1} parent=1 // pred_check_branch
      %405 = sbr.rel (0) target = $region117
    $region116: #{dexterous_transformer_forward.1} parent=1 // pred_region
      %407 = vsyncadd [#allocation36], 0
      %s408 = sshll.u32 %s57, 4
      %s409 = int_to_ptr.hbm [resolvable:$true] %s408
      %s410 = sshll.u32 [#allocation35], 4
      %s411 = int_to_ptr.vmem [resolvable:$true] %s410
      %416 = dma.hbm_to_vmem [thread:$0]  %s409, 32, %s411, [#allocation36], 16, 16, 1
    $region117: #{dexterous_transformer_forward.1} parent=1 // pred_fallthru
      _
    // Predicated region
    $region118: #{dexterous_transformer_forward.1} parent=1 // pred_check
      _
    $region119: #{dexterous_transformer_forward.1} parent=1 // pred_check_branch
      %418 = sbr.rel (0) target = $region121
    $region120: #{dexterous_transformer_forward.1} parent=1 // pred_region
      _
    $region121: #{dexterous_transformer_forward.1} parent=1 // pred_fallthru
      _
    // Predicated region
    $region122: #{dexterous_transformer_forward.1} parent=1 // pred_check
      _
    $region123: #{dexterous_transformer_forward.1} parent=1 // pred_check_branch
      %420 = sbr.rel (0) target = $region125
    $region124: #{dexterous_transformer_forward.1} parent=1 // pred_region
      %422 = vsyncadd [#allocation36], 0
      %s423 = sshll.u32 %s61, 4
      %s424 = int_to_ptr.hbm [resolvable:$true] %s423
      %s425 = sshll.u32 [#allocation37], 4
      %s426 = int_to_ptr.vmem [resolvable:$true] %s425
      %431 = dma.hbm_to_vmem [thread:$0]  %s424, 32, %s426, [#allocation36], 16, 16, 1
    $region125: #{dexterous_transformer_forward.1} parent=1 // pred_fallthru
      _
    // Predicated region
    $region126: #{dexterous_transformer_forward.1} parent=1 // pred_check
      _
    $region127: #{dexterous_transformer_forward.1} parent=1 // pred_check_branch
      %433 = sbr.rel (0) target = $region129
    $region128: #{dexterous_transformer_forward.1} parent=1 // pred_region
      %435 = vsyncadd [#allocation39], 0
      %s437 = sshll.u32 %s63, 4
      %s438 = int_to_ptr.hbm [resolvable:$true] %s437
      %s439 = sshll.u32 [#allocation38], 4
      %s440 = int_to_ptr.vmem [resolvable:$true] %s439
      %442 = dma.hbm_to_vmem [thread:$0]  %s438, 16, %s440, [#allocation39]
    $region129: #{dexterous_transformer_forward.1} parent=1 // pred_fallthru
      _
    // Predicated region
    $region130: #{dexterous_transformer_forward.1} parent=1 // pred_check
      _
    $region131: #{dexterous_transformer_forward.1} parent=1 // pred_check_branch
      %444 = sbr.rel (0) target = $region133
    $region132: #{dexterous_transformer_forward.1} parent=1 // pred_region
      %446 = vsyncadd [#allocation39], 0
      %s448 = sshll.u32 %s65, 4
      %s449 = int_to_ptr.hbm [resolvable:$true] %s448
      %s450 = sshll.u32 [#allocation40], 4
      %s451 = int_to_ptr.vmem [resolvable:$true] %s450
      %453 = dma.hbm_to_vmem [thread:$0]  %s449, 16, %s451, [#allocation39]
    $region133: #{dexterous_transformer_forward.1} parent=1 // pred_fallthru
      _
    // Predicated region
    $region134: #{dexterous_transformer_forward.1} parent=1 // pred_check
      _
    $region135: #{dexterous_transformer_forward.1} parent=1 // pred_check_branch
      %455 = sbr.rel (0) target = $region137
    $region136: #{dexterous_transformer_forward.1} parent=1 // pred_region
      %457 = vsyncadd [#allocation42], 0
      %s459 = sshll.u32 %s67, 4
      %s460 = int_to_ptr.hbm [resolvable:$true] %s459
      %s461 = sshll.u32 [#allocation41], 4
      %s462 = int_to_ptr.vmem [resolvable:$true] %s461
      %464 = dma.hbm_to_vmem [thread:$0]  %s460, 16, %s462, [#allocation42]
    $region137: #{dexterous_transformer_forward.1} parent=1 // pred_fallthru
      _
    // Predicated region
    $region138: #{dexterous_transformer_forward.1} parent=1 // pred_check
      _
    $region139: #{dexterous_transformer_forward.1} parent=1 // pred_check_branch
      %466 = sbr.rel (0) target = $region141
    $region140: #{dexterous_transformer_forward.1} parent=1 // pred_region
      %468 = vsyncadd [#allocation42], 0
      %s470 = sshll.u32 %s69, 4
      %s471 = int_to_ptr.hbm [resolvable:$true] %s470
      %s472 = sshll.u32 [#allocation43], 4
      %s473 = int_to_ptr.vmem [resolvable:$true] %s472
      %475 = dma.hbm_to_vmem [thread:$0]  %s471, 16, %s473, [#allocation42]
    $region141: #{dexterous_transformer_forward.1} parent=1 // pred_fallthru
      _
    // Predicated region
    $region142: #{dexterous_transformer_forward.1} parent=1 // pred_check
      _
    $region143: #{dexterous_transformer_forward.1} parent=1 // pred_check_branch
      %477 = sbr.rel (0) target = $region145
    $region144: #{dexterous_transformer_forward.1} parent=1 // pred_region
      _
    $region145: #{dexterous_transformer_forward.1} parent=1 // pred_fallthru
      _
    // Predicated region
    $region146: #{dexterous_transformer_forward.1} parent=1 // pred_check
      _
    $region147: #{dexterous_transformer_forward.1} parent=1 // pred_check_branch
      %479 = sbr.rel (0) target = $region149
    $region148: #{dexterous_transformer_forward.1} parent=1 // pred_region
      %481 = vsyncadd [#allocation45], 0
      %s483 = sshll.u32 %s73, 4
      %s484 = int_to_ptr.hbm [resolvable:$true] %s483
      %s485 = sshll.u32 [#allocation44], 4
      %s486 = int_to_ptr.vmem [resolvable:$true] %s485
      %488 = dma.hbm_to_vmem [thread:$0]  %s484, 16, %s486, [#allocation45]
    $region149: #{dexterous_transformer_forward.1} parent=1 // pred_fallthru
      _
    // Predicated region
    $region150: #{dexterous_transformer_forward.1} parent=1 // pred_check
      _
    $region151: #{dexterous_transformer_forward.1} parent=1 // pred_check_branch
      %490 = sbr.rel (0) target = $region153
    $region152: #{dexterous_transformer_forward.1} parent=1 // pred_region
      %492 = vsyncadd [#allocation45], 0
      %s493 = sshll.u32 %s75, 4
      %s494 = int_to_ptr.hbm [resolvable:$true] %s493
      %s495 = sshll.u32 [#allocation46], 4
      %s496 = int_to_ptr.vmem [resolvable:$true] %s495
      %501 = dma.hbm_to_vmem [thread:$0]  %s494, 384, %s496, [#allocation45], 128, 128, 8
    $region153: #{dexterous_transformer_forward.1} parent=1 // pred_fallthru
      _
    // Predicated region
    $region154: #{dexterous_transformer_forward.1} parent=1 // pred_check
      _
    $region155: #{dexterous_transformer_forward.1} parent=1 // pred_check_branch
      %503 = sbr.rel (0) target = $region157
    $region156: #{dexterous_transformer_forward.1} parent=1 // pred_region
      %505 = vsyncadd [#allocation48], 0
      %s507 = sshll.u32 %s77, 4
      %s508 = int_to_ptr.hbm [resolvable:$true] %s507
      %s509 = sshll.u32 [#allocation47], 4
      %s510 = int_to_ptr.vmem [resolvable:$true] %s509
      %512 = dma.hbm_to_vmem [thread:$0]  %s508, 128, %s510, [#allocation48]
    $region157: #{dexterous_transformer_forward.1} parent=1 // pred_fallthru
      _
    // Predicated region
    $region158: #{dexterous_transformer_forward.1} parent=1 // pred_check
      _
    $region159: #{dexterous_transformer_forward.1} parent=1 // pred_check_branch
      %514 = sbr.rel (0) target = $region161
    $region160: #{dexterous_transformer_forward.1} parent=1 // pred_region
      %516 = vsyncadd [#allocation48], 0
      %s517 = sshll.u32 %s79, 4
      %s518 = int_to_ptr.hbm [resolvable:$true] %s517
      %s519 = sshll.u32 [#allocation49], 4
      %s520 = int_to_ptr.vmem [resolvable:$true] %s519
      %525 = dma.hbm_to_vmem [thread:$0]  %s518, 512, %s520, [#allocation48], 128, 128, 8
    $region161: #{dexterous_transformer_forward.1} parent=1 // pred_fallthru
      _
    // Predicated region
    $region162: #{dexterous_transformer_forward.1} parent=1 // pred_check
      _
    $region163: #{dexterous_transformer_forward.1} parent=1 // pred_check_branch
      %527 = sbr.rel (0) target = $region165
    $region164: #{dexterous_transformer_forward.1} parent=1 // pred_region
      _
    $region165: #{dexterous_transformer_forward.1} parent=1 // pred_fallthru
      _
    // Predicated region
    $region166: #{dexterous_transformer_forward.1} parent=1 // pred_check
      _
    $region167: #{dexterous_transformer_forward.1} parent=1 // pred_check_branch
      %529 = sbr.rel (0) target = $region169
    $region168: #{dexterous_transformer_forward.1} parent=1 // pred_region
      %531 = vsyncadd [#allocation51], 0
      %s532 = sshll.u32 %s83, 4
      %s533 = int_to_ptr.hbm [resolvable:$true] %s532
      %s534 = sshll.u32 [#allocation50], 4
      %s535 = int_to_ptr.vmem [resolvable:$true] %s534
      %540 = dma.hbm_to_vmem [thread:$0]  %s533, 384, %s535, [#allocation51], 128, 128, 8
    $region169: #{dexterous_transformer_forward.1} parent=1 // pred_fallthru
      _
    // Predicated region
    $region170: #{dexterous_transformer_forward.1} parent=1 // pred_check
      _
    $region171: #{dexterous_transformer_forward.1} parent=1 // pred_check_branch
      %542 = sbr.rel (0) target = $region173
    $region172: #{dexterous_transformer_forward.1} parent=1 // pred_region
      %544 = vsyncadd [#allocation51], 0
      %s545 = sshll.u32 %s85, 4
      %s546 = int_to_ptr.hbm [resolvable:$true] %s545
      %s547 = sshll.u32 [#allocation52], 4
      %s548 = int_to_ptr.vmem [resolvable:$true] %s547
      %553 = dma.hbm_to_vmem [thread:$0]  %s546, 512, %s548, [#allocation51], 128, 128, 8
    $region173: #{dexterous_transformer_forward.1} parent=1 // pred_fallthru
      _
    // Predicated region
    $region174: #{dexterous_transformer_forward.1} parent=1 // pred_check
      _
    $region175: #{dexterous_transformer_forward.1} parent=1 // pred_check_branch
      %555 = sbr.rel (0) target = $region177
    $region176: #{dexterous_transformer_forward.1} parent=1 // pred_region
      _
    $region177: #{dexterous_transformer_forward.1} parent=1 // pred_fallthru
      _
    // Predicated region
    $region178: #{dexterous_transformer_forward.1} parent=1 // pred_check
      _
    $region179: #{dexterous_transformer_forward.1} parent=1 // pred_check_branch
      %557 = sbr.rel (0) target = $region181
    $region180: #{dexterous_transformer_forward.1} parent=1 // pred_region
      %559 = vsyncadd [#allocation54], 0
      %s560 = sshll.u32 %s89, 4
      %s561 = int_to_ptr.hbm [resolvable:$true] %s560
      %s562 = sshll.u32 [#allocation53], 4
      %s563 = int_to_ptr.vmem [resolvable:$true] %s562
      %568 = dma.hbm_to_vmem [thread:$0]  %s561, 512, %s563, [#allocation54], 128, 128, 8
    $region181: #{dexterous_transformer_forward.1} parent=1 // pred_fallthru
      _
    // Predicated region
    $region182: #{dexterous_transformer_forward.1} parent=1 // pred_check
      _
    $region183: #{dexterous_transformer_forward.1} parent=1 // pred_check_branch
      %570 = sbr.rel (0) target = $region185
    $region184: #{dexterous_transformer_forward.1} parent=1 // pred_region
      %572 = vsyncadd [#allocation54], 0
      %s573 = sshll.u32 %s91, 4
      %s574 = int_to_ptr.hbm [resolvable:$true] %s573
      %s575 = sshll.u32 [#allocation55], 4
      %s576 = int_to_ptr.vmem [resolvable:$true] %s575
      %581 = dma.hbm_to_vmem [thread:$0]  %s574, 512, %s576, [#allocation54], 128, 128, 8
    $region185: #{dexterous_transformer_forward.1} parent=1 // pred_fallthru
      _
    // Predicated region
    $region186: #{dexterous_transformer_forward.1} parent=1 // pred_check
      _
    $region187: #{dexterous_transformer_forward.1} parent=1 // pred_check_branch
      %583 = sbr.rel (0) target = $region189
    $region188: #{dexterous_transformer_forward.1} parent=1 // pred_region
      %585 = dma.done [#allocation3], 32
    $region189: #{dexterous_transformer_forward.1} parent=1 // pred_fallthru
      _
    // Predicated region
    $region190: #{dexterous_transformer_forward.1} parent=1 // pred_check
      _
    $region191: #{dexterous_transformer_forward.1} parent=1 // pred_check_branch
      %587 = sbr.rel (0) target = $region193
    $region192: #{dexterous_transformer_forward.1} parent=1 // pred_region
      %589 = dma.done [#allocation6], 32
    $region193: #{dexterous_transformer_forward.1} parent=1 // pred_fallthru
      _
    // Predicated region
    $region194: #{dexterous_transformer_forward.1} parent=1 // pred_check
      _
    $region195: #{dexterous_transformer_forward.1} parent=1 // pred_check_branch
      %591 = sbr.rel (0) target = $region197
    $region196: #{dexterous_transformer_forward.1} parent=1 // pred_region
      %593 = dma.done [#allocation6], 32
    $region197: #{dexterous_transformer_forward.1} parent=1 // pred_fallthru
      _
    // Predicated region
    $region198: #{dexterous_transformer_forward.1} parent=1 // pred_check
      _
    $region199: #{dexterous_transformer_forward.1} parent=1 // pred_check_branch
      %595 = sbr.rel (0) target = $region201
    $region200: #{dexterous_transformer_forward.1} parent=1 // pred_region
      %597 = dma.done [#allocation9], 32
    $region201: #{dexterous_transformer_forward.1} parent=1 // pred_fallthru
      _
    // Predicated region
    $region202: #{dexterous_transformer_forward.1} parent=1 // pred_check
      _
    $region203: #{dexterous_transformer_forward.1} parent=1 // pred_check_branch
      %599 = sbr.rel (0) target = $region205
    $region204: #{dexterous_transformer_forward.1} parent=1 // pred_region
      %601 = dma.done [#allocation9], 32
    $region205: #{dexterous_transformer_forward.1} parent=1 // pred_fallthru
      _
    // Predicated region
    $region206: #{dexterous_transformer_forward.1} parent=1 // pred_check
      _
    $region207: #{dexterous_transformer_forward.1} parent=1 // pred_check_branch
      %603 = sbr.rel (0) target = $region209
    $region208: #{dexterous_transformer_forward.1} parent=1 // pred_region
      %605 = dma.done [#allocation12], 32
    $region209: #{dexterous_transformer_forward.1} parent=1 // pred_fallthru
      _
    // Predicated region
    $region210: #{dexterous_transformer_forward.1} parent=1 // pred_check
      _
    $region211: #{dexterous_transformer_forward.1} parent=1 // pred_check_branch
      %607 = sbr.rel (0) target = $region213
    $region212: #{dexterous_transformer_forward.1} parent=1 // pred_region
      %609 = dma.done [#allocation12], 32
    $region213: #{dexterous_transformer_forward.1} parent=1 // pred_fallthru
      _
    // Predicated region
    $region214: #{dexterous_transformer_forward.1} parent=1 // pred_check
      _
    $region215: #{dexterous_transformer_forward.1} parent=1 // pred_check_branch
      %611 = sbr.rel (0) target = $region217
    $region216: #{dexterous_transformer_forward.1} parent=1 // pred_region
      %613 = dma.done [#allocation15], 32
    $region217: #{dexterous_transformer_forward.1} parent=1 // pred_fallthru
      _
    // Predicated region
    $region218: #{dexterous_transformer_forward.1} parent=1 // pred_check
      _
    $region219: #{dexterous_transformer_forward.1} parent=1 // pred_check_branch
      %615 = sbr.rel (0) target = $region221
    $region220: #{dexterous_transformer_forward.1} parent=1 // pred_region
      %617 = dma.done [#allocation15], 32
    $region221: #{dexterous_transformer_forward.1} parent=1 // pred_fallthru
      _
    // Predicated region
    $region222: #{dexterous_transformer_forward.1} parent=1 // pred_check
      _
    $region223: #{dexterous_transformer_forward.1} parent=1 // pred_check_branch
      %619 = sbr.rel (0) target = $region225
    $region224: #{dexterous_transformer_forward.1} parent=1 // pred_region
      %621 = dma.done [#allocation18], 32
    $region225: #{dexterous_transformer_forward.1} parent=1 // pred_fallthru
      _
    // Predicated region
    $region226: #{dexterous_transformer_forward.1} parent=1 // pred_check
      _
    $region227: #{dexterous_transformer_forward.1} parent=1 // pred_check_branch
      %623 = sbr.rel (0) target = $region229
    $region228: #{dexterous_transformer_forward.1} parent=1 // pred_region
      %625 = dma.done [#allocation18], 32
    $region229: #{dexterous_transformer_forward.1} parent=1 // pred_fallthru
      _
    // Predicated region
    $region230: #{dexterous_transformer_forward.1} parent=1 // pred_check
      _
    $region231: #{dexterous_transformer_forward.1} parent=1 // pred_check_branch
      %627 = sbr.rel (0) target = $region233
    $region232: #{dexterous_transformer_forward.1} parent=1 // pred_region
      %629 = dma.done [#allocation21], 32
    $region233: #{dexterous_transformer_forward.1} parent=1 // pred_fallthru
      _
    // Predicated region
    $region234: #{dexterous_transformer_forward.1} parent=1 // pred_check
      _
    $region235: #{dexterous_transformer_forward.1} parent=1 // pred_check_branch
      %631 = sbr.rel (0) target = $region237
    $region236: #{dexterous_transformer_forward.1} parent=1 // pred_region
      %633 = dma.done [#allocation21], 32
    $region237: #{dexterous_transformer_forward.1} parent=1 // pred_fallthru
      _
    // Predicated region
    $region238: #{dexterous_transformer_forward.1} parent=1 // pred_check
      _
    $region239: #{dexterous_transformer_forward.1} parent=1 // pred_check_branch
      %635 = sbr.rel (0) target = $region241
    $region240: #{dexterous_transformer_forward.1} parent=1 // pred_region
      %637 = dma.done [#allocation24], 32
    $region241: #{dexterous_transformer_forward.1} parent=1 // pred_fallthru
      _
    // Predicated region
    $region242: #{dexterous_transformer_forward.1} parent=1 // pred_check
      _
    $region243: #{dexterous_transformer_forward.1} parent=1 // pred_check_branch
      %639 = sbr.rel (0) target = $region245
    $region244: #{dexterous_transformer_forward.1} parent=1 // pred_region
      %641 = dma.done [#allocation24], 1024
    $region245: #{dexterous_transformer_forward.1} parent=1 // pred_fallthru
      _
    // Predicated region
    $region246: #{dexterous_transformer_forward.1} parent=1 // pred_check
      _
    $region247: #{dexterous_transformer_forward.1} parent=1 // pred_check_branch
      %643 = sbr.rel (0) target = $region249
    $region248: #{dexterous_transformer_forward.1} parent=1 // pred_region
      %645 = dma.done [#allocation27], 32
    $region249: #{dexterous_transformer_forward.1} parent=1 // pred_fallthru
      _
    // Predicated region
    $region250: #{dexterous_transformer_forward.1} parent=1 // pred_check
      _
    $region251: #{dexterous_transformer_forward.1} parent=1 // pred_check_branch
      %647 = sbr.rel (0) target = $region253
    $region252: #{dexterous_transformer_forward.1} parent=1 // pred_region
      %649 = dma.done [#allocation27], 1024
    $region253: #{dexterous_transformer_forward.1} parent=1 // pred_fallthru
      _
    // Predicated region
    $region254: #{dexterous_transformer_forward.1} parent=1 // pred_check
      _
    $region255: #{dexterous_transformer_forward.1} parent=1 // pred_check_branch
      %651 = sbr.rel (0) target = $region257
    $region256: #{dexterous_transformer_forward.1} parent=1 // pred_region
      %653 = dma.done [#allocation30], 32
    $region257: #{dexterous_transformer_forward.1} parent=1 // pred_fallthru
      _
    // Predicated region
    $region258: #{dexterous_transformer_forward.1} parent=1 // pred_check
      _
    $region259: #{dexterous_transformer_forward.1} parent=1 // pred_check_branch
      %655 = sbr.rel (0) target = $region261
    $region260: #{dexterous_transformer_forward.1} parent=1 // pred_region
      %657 = dma.done [#allocation30], 32
    $region261: #{dexterous_transformer_forward.1} parent=1 // pred_fallthru
      _
    // Predicated region
    $region262: #{dexterous_transformer_forward.1} parent=1 // pred_check
      _
    $region263: #{dexterous_transformer_forward.1} parent=1 // pred_check_branch
      %659 = sbr.rel (0) target = $region265
    $region264: #{dexterous_transformer_forward.1} parent=1 // pred_region
      %661 = dma.done [#allocation33], 32
    $region265: #{dexterous_transformer_forward.1} parent=1 // pred_fallthru
      _
    // Predicated region
    $region266: #{dexterous_transformer_forward.1} parent=1 // pred_check
      _
    $region267: #{dexterous_transformer_forward.1} parent=1 // pred_check_branch
      %663 = sbr.rel (0) target = $region269
    $region268: #{dexterous_transformer_forward.1} parent=1 // pred_region
      %665 = dma.done [#allocation33], 1024
    $region269: #{dexterous_transformer_forward.1} parent=1 // pred_fallthru
      _
    // Predicated region
    $region270: #{dexterous_transformer_forward.1} parent=1 // pred_check
      _
    $region271: #{dexterous_transformer_forward.1} parent=1 // pred_check_branch
      %667 = sbr.rel (0) target = $region273
    $region272: #{dexterous_transformer_forward.1} parent=1 // pred_region
      %669 = dma.done [#allocation36], 32
    $region273: #{dexterous_transformer_forward.1} parent=1 // pred_fallthru
      _
    // Predicated region
    $region274: #{dexterous_transformer_forward.1} parent=1 // pred_check
      _
    $region275: #{dexterous_transformer_forward.1} parent=1 // pred_check_branch
      %671 = sbr.rel (0) target = $region277
    $region276: #{dexterous_transformer_forward.1} parent=1 // pred_region
      %673 = dma.done [#allocation36], 32
    $region277: #{dexterous_transformer_forward.1} parent=1 // pred_fallthru
      _
    // Predicated region
    $region278: #{dexterous_transformer_forward.1} parent=1 // pred_check
      _
    $region279: #{dexterous_transformer_forward.1} parent=1 // pred_check_branch
      %675 = sbr.rel (0) target = $region281
    $region280: #{dexterous_transformer_forward.1} parent=1 // pred_region
      %677 = dma.done [#allocation39], 16
    $region281: #{dexterous_transformer_forward.1} parent=1 // pred_fallthru
      _
    // Predicated region
    $region282: #{dexterous_transformer_forward.1} parent=1 // pred_check
      _
    $region283: #{dexterous_transformer_forward.1} parent=1 // pred_check_branch
      %679 = sbr.rel (0) target = $region285
    $region284: #{dexterous_transformer_forward.1} parent=1 // pred_region
      %681 = dma.done [#allocation39], 16
    $region285: #{dexterous_transformer_forward.1} parent=1 // pred_fallthru
      _
    // Predicated region
    $region286: #{dexterous_transformer_forward.1} parent=1 // pred_check
      _
    $region287: #{dexterous_transformer_forward.1} parent=1 // pred_check_branch
      %683 = sbr.rel (0) target = $region289
    $region288: #{dexterous_transformer_forward.1} parent=1 // pred_region
      %685 = dma.done [#allocation42], 16
    $region289: #{dexterous_transformer_forward.1} parent=1 // pred_fallthru
      _
    // Predicated region
    $region290: #{dexterous_transformer_forward.1} parent=1 // pred_check
      _
    $region291: #{dexterous_transformer_forward.1} parent=1 // pred_check_branch
      %687 = sbr.rel (0) target = $region293
    $region292: #{dexterous_transformer_forward.1} parent=1 // pred_region
      %689 = dma.done [#allocation42], 16
    $region293: #{dexterous_transformer_forward.1} parent=1 // pred_fallthru
      _
    // Predicated region
    $region294: #{dexterous_transformer_forward.1} parent=1 // pred_check
      _
    $region295: #{dexterous_transformer_forward.1} parent=1 // pred_check_branch
      %691 = sbr.rel (0) target = $region297
    $region296: #{dexterous_transformer_forward.1} parent=1 // pred_region
      %693 = dma.done [#allocation45], 16
    $region297: #{dexterous_transformer_forward.1} parent=1 // pred_fallthru
      _
    // Predicated region
    $region298: #{dexterous_transformer_forward.1} parent=1 // pred_check
      _
    $region299: #{dexterous_transformer_forward.1} parent=1 // pred_check_branch
      %695 = sbr.rel (0) target = $region301
    $region300: #{dexterous_transformer_forward.1} parent=1 // pred_region
      %697 = dma.done [#allocation45], 384
    $region301: #{dexterous_transformer_forward.1} parent=1 // pred_fallthru
      _
    // Predicated region
    $region302: #{dexterous_transformer_forward.1} parent=1 // pred_check
      _
    $region303: #{dexterous_transformer_forward.1} parent=1 // pred_check_branch
      %699 = sbr.rel (0) target = $region305
    $region304: #{dexterous_transformer_forward.1} parent=1 // pred_region
      %701 = dma.done [#allocation48], 128
    $region305: #{dexterous_transformer_forward.1} parent=1 // pred_fallthru
      _
    // Predicated region
    $region306: #{dexterous_transformer_forward.1} parent=1 // pred_check
      _
    $region307: #{dexterous_transformer_forward.1} parent=1 // pred_check_branch
      %703 = sbr.rel (0) target = $region309
    $region308: #{dexterous_transformer_forward.1} parent=1 // pred_region
      %705 = dma.done [#allocation48], 512
    $region309: #{dexterous_transformer_forward.1} parent=1 // pred_fallthru
      _
    // Predicated region
    $region310: #{dexterous_transformer_forward.1} parent=1 // pred_check
      _
    $region311: #{dexterous_transformer_forward.1} parent=1 // pred_check_branch
      %707 = sbr.rel (0) target = $region313
    $region312: #{dexterous_transformer_forward.1} parent=1 // pred_region
      %709 = dma.done [#allocation51], 384
    $region313: #{dexterous_transformer_forward.1} parent=1 // pred_fallthru
      _
    // Predicated region
    $region314: #{dexterous_transformer_forward.1} parent=1 // pred_check
      _
    $region315: #{dexterous_transformer_forward.1} parent=1 // pred_check_branch
      %711 = sbr.rel (0) target = $region317
    $region316: #{dexterous_transformer_forward.1} parent=1 // pred_region
      %713 = dma.done [#allocation51], 512
    $region317: #{dexterous_transformer_forward.1} parent=1 // pred_fallthru
      _
    // Predicated region
    $region318: #{dexterous_transformer_forward.1} parent=1 // pred_check
      _
    $region319: #{dexterous_transformer_forward.1} parent=1 // pred_check_branch
      %715 = sbr.rel (0) target = $region321
    $region320: #{dexterous_transformer_forward.1} parent=1 // pred_region
      %717 = dma.done [#allocation54], 512
    $region321: #{dexterous_transformer_forward.1} parent=1 // pred_fallthru
      _
    // Predicated region
    $region322: #{dexterous_transformer_forward.1} parent=1 // pred_check
      _
    $region323: #{dexterous_transformer_forward.1} parent=1 // pred_check_branch
      %719 = sbr.rel (0) target = $region325
    $region324: #{dexterous_transformer_forward.1} parent=1 // pred_region
      %721 = dma.done [#allocation54], 512
    $region325: #{dexterous_transformer_forward.1} parent=1 // pred_fallthru
      _
    %v722 = vld [vmem:[%s1] sm:$0x3f]
    %v723 = vld [vmem:[%s87] sm:$0xff]
    %v724 = vld [vmem:[%s87 + $0x8] sm:$0xff]
    %v725 = vld [vmem:[%s87 + $0x10] sm:$0xff]
    %v726 = vld [vmem:[#allocation50] sm:$0xff]
    %v727 = vld [vmem:[#allocation50 + $0x8] sm:$0xff]
    %v728 = vld [vmem:[#allocation50 + $0x10] sm:$0xff]
    %v729 = vld [vmem:[#allocation46] sm:$0xff]
    %v730 = vld [vmem:[#allocation46 + $0x8] sm:$0xff]
    %v731 = vld [vmem:[#allocation46 + $0x10] sm:$0xff]
    %v732 = vld [vmem:[#allocation47] sm:$0x3f]
    %v733 = vld [vmem:[#allocation2] sm:$0x1]
    %v734 = vld [vmem:[#allocation5] sm:$0x1]
    %vm735 = vcmask 259072
    %v736 = vsel %vm735, %v722, 0.0
    %737 = vadd.xlane.f32.xlu0 %v736
    %v738 = vpop.xlane.xlu0 %737
    %v739 = vrcp.pop 32.0
    %v740 = vmul.f32 32.0, %v739
    %v741 = vsub.f32 1.0, %v740
    %v742 = vmul.f32 %v739, %v741
    %v743 = vadd.f32 %v739, %v742
    %vm744 = vweird.f32 %v739
    %v745 = vsel %vm744, %v739, %v743
    %v746 = vmul.f32 %v738, %v745
    %v747 = vsub.f32 %v722, %v746
    %v748 = vmul.f32 %v747, %v747
    %v749 = vsel %vm735, %v748, 0.0
    %750 = vadd.xlane.f32.xlu0 %v749
    %v751 = vpop.xlane.xlu0 %750
    %v752 = vmul.f32 %v751, %v745
    %v753 = vadd.f32 %v752, 1e-05
    %v754 = vrsqrt.pop %v753
    %v755 = vmul.f32 %v754, %v753
    %v756 = vmul.f32 %v755, %v754
    %v757 = vmul.f32 0.5, %v756
    %v758 = vsub.f32 1.5, %v757
    %v759 = vmul.f32 %v754, %v758
    %vm760 = vweird.f32 %v753
    %vm761 = vweird.f32 %v754
    %vm762 = vmor %vm760, %vm761
    %v763 = vsel %vm762, %v754, %v759
    %v764 = vmul.f32 %v747, %v763
    %v766 = vperm.slane %v733, 0
    %v768 = vmul.f32 %v764, %v766
    %v770 = vperm.slane %v734, 0
    %v772 = vadd.f32 %v768, %v770
    %v773 = vld [vmem:[%s7] sm:$0xff]
    %v774 = vld [vmem:[%s7 + $0x8] sm:$0xff]
    %v775 = vld [vmem:[%s7 + $0x10] sm:$0xff]
    %v776 = vld [vmem:[%s7 + $0x18] sm:$0xff]
    %v777 = vld [vmem:[#allocation7] sm:$0x1]
    %v778 = vld [vmem:[%s11] sm:$0xff]
    %v779 = vld [vmem:[%s11 + $0x8] sm:$0xff]
    %v780 = vld [vmem:[%s11 + $0x10] sm:$0xff]
    %v781 = vld [vmem:[%s11 + $0x18] sm:$0xff]
    %v782 = vld [vmem:[#allocation8] sm:$0x1]
    %v784 = vperm.slane %v777, 0
    %vm786 = vcmask 261120
    %v788 = vsel %vm786, %v772, 0
    %790 = vmatpush.msra.mxu0 0.0
    %791 = vmatpush.msra.mxu0 0.0
    %792 = vmatpush.msra.mxu0 0.0
    %793 = vmatpush.msra.mxu0 0.0
    %794 = vmatpush.msra.mxu0 0.0
    %795 = vmatpush.msra.mxu0 0.0
    %796 = vmatpush.msra.mxu0 0.0
    %797 = vmatpush.msra.mxu0 0.0
    %798 = vmatpush.msra.mxu0 0.0
    %799 = vmatpush.msra.mxu0 0.0
    %800 = vmatpush.msra.mxu0 0.0
    %801 = vmatpush.msra.mxu0 0.0
    %802 = vmatpush.msra.mxu0 %v776
    %803 = vmatpush.msra.mxu0 %v775
    %804 = vmatpush.msra.mxu0 %v774
    %805 = vmatpush.msra.mxu0 %v773
    %806 = vmatmul.f32.gmra.mxu0 %v788
    %v807 = vpop.f32.mrf.mxu0
    %v808 = vadd.f32 %v784, %v807
    %809 = vdwg.mxu0
    %vm810 = vcmask 48128
    %v812 = vsel %vm810, %v729, 0
    %v815 = vsel %vm810, %v730, 0
    %v818 = vsel %vm810, %v731, 0
    %vm820 = vcmask 1045504
    %v822 = vsel %vm820, %v808, 0
    %824 = vmatpush.msra.mxu0 0.0
    %825 = vmatpush.msra.mxu0 0.0
    %826 = vmatpush.msra.mxu0 0.0
    %827 = vmatpush.msra.mxu0 0.0
    %828 = vmatpush.msra.mxu0 0.0
    %829 = vmatpush.msra.mxu0 0.0
    %830 = vmatpush.msra.mxu0 0.0
    %831 = vmatpush.msra.mxu0 0.0
    %832 = vmatpush.msra.mxu0 0.0
    %833 = vmatpush.msra.mxu0 0.0
    %834 = vmatpush.msra.mxu0 0.0
    %835 = vmatpush.msra.mxu0 0.0
    %836 = vmatpush.msra.mxu0 0.0
    %837 = vmatpush.msra.mxu0 0.0
    %838 = vmatpush.msra.mxu0 0.0
    %839 = vmatpush.msra.mxu0 %v822
    %840 = vmatmul.f32.gmra.mxu0 %v812
    %v841 = vpop.f32.mrf.mxu0
    %v842 = vadd.f32 0.0, %v841
    %843 = vmatmul.f32.gmra.mxu0 %v815
    %v844 = vpop.f32.mrf.mxu0
    %v845 = vadd.f32 0.0, %v844
    %846 = vmatmul.f32.gmra.mxu0 %v818
    %v847 = vpop.f32.mrf.mxu0
    %v848 = vadd.f32 0.0, %v847
    %849 = vdwg.mxu0
    %v850 = vmul.f32 %v842, %v726
    %v851 = vmul.f32 %v845, %v727
    %v852 = vmul.f32 %v848, %v728
    %853 = vrot.lane.b32.xlu0 %v808, 96
    %v854 = vpop.permute.xlu0 %853
    %v856 = vsel %vm786, %v850, 0
    %v859 = vsel %vm786, %v851, 0
    %v862 = vsel %vm786, %v852, 0
    %v864 = vsel %vm786, %v854, 0
    %866 = vmatpush.xpose.msra.mxu0 0.0
    %867 = vmatpush.xpose.msra.mxu0 0.0
    %868 = vmatpush.xpose.msra.mxu0 0.0
    %869 = vmatpush.xpose.msra.mxu0 0.0
    %870 = vmatpush.xpose.msra.mxu0 0.0
    %871 = vmatpush.xpose.msra.mxu0 0.0
    %872 = vmatpush.xpose.msra.mxu0 0.0
    %873 = vmatpush.xpose.msra.mxu0 0.0
    %874 = vmatpush.xpose.msra.mxu0 0.0
    %875 = vmatpush.xpose.msra.mxu0 0.0
    %876 = vmatpush.xpose.msra.mxu0 0.0
    %877 = vmatpush.xpose.msra.mxu0 0.0
    %878 = vmatpush.xpose.msra.mxu0 0.0
    %879 = vmatpush.xpose.msra.mxu0 0.0
    %880 = vmatpush.xpose.msra.mxu0 0.0
    %881 = vmatpush.xpose.msra.mxu0 %v864
    %882 = vmatmul.f32.gmra.mxu0 %v856
    %v883 = vpop.f32.mrf.mxu0
    %v884 = vadd.f32 0.0, %v883
    %885 = vmatmul.f32.gmra.mxu0 %v859
    %v886 = vpop.f32.mrf.mxu0
    %v887 = vadd.f32 0.0, %v886
    %888 = vmatmul.f32.gmra.mxu0 %v862
    %v889 = vpop.f32.mrf.mxu0
    %v890 = vadd.f32 0.0, %v889
    %891 = vdwg.mxu0
    %v892 = vmul.f32 %v884, 0.35355338
    %v893 = vmul.f32 %v887, 0.35355338
    %v894 = vmul.f32 %v890, 0.35355338
    %v895 = vadd.f32 %v892, %v723
    %v896 = vadd.f32 %v893, %v724
    %v897 = vadd.f32 %v894, %v725
    %v898 = vsel %vm810, %v895, -inf
    %899 = vmax.xlane.f32.xlu0 %v898
    %v900 = vpop.xlane.xlu0 %899
    %v901 = vsel %vm810, %v896, -inf
    %902 = vmax.xlane.f32.xlu0 %v901
    %v903 = vpop.xlane.xlu0 %902
    %v904 = vsel %vm810, %v897, -inf
    %905 = vmax.xlane.f32.xlu0 %v904
    %v906 = vpop.xlane.xlu0 %905
    %v907 = vsub.f32 %v895, %v900
    %v908 = vsub.f32 %v896, %v903
    %v909 = vsub.f32 %v897, %v906
    %v910 = vmul.f32 %v907, 1.442695
    %v911 = vpow.pop %v910
    %v912 = vmul.f32 %v908, 1.442695
    %v913 = vpow.pop %v912
    %v914 = vmul.f32 %v909, 1.442695
    %v915 = vpow.pop %v914
    %v916 = vsel %vm810, %v911, 0.0
    %917 = vadd.xlane.f32.xlu0 %v916
    %v918 = vpop.xlane.xlu0 %917
    %v919 = vsel %vm810, %v913, 0.0
    %920 = vadd.xlane.f32.xlu0 %v919
    %v921 = vpop.xlane.xlu0 %920
    %v922 = vsel %vm810, %v915, 0.0
    %923 = vadd.xlane.f32.xlu0 %v922
    %v924 = vpop.xlane.xlu0 %923
    %v925 = vrcp.pop %v918
    %v926 = vmul.f32 %v918, %v925
    %v927 = vsub.f32 1.0, %v926
    %v928 = vmul.f32 %v925, %v927
    %v929 = vadd.f32 %v925, %v928
    %vm930 = vweird.f32 %v918
    %vm931 = vweird.f32 %v925
    %vm932 = vmor %vm930, %vm931
    %v933 = vsel %vm932, %v925, %v929
    %v934 = vand.u32 2147483647, %v918
    %vm935 = vcmp.eq.f32.partialorder %v934, 8.507059e+37
    %v936 = vand.u32 %v918, 2147483648
    %v937 = vor.u32 1.1754944e-38, %v936
    %v938 = vsel %vm935, %v937, %v933
    %v939 = vmul.f32 %v911, %v938
    %v940 = vrcp.pop %v921
    %v941 = vmul.f32 %v921, %v940
    %v942 = vsub.f32 1.0, %v941
    %v943 = vmul.f32 %v940, %v942
    %v944 = vadd.f32 %v940, %v943
    %vm945 = vweird.f32 %v921
    %vm946 = vweird.f32 %v940
    %vm947 = vmor %vm945, %vm946
    %v948 = vsel %vm947, %v940, %v944
    %v949 = vand.u32 2147483647, %v921
    %vm950 = vcmp.eq.f32.partialorder %v949, 8.507059e+37
    %v951 = vand.u32 %v921, 2147483648
    %v952 = vor.u32 1.1754944e-38, %v951
    %v953 = vsel %vm950, %v952, %v948
    %v954 = vmul.f32 %v913, %v953
    %v955 = vrcp.pop %v924
    %v956 = vmul.f32 %v924, %v955
    %v957 = vsub.f32 1.0, %v956
    %v958 = vmul.f32 %v955, %v957
    %v959 = vadd.f32 %v955, %v958
    %vm960 = vweird.f32 %v924
    %vm961 = vweird.f32 %v955
    %vm962 = vmor %vm960, %vm961
    %v963 = vsel %vm962, %v955, %v959
    %v964 = vand.u32 2147483647, %v924
    %vm965 = vcmp.eq.f32.partialorder %v964, 8.507059e+37
    %v966 = vand.u32 %v924, 2147483648
    %v967 = vor.u32 1.1754944e-38, %v966
    %v968 = vsel %vm965, %v967, %v963
    %v969 = vmul.f32 %v915, %v968
    %970 = vrot.lane.b32.xlu0 %v808, 64
    %v971 = vpop.permute.xlu0 %970
    %v973 = vsel %vm810, %v939, 0
    %v976 = vsel %vm810, %v954, 0
    %v979 = vsel %vm810, %v969, 0
    %v981 = vsel %vm820, %v971, 0
    %983 = vmatpush.msra.mxu0 0.0
    %984 = vmatpush.msra.mxu0 0.0
    %985 = vmatpush.msra.mxu0 0.0
    %986 = vmatpush.msra.mxu0 0.0
    %987 = vmatpush.msra.mxu0 0.0
    %988 = vmatpush.msra.mxu0 0.0
    %989 = vmatpush.msra.mxu0 0.0
    %990 = vmatpush.msra.mxu0 0.0
    %991 = vmatpush.msra.mxu0 0.0
    %992 = vmatpush.msra.mxu0 0.0
    %993 = vmatpush.msra.mxu0 0.0
    %994 = vmatpush.msra.mxu0 0.0
    %995 = vmatpush.msra.mxu0 0.0
    %996 = vmatpush.msra.mxu0 0.0
    %997 = vmatpush.msra.mxu0 0.0
    %998 = vmatpush.msra.mxu0 %v981
    %999 = vmatmul.f32.gmra.mxu0 %v973
    %v1000 = vpop.f32.mrf.mxu0
    %v1001 = vadd.f32 0.0, %v1000
    %1002 = vmatmul.f32.gmra.mxu0 %v976
    %v1003 = vpop.f32.mrf.mxu0
    %v1004 = vadd.f32 0.0, %v1003
    %1005 = vmatmul.f32.gmra.mxu0 %v979
    %v1006 = vpop.f32.mrf.mxu0
    %v1007 = vadd.f32 0.0, %v1006
    %1008 = vdwg.mxu0
    %v1009 = vmul.f32 %v1001, %v726
    %v1010 = vmul.f32 %v1004, %v727
    %v1011 = vmul.f32 %v1007, %v728
    %vm1012 = vcmask 195584
    %v1014 = vsel %vm1012, %v732, 0
    %1016 = vmatpush.msra.mxu0 0.0
    %1017 = vmatpush.msra.mxu0 0.0
    %1018 = vmatpush.msra.mxu0 0.0
    %1019 = vmatpush.msra.mxu0 0.0
    %1020 = vmatpush.msra.mxu0 0.0
    %1021 = vmatpush.msra.mxu0 0.0
    %1022 = vmatpush.msra.mxu0 0.0
    %1023 = vmatpush.msra.mxu0 0.0
    %1024 = vmatpush.msra.mxu0 0.0
    %1025 = vmatpush.msra.mxu0 0.0
    %1026 = vmatpush.msra.mxu0 0.0
    %1027 = vmatpush.msra.mxu0 0.0
    %1028 = vmatpush.msra.mxu0 0.0
    %1029 = vmatpush.msra.mxu0 %v1011
    %1030 = vmatpush.msra.mxu0 %v1010
    %1031 = vmatpush.msra.mxu0 %v1009
    %1032 = vmatmul.f32.gmra.mxu0 %v1014
    %v1033 = vpop.f32.mrf.mxu0
    %v1034 = vadd.f32 0.0, %v1033
    %1035 = vdwg.mxu0
    %v1037 = vperm.slane %v782, 0
    %v1040 = vsel %vm786, %v1034, 0
    %1042 = vmatpush.msra.mxu0 0.0
    %1043 = vmatpush.msra.mxu0 0.0
    %1044 = vmatpush.msra.mxu0 0.0
    %1045 = vmatpush.msra.mxu0 0.0
    %1046 = vmatpush.msra.mxu0 0.0
    %1047 = vmatpush.msra.mxu0 0.0
    %1048 = vmatpush.msra.mxu0 0.0
    %1049 = vmatpush.msra.mxu0 0.0
    %1050 = vmatpush.msra.mxu0 0.0
    %1051 = vmatpush.msra.mxu0 0.0
    %1052 = vmatpush.msra.mxu0 0.0
    %1053 = vmatpush.msra.mxu0 0.0
    %1054 = vmatpush.msra.mxu0 %v781
    %1055 = vmatpush.msra.mxu0 %v780
    %1056 = vmatpush.msra.mxu0 %v779
    %1057 = vmatpush.msra.mxu0 %v778
    %1058 = vmatmul.f32.gmra.mxu0 %v1040
    %v1059 = vpop.f32.mrf.mxu0
    %v1060 = vadd.f32 %v1037, %v1059
    %1061 = vdwg.mxu0
    %v1062 = vadd.f32 %v722, %v1060
    %v1063 = vld [vmem:[#allocation10] sm:$0x1]
    %v1064 = vld [vmem:[#allocation11] sm:$0x1]
    %v1065 = vsel %vm735, %v1062, 0.0
    %1066 = vadd.xlane.f32.xlu0 %v1065
    %v1067 = vpop.xlane.xlu0 %1066
    %v1068 = vmul.f32 %v1067, %v745
    %v1069 = vsub.f32 %v1062, %v1068
    %v1070 = vmul.f32 %v1069, %v1069
    %v1071 = vsel %vm735, %v1070, 0.0
    %1072 = vadd.xlane.f32.xlu0 %v1071
    %v1073 = vpop.xlane.xlu0 %1072
    %v1074 = vmul.f32 %v1073, %v745
    %v1075 = vadd.f32 %v1074, 1e-05
    %v1076 = vrsqrt.pop %v1075
    %v1077 = vmul.f32 %v1076, %v1075
    %v1078 = vmul.f32 %v1077, %v1076
    %v1079 = vmul.f32 0.5, %v1078
    %v1080 = vsub.f32 1.5, %v1079
    %v1081 = vmul.f32 %v1076, %v1080
    %vm1082 = vweird.f32 %v1075
    %vm1083 = vweird.f32 %v1076
    %vm1084 = vmor %vm1082, %vm1083
    %v1085 = vsel %vm1084, %v1076, %v1081
    %v1086 = vmul.f32 %v1069, %v1085
    %v1088 = vperm.slane %v1063, 0
    %v1090 = vmul.f32 %v1086, %v1088
    %v1092 = vperm.slane %v1064, 0
    %v1094 = vadd.f32 %v1090, %v1092
    %v1095 = vld [vmem:[%s19] sm:$0xff]
    %v1096 = vld [vmem:[%s19 + $0x8] sm:$0xff]
    %v1097 = vld [vmem:[%s19 + $0x10] sm:$0xff]
    %v1098 = vld [vmem:[%s19 + $0x18] sm:$0xff]
    %v1099 = vld [vmem:[#allocation13] sm:$0x1]
    %v1100 = vld [vmem:[%s23] sm:$0xff]
    %v1101 = vld [vmem:[%s23 + $0x8] sm:$0xff]
    %v1102 = vld [vmem:[%s23 + $0x10] sm:$0xff]
    %v1103 = vld [vmem:[%s23 + $0x18] sm:$0xff]
    %v1104 = vld [vmem:[%s23 + $0x20] sm:$0xff]
    %v1105 = vld [vmem:[%s23 + $0x28] sm:$0xff]
    %v1106 = vld [vmem:[%s23 + $0x30] sm:$0xff]
    %v1107 = vld [vmem:[%s23 + $0x38] sm:$0xff]
    %v1108 = vld [vmem:[#allocation14] sm:$0x1]
    %v1110 = vperm.slane %v1099, 0
    %v1113 = vsel %vm786, %v1094, 0
    %1115 = vmatpush.msra.mxu0 0.0
    %1116 = vmatpush.msra.mxu0 0.0
    %1117 = vmatpush.msra.mxu0 0.0
    %1118 = vmatpush.msra.mxu0 0.0
    %1119 = vmatpush.msra.mxu0 0.0
    %1120 = vmatpush.msra.mxu0 0.0
    %1121 = vmatpush.msra.mxu0 0.0
    %1122 = vmatpush.msra.mxu0 0.0
    %1123 = vmatpush.msra.mxu0 0.0
    %1124 = vmatpush.msra.mxu0 0.0
    %1125 = vmatpush.msra.mxu0 0.0
    %1126 = vmatpush.msra.mxu0 0.0
    %1127 = vmatpush.msra.mxu0 %v1098
    %1128 = vmatpush.msra.mxu0 %v1097
    %1129 = vmatpush.msra.mxu0 %v1096
    %1130 = vmatpush.msra.mxu0 %v1095
    %1131 = vmatmul.f32.gmra.mxu0 %v1113
    %v1132 = vpop.f32.mrf.mxu0
    %v1133 = vadd.f32 %v1110, %v1132
    %1134 = vdwg.mxu0
    %v1135 = vmax.f32 %v1133, 0.0
    %v1137 = vperm.slane %v1108, 0
    %vm1139 = vcmask 523264
    %v1141 = vsel %vm1139, %v1135, 0
    %1143 = vmatpush.msra.mxu0 0.0
    %1144 = vmatpush.msra.mxu0 0.0
    %1145 = vmatpush.msra.mxu0 0.0
    %1146 = vmatpush.msra.mxu0 0.0
    %1147 = vmatpush.msra.mxu0 0.0
    %1148 = vmatpush.msra.mxu0 0.0
    %1149 = vmatpush.msra.mxu0 0.0
    %1150 = vmatpush.msra.mxu0 0.0
    %1151 = vmatpush.msra.mxu0 %v1107
    %1152 = vmatpush.msra.mxu0 %v1106
    %1153 = vmatpush.msra.mxu0 %v1105
    %1154 = vmatpush.msra.mxu0 %v1104
    %1155 = vmatpush.msra.mxu0 %v1103
    %1156 = vmatpush.msra.mxu0 %v1102
    %1157 = vmatpush.msra.mxu0 %v1101
    %1158 = vmatpush.msra.mxu0 %v1100
    %1159 = vmatmul.f32.gmra.mxu0 %v1141
    %v1160 = vpop.f32.mrf.mxu0
    %v1161 = vadd.f32 %v1137, %v1160
    %1162 = vdwg.mxu0
    %v1163 = vadd.f32 %v1062, %v1161
    %s1164 = scalar_lea.vmem [#allocation2], 1
    %v1165 = vld [vmem:[%s1164] sm:$0x1]
    %s1166 = scalar_lea.vmem [#allocation5], 1
    %v1167 = vld [vmem:[%s1166] sm:$0x1]
    %v1168 = vsel %vm735, %v1163, 0.0
    %1169 = vadd.xlane.f32.xlu0 %v1168
    %v1170 = vpop.xlane.xlu0 %1169
    %v1171 = vmul.f32 %v1170, %v745
    %v1172 = vsub.f32 %v1163, %v1171
    %v1173 = vmul.f32 %v1172, %v1172
    %v1174 = vsel %vm735, %v1173, 0.0
    %1175 = vadd.xlane.f32.xlu0 %v1174
    %v1176 = vpop.xlane.xlu0 %1175
    %v1177 = vmul.f32 %v1176, %v745
    %v1178 = vadd.f32 %v1177, 1e-05
    %v1179 = vrsqrt.pop %v1178
    %v1180 = vmul.f32 %v1179, %v1178
    %v1181 = vmul.f32 %v1180, %v1179
    %v1182 = vmul.f32 0.5, %v1181
    %v1183 = vsub.f32 1.5, %v1182
    %v1184 = vmul.f32 %v1179, %v1183
    %vm1185 = vweird.f32 %v1178
    %vm1186 = vweird.f32 %v1179
    %vm1187 = vmor %vm1185, %vm1186
    %v1188 = vsel %vm1187, %v1179, %v1184
    %v1189 = vmul.f32 %v1172, %v1188
    %v1191 = vperm.slane %v1165, 0
    %v1193 = vmul.f32 %v1189, %v1191
    %v1195 = vperm.slane %v1167, 0
    %v1197 = vadd.f32 %v1193, %v1195
    %s1198 = scalar_lea.vmem %s7, 32
    %v1199 = vld [vmem:[%s1198] sm:$0xff]
    %v1200 = vld [vmem:[%s1198 + $0x8] sm:$0xff]
    %v1201 = vld [vmem:[%s1198 + $0x10] sm:$0xff]
    %v1202 = vld [vmem:[%s1198 + $0x18] sm:$0xff]
    %s1203 = scalar_lea.vmem [#allocation7], 1
    %v1204 = vld [vmem:[%s1203] sm:$0x1]
    %s1205 = scalar_lea.vmem %s11, 32
    %v1206 = vld [vmem:[%s1205] sm:$0xff]
    %v1207 = vld [vmem:[%s1205 + $0x8] sm:$0xff]
    %v1208 = vld [vmem:[%s1205 + $0x10] sm:$0xff]
    %v1209 = vld [vmem:[%s1205 + $0x18] sm:$0xff]
    %s1210 = scalar_lea.vmem [#allocation8], 1
    %v1211 = vld [vmem:[%s1210] sm:$0x1]
    %v1213 = vperm.slane %v1204, 0
    %v1216 = vsel %vm786, %v1197, 0
    %1218 = vmatpush.msra.mxu0 0.0
    %1219 = vmatpush.msra.mxu0 0.0
    %1220 = vmatpush.msra.mxu0 0.0
    %1221 = vmatpush.msra.mxu0 0.0
    %1222 = vmatpush.msra.mxu0 0.0
    %1223 = vmatpush.msra.mxu0 0.0
    %1224 = vmatpush.msra.mxu0 0.0
    %1225 = vmatpush.msra.mxu0 0.0
    %1226 = vmatpush.msra.mxu0 0.0
    %1227 = vmatpush.msra.mxu0 0.0
    %1228 = vmatpush.msra.mxu0 0.0
    %1229 = vmatpush.msra.mxu0 0.0
    %1230 = vmatpush.msra.mxu0 %v1202
    %1231 = vmatpush.msra.mxu0 %v1201
    %1232 = vmatpush.msra.mxu0 %v1200
    %1233 = vmatpush.msra.mxu0 %v1199
    %1234 = vmatmul.f32.gmra.mxu0 %v1216
    %v1235 = vpop.f32.mrf.mxu0
    %v1236 = vadd.f32 %v1213, %v1235
    %1237 = vdwg.mxu0
    %v1239 = vsel %vm820, %v1236, 0
    %1241 = vmatpush.msra.mxu0 0.0
    %1242 = vmatpush.msra.mxu0 0.0
    %1243 = vmatpush.msra.mxu0 0.0
    %1244 = vmatpush.msra.mxu0 0.0
    %1245 = vmatpush.msra.mxu0 0.0
    %1246 = vmatpush.msra.mxu0 0.0
    %1247 = vmatpush.msra.mxu0 0.0
    %1248 = vmatpush.msra.mxu0 0.0
    %1249 = vmatpush.msra.mxu0 0.0
    %1250 = vmatpush.msra.mxu0 0.0
    %1251 = vmatpush.msra.mxu0 0.0
    %1252 = vmatpush.msra.mxu0 0.0
    %1253 = vmatpush.msra.mxu0 0.0
    %1254 = vmatpush.msra.mxu0 0.0
    %1255 = vmatpush.msra.mxu0 0.0
    %1256 = vmatpush.msra.mxu0 %v1239
    %1257 = vmatmul.f32.gmra.mxu0 %v812
    %v1258 = vpop.f32.mrf.mxu0
    %v1259 = vadd.f32 0.0, %v1258
    %1260 = vmatmul.f32.gmra.mxu0 %v815
    %v1261 = vpop.f32.mrf.mxu0
    %v1262 = vadd.f32 0.0, %v1261
    %1263 = vmatmul.f32.gmra.mxu0 %v818
    %v1264 = vpop.f32.mrf.mxu0
    %v1265 = vadd.f32 0.0, %v1264
    %1266 = vdwg.mxu0
    %v1267 = vmul.f32 %v1259, %v726
    %v1268 = vmul.f32 %v1262, %v727
    %v1269 = vmul.f32 %v1265, %v728
    %1270 = vrot.lane.b32.xlu0 %v1236, 96
    %v1271 = vpop.permute.xlu0 %1270
    %v1273 = vsel %vm786, %v1267, 0
    %v1276 = vsel %vm786, %v1268, 0
    %v1279 = vsel %vm786, %v1269, 0
    %v1281 = vsel %vm786, %v1271, 0
    %1283 = vmatpush.xpose.msra.mxu0 0.0
    %1284 = vmatpush.xpose.msra.mxu0 0.0
    %1285 = vmatpush.xpose.msra.mxu0 0.0
    %1286 = vmatpush.xpose.msra.mxu0 0.0
    %1287 = vmatpush.xpose.msra.mxu0 0.0
    %1288 = vmatpush.xpose.msra.mxu0 0.0
    %1289 = vmatpush.xpose.msra.mxu0 0.0
    %1290 = vmatpush.xpose.msra.mxu0 0.0
    %1291 = vmatpush.xpose.msra.mxu0 0.0
    %1292 = vmatpush.xpose.msra.mxu0 0.0
    %1293 = vmatpush.xpose.msra.mxu0 0.0
    %1294 = vmatpush.xpose.msra.mxu0 0.0
    %1295 = vmatpush.xpose.msra.mxu0 0.0
    %1296 = vmatpush.xpose.msra.mxu0 0.0
    %1297 = vmatpush.xpose.msra.mxu0 0.0
    %1298 = vmatpush.xpose.msra.mxu0 %v1281
    %1299 = vmatmul.f32.gmra.mxu0 %v1273
    %v1300 = vpop.f32.mrf.mxu0
    %v1301 = vadd.f32 0.0, %v1300
    %1302 = vmatmul.f32.gmra.mxu0 %v1276
    %v1303 = vpop.f32.mrf.mxu0
    %v1304 = vadd.f32 0.0, %v1303
    %1305 = vmatmul.f32.gmra.mxu0 %v1279
    %v1306 = vpop.f32.mrf.mxu0
    %v1307 = vadd.f32 0.0, %v1306
    %1308 = vdwg.mxu0
    %v1309 = vmul.f32 %v1301, 0.35355338
    %v1310 = vmul.f32 %v1304, 0.35355338
    %v1311 = vmul.f32 %v1307, 0.35355338
    %v1312 = vadd.f32 %v1309, %v723
    %v1313 = vadd.f32 %v1310, %v724
    %v1314 = vadd.f32 %v1311, %v725
    %v1315 = vsel %vm810, %v1312, -inf
    %1316 = vmax.xlane.f32.xlu0 %v1315
    %v1317 = vpop.xlane.xlu0 %1316
    %v1318 = vsel %vm810, %v1313, -inf
    %1319 = vmax.xlane.f32.xlu0 %v1318
    %v1320 = vpop.xlane.xlu0 %1319
    %v1321 = vsel %vm810, %v1314, -inf
    %1322 = vmax.xlane.f32.xlu0 %v1321
    %v1323 = vpop.xlane.xlu0 %1322
    %v1324 = vsub.f32 %v1312, %v1317
    %v1325 = vsub.f32 %v1313, %v1320
    %v1326 = vsub.f32 %v1314, %v1323
    %v1327 = vmul.f32 %v1324, 1.442695
    %v1328 = vpow.pop %v1327
    %v1329 = vmul.f32 %v1325, 1.442695
    %v1330 = vpow.pop %v1329
    %v1331 = vmul.f32 %v1326, 1.442695
    %v1332 = vpow.pop %v1331
    %v1333 = vsel %vm810, %v1328, 0.0
    %1334 = vadd.xlane.f32.xlu0 %v1333
    %v1335 = vpop.xlane.xlu0 %1334
    %v1336 = vsel %vm810, %v1330, 0.0
    %1337 = vadd.xlane.f32.xlu0 %v1336
    %v1338 = vpop.xlane.xlu0 %1337
    %v1339 = vsel %vm810, %v1332, 0.0
    %1340 = vadd.xlane.f32.xlu0 %v1339
    %v1341 = vpop.xlane.xlu0 %1340
    %v1342 = vrcp.pop %v1335
    %v1343 = vmul.f32 %v1335, %v1342
    %v1344 = vsub.f32 1.0, %v1343
    %v1345 = vmul.f32 %v1342, %v1344
    %v1346 = vadd.f32 %v1342, %v1345
    %vm1347 = vweird.f32 %v1335
    %vm1348 = vweird.f32 %v1342
    %vm1349 = vmor %vm1347, %vm1348
    %v1350 = vsel %vm1349, %v1342, %v1346
    %v1351 = vand.u32 2147483647, %v1335
    %vm1352 = vcmp.eq.f32.partialorder %v1351, 8.507059e+37
    %v1353 = vand.u32 %v1335, 2147483648
    %v1354 = vor.u32 1.1754944e-38, %v1353
    %v1355 = vsel %vm1352, %v1354, %v1350
    %v1356 = vmul.f32 %v1328, %v1355
    %v1357 = vrcp.pop %v1338
    %v1358 = vmul.f32 %v1338, %v1357
    %v1359 = vsub.f32 1.0, %v1358
    %v1360 = vmul.f32 %v1357, %v1359
    %v1361 = vadd.f32 %v1357, %v1360
    %vm1362 = vweird.f32 %v1338
    %vm1363 = vweird.f32 %v1357
    %vm1364 = vmor %vm1362, %vm1363
    %v1365 = vsel %vm1364, %v1357, %v1361
    %v1366 = vand.u32 2147483647, %v1338
    %vm1367 = vcmp.eq.f32.partialorder %v1366, 8.507059e+37
    %v1368 = vand.u32 %v1338, 2147483648
    %v1369 = vor.u32 1.1754944e-38, %v1368
    %v1370 = vsel %vm1367, %v1369, %v1365
    %v1371 = vmul.f32 %v1330, %v1370
    %v1372 = vrcp.pop %v1341
    %v1373 = vmul.f32 %v1341, %v1372
    %v1374 = vsub.f32 1.0, %v1373
    %v1375 = vmul.f32 %v1372, %v1374
    %v1376 = vadd.f32 %v1372, %v1375
    %vm1377 = vweird.f32 %v1341
    %vm1378 = vweird.f32 %v1372
    %vm1379 = vmor %vm1377, %vm1378
    %v1380 = vsel %vm1379, %v1372, %v1376
    %v1381 = vand.u32 2147483647, %v1341
    %vm1382 = vcmp.eq.f32.partialorder %v1381, 8.507059e+37
    %v1383 = vand.u32 %v1341, 2147483648
    %v1384 = vor.u32 1.1754944e-38, %v1383
    %v1385 = vsel %vm1382, %v1384, %v1380
    %v1386 = vmul.f32 %v1332, %v1385
    %1387 = vrot.lane.b32.xlu0 %v1236, 64
    %v1388 = vpop.permute.xlu0 %1387
    %v1390 = vsel %vm810, %v1356, 0
    %v1393 = vsel %vm810, %v1371, 0
    %v1396 = vsel %vm810, %v1386, 0
    %v1398 = vsel %vm820, %v1388, 0
    %1400 = vmatpush.msra.mxu0 0.0
    %1401 = vmatpush.msra.mxu0 0.0
    %1402 = vmatpush.msra.mxu0 0.0
    %1403 = vmatpush.msra.mxu0 0.0
    %1404 = vmatpush.msra.mxu0 0.0
    %1405 = vmatpush.msra.mxu0 0.0
    %1406 = vmatpush.msra.mxu0 0.0
    %1407 = vmatpush.msra.mxu0 0.0
    %1408 = vmatpush.msra.mxu0 0.0
    %1409 = vmatpush.msra.mxu0 0.0
    %1410 = vmatpush.msra.mxu0 0.0
    %1411 = vmatpush.msra.mxu0 0.0
    %1412 = vmatpush.msra.mxu0 0.0
    %1413 = vmatpush.msra.mxu0 0.0
    %1414 = vmatpush.msra.mxu0 0.0
    %1415 = vmatpush.msra.mxu0 %v1398
    %1416 = vmatmul.f32.gmra.mxu0 %v1390
    %v1417 = vpop.f32.mrf.mxu0
    %v1418 = vadd.f32 0.0, %v1417
    %1419 = vmatmul.f32.gmra.mxu0 %v1393
    %v1420 = vpop.f32.mrf.mxu0
    %v1421 = vadd.f32 0.0, %v1420
    %1422 = vmatmul.f32.gmra.mxu0 %v1396
    %v1423 = vpop.f32.mrf.mxu0
    %v1424 = vadd.f32 0.0, %v1423
    %1425 = vdwg.mxu0
    %v1426 = vmul.f32 %v1418, %v726
    %v1427 = vmul.f32 %v1421, %v727
    %v1428 = vmul.f32 %v1424, %v728
    %1429 = vmatpush.msra.mxu0 0.0
    %1430 = vmatpush.msra.mxu0 0.0
    %1431 = vmatpush.msra.mxu0 0.0
    %1432 = vmatpush.msra.mxu0 0.0
    %1433 = vmatpush.msra.mxu0 0.0
    %1434 = vmatpush.msra.mxu0 0.0
    %1435 = vmatpush.msra.mxu0 0.0
    %1436 = vmatpush.msra.mxu0 0.0
    %1437 = vmatpush.msra.mxu0 0.0
    %1438 = vmatpush.msra.mxu0 0.0
    %1439 = vmatpush.msra.mxu0 0.0
    %1440 = vmatpush.msra.mxu0 0.0
    %1441 = vmatpush.msra.mxu0 0.0
    %1442 = vmatpush.msra.mxu0 %v1428
    %1443 = vmatpush.msra.mxu0 %v1427
    %1444 = vmatpush.msra.mxu0 %v1426
    %1445 = vmatmul.f32.gmra.mxu0 %v1014
    %v1446 = vpop.f32.mrf.mxu0
    %v1447 = vadd.f32 0.0, %v1446
    %1448 = vdwg.mxu0
    %v1450 = vperm.slane %v1211, 0
    %v1453 = vsel %vm786, %v1447, 0
    %1455 = vmatpush.msra.mxu0 0.0
    %1456 = vmatpush.msra.mxu0 0.0
    %1457 = vmatpush.msra.mxu0 0.0
    %1458 = vmatpush.msra.mxu0 0.0
    %1459 = vmatpush.msra.mxu0 0.0
    %1460 = vmatpush.msra.mxu0 0.0
    %1461 = vmatpush.msra.mxu0 0.0
    %1462 = vmatpush.msra.mxu0 0.0
    %1463 = vmatpush.msra.mxu0 0.0
    %1464 = vmatpush.msra.mxu0 0.0
    %1465 = vmatpush.msra.mxu0 0.0
    %1466 = vmatpush.msra.mxu0 0.0
    %1467 = vmatpush.msra.mxu0 %v1209
    %1468 = vmatpush.msra.mxu0 %v1208
    %1469 = vmatpush.msra.mxu0 %v1207
    %1470 = vmatpush.msra.mxu0 %v1206
    %1471 = vmatmul.f32.gmra.mxu0 %v1453
    %v1472 = vpop.f32.mrf.mxu0
    %v1473 = vadd.f32 %v1450, %v1472
    %1474 = vdwg.mxu0
    %v1475 = vadd.f32 %v1163, %v1473
    %s1476 = scalar_lea.vmem [#allocation10], 1
    %v1477 = vld [vmem:[%s1476] sm:$0x1]
    %s1478 = scalar_lea.vmem [#allocation11], 1
    %v1479 = vld [vmem:[%s1478] sm:$0x1]
    %v1480 = vsel %vm735, %v1475, 0.0
    %1481 = vadd.xlane.f32.xlu0 %v1480
    %v1482 = vpop.xlane.xlu0 %1481
    %v1483 = vmul.f32 %v1482, %v745
    %v1484 = vsub.f32 %v1475, %v1483
    %v1485 = vmul.f32 %v1484, %v1484
    %v1486 = vsel %vm735, %v1485, 0.0
    %1487 = vadd.xlane.f32.xlu0 %v1486
    %v1488 = vpop.xlane.xlu0 %1487
    %v1489 = vmul.f32 %v1488, %v745
    %v1490 = vadd.f32 %v1489, 1e-05
    %v1491 = vrsqrt.pop %v1490
    %v1492 = vmul.f32 %v1491, %v1490
    %v1493 = vmul.f32 %v1492, %v1491
    %v1494 = vmul.f32 0.5, %v1493
    %v1495 = vsub.f32 1.5, %v1494
    %v1496 = vmul.f32 %v1491, %v1495
    %vm1497 = vweird.f32 %v1490
    %vm1498 = vweird.f32 %v1491
    %vm1499 = vmor %vm1497, %vm1498
    %v1500 = vsel %vm1499, %v1491, %v1496
    %v1501 = vmul.f32 %v1484, %v1500
    %v1503 = vperm.slane %v1477, 0
    %v1505 = vmul.f32 %v1501, %v1503
    %v1507 = vperm.slane %v1479, 0
    %v1509 = vadd.f32 %v1505, %v1507
    %s1510 = scalar_lea.vmem %s19, 32
    %v1511 = vld [vmem:[%s1510] sm:$0xff]
    %v1512 = vld [vmem:[%s1510 + $0x8] sm:$0xff]
    %v1513 = vld [vmem:[%s1510 + $0x10] sm:$0xff]
    %v1514 = vld [vmem:[%s1510 + $0x18] sm:$0xff]
    %s1515 = scalar_lea.vmem [#allocation13], 1
    %v1516 = vld [vmem:[%s1515] sm:$0x1]
    %s1517 = scalar_lea.vmem %s23, 64
    %v1518 = vld [vmem:[%s1517] sm:$0xff]
    %v1519 = vld [vmem:[%s1517 + $0x8] sm:$0xff]
    %v1520 = vld [vmem:[%s1517 + $0x10] sm:$0xff]
    %v1521 = vld [vmem:[%s1517 + $0x18] sm:$0xff]
    %v1522 = vld [vmem:[%s1517 + $0x20] sm:$0xff]
    %v1523 = vld [vmem:[%s1517 + $0x28] sm:$0xff]
    %v1524 = vld [vmem:[%s1517 + $0x30] sm:$0xff]
    %v1525 = vld [vmem:[%s1517 + $0x38] sm:$0xff]
    %s1526 = scalar_lea.vmem [#allocation14], 1
    %v1527 = vld [vmem:[%s1526] sm:$0x1]
    %v1529 = vperm.slane %v1516, 0
    %v1532 = vsel %vm786, %v1509, 0
    %1534 = vmatpush.msra.mxu0 0.0
    %1535 = vmatpush.msra.mxu0 0.0
    %1536 = vmatpush.msra.mxu0 0.0
    %1537 = vmatpush.msra.mxu0 0.0
    %1538 = vmatpush.msra.mxu0 0.0
    %1539 = vmatpush.msra.mxu0 0.0
    %1540 = vmatpush.msra.mxu0 0.0
    %1541 = vmatpush.msra.mxu0 0.0
    %1542 = vmatpush.msra.mxu0 0.0
    %1543 = vmatpush.msra.mxu0 0.0
    %1544 = vmatpush.msra.mxu0 0.0
    %1545 = vmatpush.msra.mxu0 0.0
    %1546 = vmatpush.msra.mxu0 %v1514
    %1547 = vmatpush.msra.mxu0 %v1513
    %1548 = vmatpush.msra.mxu0 %v1512
    %1549 = vmatpush.msra.mxu0 %v1511
    %1550 = vmatmul.f32.gmra.mxu0 %v1532
    %v1551 = vpop.f32.mrf.mxu0
    %v1552 = vadd.f32 %v1529, %v1551
    %1553 = vdwg.mxu0
    %v1554 = vmax.f32 %v1552, 0.0
    %v1556 = vperm.slane %v1527, 0
    %v1559 = vsel %vm1139, %v1554, 0
    %1561 = vmatpush.msra.mxu0 0.0
    %1562 = vmatpush.msra.mxu0 0.0
    %1563 = vmatpush.msra.mxu0 0.0
    %1564 = vmatpush.msra.mxu0 0.0
    %1565 = vmatpush.msra.mxu0 0.0
    %1566 = vmatpush.msra.mxu0 0.0
    %1567 = vmatpush.msra.mxu0 0.0
    %1568 = vmatpush.msra.mxu0 0.0
    %1569 = vmatpush.msra.mxu0 %v1525
    %1570 = vmatpush.msra.mxu0 %v1524
    %1571 = vmatpush.msra.mxu0 %v1523
    %1572 = vmatpush.msra.mxu0 %v1522
    %1573 = vmatpush.msra.mxu0 %v1521
    %1574 = vmatpush.msra.mxu0 %v1520
    %1575 = vmatpush.msra.mxu0 %v1519
    %1576 = vmatpush.msra.mxu0 %v1518
    %1577 = vmatmul.f32.gmra.mxu0 %v1559
    %v1578 = vpop.f32.mrf.mxu0
    %v1579 = vadd.f32 %v1556, %v1578
    %1580 = vdwg.mxu0
    %v1581 = vadd.f32 %v1475, %v1579
    %v1582 = vld [vmem:[#allocation38] sm:$0x1]
    %v1583 = vld [vmem:[#allocation40] sm:$0x1]
    %v1584 = vsel %vm735, %v1581, 0.0
    %1585 = vadd.xlane.f32.xlu0 %v1584
    %v1586 = vpop.xlane.xlu0 %1585
    %v1587 = vmul.f32 %v1586, %v745
    %v1588 = vsub.f32 %v1581, %v1587
    %v1589 = vmul.f32 %v1588, %v1588
    %v1590 = vsel %vm735, %v1589, 0.0
    %1591 = vadd.xlane.f32.xlu0 %v1590
    %v1592 = vpop.xlane.xlu0 %1591
    %v1593 = vmul.f32 %v1592, %v745
    %v1594 = vadd.f32 %v1593, 1e-05
    %v1595 = vrsqrt.pop %v1594
    %v1596 = vmul.f32 %v1595, %v1594
    %v1597 = vmul.f32 %v1596, %v1595
    %v1598 = vmul.f32 0.5, %v1597
    %v1599 = vsub.f32 1.5, %v1598
    %v1600 = vmul.f32 %v1595, %v1599
    %vm1601 = vweird.f32 %v1594
    %vm1602 = vweird.f32 %v1595
    %vm1603 = vmor %vm1601, %vm1602
    %v1604 = vsel %vm1603, %v1595, %v1600
    %v1605 = vmul.f32 %v1588, %v1604
    %v1607 = vperm.slane %v1582, 0
    %v1609 = vmul.f32 %v1605, %v1607
    %v1611 = vperm.slane %v1583, 0
    %v1613 = vadd.f32 %v1609, %v1611
    %v1614 = vld [vmem:[#allocation53] sm:$0xff]
    %v1615 = vld [vmem:[#allocation53 + $0x8] sm:$0xff]
    %v1616 = vld [vmem:[#allocation53 + $0x10] sm:$0xff]
    %v1617 = vld [vmem:[#allocation53 + $0x18] sm:$0xff]
    %v1618 = vld [vmem:[#allocation55] sm:$0xff]
    %v1619 = vld [vmem:[#allocation55 + $0x8] sm:$0xff]
    %v1620 = vld [vmem:[#allocation55 + $0x10] sm:$0xff]
    %v1621 = vld [vmem:[#allocation55 + $0x18] sm:$0xff]
    %v1622 = vld [vmem:[#allocation52] sm:$0xff]
    %v1623 = vld [vmem:[#allocation52 + $0x8] sm:$0xff]
    %v1624 = vld [vmem:[#allocation52 + $0x10] sm:$0xff]
    %v1625 = vld [vmem:[#allocation52 + $0x18] sm:$0xff]
    %v1626 = vld [vmem:[#allocation49] sm:$0xff]
    %v1627 = vld [vmem:[#allocation49 + $0x8] sm:$0xff]
    %v1628 = vld [vmem:[#allocation49 + $0x10] sm:$0xff]
    %v1629 = vld [vmem:[#allocation49 + $0x18] sm:$0xff]
    %v1630 = vld [vmem:[%s81] sm:$0xff]
    %v1631 = vld [vmem:[#allocation16] sm:$0x1]
    %v1632 = vld [vmem:[#allocation17] sm:$0x1]
    %1633 = vadd.xlane.f32.xlu0 0.0
    %v1634 = vpop.xlane.xlu0 %1633
    %v1635 = vmul.f32 %v1634, %v745
    %v1636 = vsub.f32 0.0, %v1635
    %v1637 = vmul.f32 %v1636, %v1636
    %v1638 = vsel %vm786, %v1637, 0.0
    %1639 = vadd.xlane.f32.xlu0 %v1638
    %v1640 = vpop.xlane.xlu0 %1639
    %v1641 = vmul.f32 %v1640, %v745
    %v1642 = vadd.f32 %v1641, 1e-05
    %v1643 = vrsqrt.pop %v1642
    %v1644 = vmul.f32 %v1643, %v1642
    %v1645 = vmul.f32 %v1644, %v1643
    %v1646 = vmul.f32 0.5, %v1645
    %v1647 = vsub.f32 1.5, %v1646
    %v1648 = vmul.f32 %v1643, %v1647
    %vm1649 = vweird.f32 %v1642
    %vm1650 = vweird.f32 %v1643
    %vm1651 = vmor %vm1649, %vm1650
    %v1652 = vsel %vm1651, %v1643, %v1648
    %v1653 = vmul.f32 %v1636, %v1652
    %v1655 = vperm.slane %v1631, 0
    %v1657 = vmul.f32 %v1653, %v1655
    %v1659 = vperm.slane %v1632, 0
    %v1661 = vadd.f32 %v1657, %v1659
    %v1662 = vld [vmem:[%s31] sm:$0xff]
    %v1663 = vld [vmem:[%s31 + $0x8] sm:$0xff]
    %v1664 = vld [vmem:[%s31 + $0x10] sm:$0xff]
    %v1665 = vld [vmem:[%s31 + $0x18] sm:$0xff]
    %v1666 = vld [vmem:[#allocation19] sm:$0x1]
    %v1667 = vld [vmem:[%s35] sm:$0xff]
    %v1668 = vld [vmem:[%s35 + $0x8] sm:$0xff]
    %v1669 = vld [vmem:[%s35 + $0x10] sm:$0xff]
    %v1670 = vld [vmem:[%s35 + $0x18] sm:$0xff]
    %v1671 = vld [vmem:[#allocation20] sm:$0x1]
    %v1673 = vperm.slane %v1666, 0
    %v1676 = vsel %vm786, %v1661, 0
    %1678 = vmatpush.msra.mxu0 0.0
    %1679 = vmatpush.msra.mxu0 0.0
    %1680 = vmatpush.msra.mxu0 0.0
    %1681 = vmatpush.msra.mxu0 0.0
    %1682 = vmatpush.msra.mxu0 0.0
    %1683 = vmatpush.msra.mxu0 0.0
    %1684 = vmatpush.msra.mxu0 0.0
    %1685 = vmatpush.msra.mxu0 0.0
    %1686 = vmatpush.msra.mxu0 0.0
    %1687 = vmatpush.msra.mxu0 0.0
    %1688 = vmatpush.msra.mxu0 0.0
    %1689 = vmatpush.msra.mxu0 0.0
    %1690 = vmatpush.msra.mxu0 %v1665
    %1691 = vmatpush.msra.mxu0 %v1664
    %1692 = vmatpush.msra.mxu0 %v1663
    %1693 = vmatpush.msra.mxu0 %v1662
    %1694 = vmatmul.f32.gmra.mxu0 %v1676
    %v1695 = vpop.f32.mrf.mxu0
    %v1696 = vadd.f32 %v1673, %v1695
    %1697 = vdwg.mxu0
    %vm1698 = vcmask 64512
    %v1700 = vsel %vm1698, %v1626, 0
    %v1703 = vsel %vm1698, %v1627, 0
    %v1706 = vsel %vm1698, %v1628, 0
    %v1709 = vsel %vm1698, %v1629, 0
    %1711 = vmatpush.msra.mxu0 0.0
    %1712 = vmatpush.msra.mxu0 0.0
    %1713 = vmatpush.msra.mxu0 0.0
    %1714 = vmatpush.msra.mxu0 0.0
    %1715 = vmatpush.msra.mxu0 0.0
    %1716 = vmatpush.msra.mxu0 0.0
    %1717 = vmatpush.msra.mxu0 0.0
    %1718 = vmatpush.msra.mxu0 0.0
    %1719 = vmatpush.msra.mxu0 0.0
    %1720 = vmatpush.msra.mxu0 0.0
    %1721 = vmatpush.msra.mxu0 0.0
    %1722 = vmatpush.msra.mxu0 0.0
    %1723 = vmatpush.msra.mxu0 0.0
    %1724 = vmatpush.msra.mxu0 0.0
    %1725 = vmatpush.msra.mxu0 0.0
    %1726 = vmatpush.msra.mxu0 %v1696
    %1727 = vmatmul.f32.gmra.mxu0 %v1700
    %v1728 = vpop.f32.mrf.mxu0
    %v1729 = vadd.f32 0.0, %v1728
    %1730 = vmatmul.f32.gmra.mxu0 %v1703
    %v1731 = vpop.f32.mrf.mxu0
    %v1732 = vadd.f32 0.0, %v1731
    %1733 = vmatmul.f32.gmra.mxu0 %v1706
    %v1734 = vpop.f32.mrf.mxu0
    %v1735 = vadd.f32 0.0, %v1734
    %1736 = vmatmul.f32.gmra.mxu0 %v1709
    %v1737 = vpop.f32.mrf.mxu0
    %v1738 = vadd.f32 0.0, %v1737
    %1739 = vdwg.mxu0
    %v1740 = vmul.f32 %v1729, %v1622
    %v1741 = vmul.f32 %v1732, %v1623
    %v1742 = vmul.f32 %v1735, %v1624
    %v1743 = vmul.f32 %v1738, %v1625
    %1745 = vrot.lane.b32.xlu0 %v1696, 96
    %v1746 = vpop.permute.xlu0 %1745
    %v1748 = vsel %vm786, %v1740, 0
    %v1751 = vsel %vm786, %v1741, 0
    %v1754 = vsel %vm786, %v1742, 0
    %v1757 = vsel %vm786, %v1743, 0
    %v1759 = vsel %vm786, %v1746, 0
    %1761 = vmatpush.xpose.msra.mxu0 0.0
    %1762 = vmatpush.xpose.msra.mxu0 0.0
    %1763 = vmatpush.xpose.msra.mxu0 0.0
    %1764 = vmatpush.xpose.msra.mxu0 0.0
    %1765 = vmatpush.xpose.msra.mxu0 0.0
    %1766 = vmatpush.xpose.msra.mxu0 0.0
    %1767 = vmatpush.xpose.msra.mxu0 0.0
    %1768 = vmatpush.xpose.msra.mxu0 0.0
    %1769 = vmatpush.xpose.msra.mxu0 0.0
    %1770 = vmatpush.xpose.msra.mxu0 0.0
    %1771 = vmatpush.xpose.msra.mxu0 0.0
    %1772 = vmatpush.xpose.msra.mxu0 0.0
    %1773 = vmatpush.xpose.msra.mxu0 0.0
    %1774 = vmatpush.xpose.msra.mxu0 0.0
    %1775 = vmatpush.xpose.msra.mxu0 0.0
    %1776 = vmatpush.xpose.msra.mxu0 %v1759
    %1777 = vmatmul.f32.gmra.mxu0 %v1748
    %v1778 = vpop.f32.mrf.mxu0
    %v1779 = vadd.f32 0.0, %v1778
    %1780 = vmatmul.f32.gmra.mxu0 %v1751
    %v1781 = vpop.f32.mrf.mxu0
    %v1782 = vadd.f32 0.0, %v1781
    %1783 = vmatmul.f32.gmra.mxu0 %v1754
    %v1784 = vpop.f32.mrf.mxu0
    %v1785 = vadd.f32 0.0, %v1784
    %1786 = vmatmul.f32.gmra.mxu0 %v1757
    %v1787 = vpop.f32.mrf.mxu0
    %v1788 = vadd.f32 0.0, %v1787
    %1789 = vdwg.mxu0
    %v1790 = vmul.f32 %v1779, 0.35355338
    %v1791 = vmul.f32 %v1782, 0.35355338
    %v1792 = vmul.f32 %v1785, 0.35355338
    %v1793 = vmul.f32 %v1788, 0.35355338
    %v1794 = vadd.f32 %v1790, %v1614
    %v1795 = vadd.f32 %v1791, %v1615
    %v1796 = vadd.f32 %v1792, %v1616
    %v1797 = vadd.f32 %v1793, %v1617
    %v1798 = vsel %vm1698, %v1794, -inf
    %1799 = vmax.xlane.f32.xlu0 %v1798
    %v1800 = vpop.xlane.xlu0 %1799
    %v1801 = vsel %vm1698, %v1795, -inf
    %1802 = vmax.xlane.f32.xlu0 %v1801
    %v1803 = vpop.xlane.xlu0 %1802
    %v1804 = vsel %vm1698, %v1796, -inf
    %1805 = vmax.xlane.f32.xlu0 %v1804
    %v1806 = vpop.xlane.xlu0 %1805
    %v1807 = vsel %vm1698, %v1797, -inf
    %1808 = vmax.xlane.f32.xlu0 %v1807
    %v1809 = vpop.xlane.xlu0 %1808
    %v1810 = vsub.f32 %v1794, %v1800
    %v1811 = vsub.f32 %v1795, %v1803
    %v1812 = vsub.f32 %v1796, %v1806
    %v1813 = vsub.f32 %v1797, %v1809
    %v1814 = vmul.f32 %v1810, 1.442695
    %v1815 = vpow.pop %v1814
    %v1816 = vmul.f32 %v1811, 1.442695
    %v1817 = vpow.pop %v1816
    %v1818 = vmul.f32 %v1812, 1.442695
    %v1819 = vpow.pop %v1818
    %v1820 = vmul.f32 %v1813, 1.442695
    %v1821 = vpow.pop %v1820
    %v1822 = vsel %vm1698, %v1815, 0.0
    %1823 = vadd.xlane.f32.xlu0 %v1822
    %v1824 = vpop.xlane.xlu0 %1823
    %v1825 = vsel %vm1698, %v1817, 0.0
    %1826 = vadd.xlane.f32.xlu0 %v1825
    %v1827 = vpop.xlane.xlu0 %1826
    %v1828 = vsel %vm1698, %v1819, 0.0
    %1829 = vadd.xlane.f32.xlu0 %v1828
    %v1830 = vpop.xlane.xlu0 %1829
    %v1831 = vsel %vm1698, %v1821, 0.0
    %1832 = vadd.xlane.f32.xlu0 %v1831
    %v1833 = vpop.xlane.xlu0 %1832
    %v1834 = vrcp.pop %v1824
    %v1835 = vmul.f32 %v1824, %v1834
    %v1836 = vsub.f32 1.0, %v1835
    %v1837 = vmul.f32 %v1834, %v1836
    %v1838 = vadd.f32 %v1834, %v1837
    %vm1839 = vweird.f32 %v1824
    %vm1840 = vweird.f32 %v1834
    %vm1841 = vmor %vm1839, %vm1840
    %v1842 = vsel %vm1841, %v1834, %v1838
    %v1843 = vand.u32 2147483647, %v1824
    %vm1844 = vcmp.eq.f32.partialorder %v1843, 8.507059e+37
    %v1845 = vand.u32 %v1824, 2147483648
    %v1846 = vor.u32 1.1754944e-38, %v1845
    %v1847 = vsel %vm1844, %v1846, %v1842
    %v1848 = vmul.f32 %v1815, %v1847
    %v1849 = vrcp.pop %v1827
    %v1850 = vmul.f32 %v1827, %v1849
    %v1851 = vsub.f32 1.0, %v1850
    %v1852 = vmul.f32 %v1849, %v1851
    %v1853 = vadd.f32 %v1849, %v1852
    %vm1854 = vweird.f32 %v1827
    %vm1855 = vweird.f32 %v1849
    %vm1856 = vmor %vm1854, %vm1855
    %v1857 = vsel %vm1856, %v1849, %v1853
    %v1858 = vand.u32 2147483647, %v1827
    %vm1859 = vcmp.eq.f32.partialorder %v1858, 8.507059e+37
    %v1860 = vand.u32 %v1827, 2147483648
    %v1861 = vor.u32 1.1754944e-38, %v1860
    %v1862 = vsel %vm1859, %v1861, %v1857
    %v1863 = vmul.f32 %v1817, %v1862
    %v1864 = vrcp.pop %v1830
    %v1865 = vmul.f32 %v1830, %v1864
    %v1866 = vsub.f32 1.0, %v1865
    %v1867 = vmul.f32 %v1864, %v1866
    %v1868 = vadd.f32 %v1864, %v1867
    %vm1869 = vweird.f32 %v1830
    %vm1870 = vweird.f32 %v1864
    %vm1871 = vmor %vm1869, %vm1870
    %v1872 = vsel %vm1871, %v1864, %v1868
    %v1873 = vand.u32 2147483647, %v1830
    %vm1874 = vcmp.eq.f32.partialorder %v1873, 8.507059e+37
    %v1875 = vand.u32 %v1830, 2147483648
    %v1876 = vor.u32 1.1754944e-38, %v1875
    %v1877 = vsel %vm1874, %v1876, %v1872
    %v1878 = vmul.f32 %v1819, %v1877
    %v1879 = vrcp.pop %v1833
    %v1880 = vmul.f32 %v1833, %v1879
    %v1881 = vsub.f32 1.0, %v1880
    %v1882 = vmul.f32 %v1879, %v1881
    %v1883 = vadd.f32 %v1879, %v1882
    %vm1884 = vweird.f32 %v1833
    %vm1885 = vweird.f32 %v1879
    %vm1886 = vmor %vm1884, %vm1885
    %v1887 = vsel %vm1886, %v1879, %v1883
    %v1888 = vand.u32 2147483647, %v1833
    %vm1889 = vcmp.eq.f32.partialorder %v1888, 8.507059e+37
    %v1890 = vand.u32 %v1833, 2147483648
    %v1891 = vor.u32 1.1754944e-38, %v1890
    %v1892 = vsel %vm1889, %v1891, %v1887
    %v1893 = vmul.f32 %v1821, %v1892
    %1894 = vrot.lane.b32.xlu0 %v1696, 64
    %v1895 = vpop.permute.xlu0 %1894
    %v1898 = vsel %vm1698, %v1848, 0
    %v1901 = vsel %vm1698, %v1863, 0
    %v1904 = vsel %vm1698, %v1878, 0
    %v1907 = vsel %vm1698, %v1893, 0
    %1909 = vmatpush.msra.mxu0 0.0
    %1910 = vmatpush.msra.mxu0 0.0
    %1911 = vmatpush.msra.mxu0 0.0
    %1912 = vmatpush.msra.mxu0 0.0
    %1913 = vmatpush.msra.mxu0 0.0
    %1914 = vmatpush.msra.mxu0 0.0
    %1915 = vmatpush.msra.mxu0 0.0
    %1916 = vmatpush.msra.mxu0 0.0
    %1917 = vmatpush.msra.mxu0 0.0
    %1918 = vmatpush.msra.mxu0 0.0
    %1919 = vmatpush.msra.mxu0 0.0
    %1920 = vmatpush.msra.mxu0 0.0
    %1921 = vmatpush.msra.mxu0 0.0
    %1922 = vmatpush.msra.mxu0 0.0
    %1923 = vmatpush.msra.mxu0 0.0
    %1924 = vmatpush.msra.mxu0 %v1895
    %1925 = vmatmul.f32.gmra.mxu0 %v1898
    %v1926 = vpop.f32.mrf.mxu0
    %v1927 = vadd.f32 0.0, %v1926
    %1928 = vmatmul.f32.gmra.mxu0 %v1901
    %v1929 = vpop.f32.mrf.mxu0
    %v1930 = vadd.f32 0.0, %v1929
    %1931 = vmatmul.f32.gmra.mxu0 %v1904
    %v1932 = vpop.f32.mrf.mxu0
    %v1933 = vadd.f32 0.0, %v1932
    %1934 = vmatmul.f32.gmra.mxu0 %v1907
    %v1935 = vpop.f32.mrf.mxu0
    %v1936 = vadd.f32 0.0, %v1935
    %1937 = vdwg.mxu0
    %v1938 = vmul.f32 %v1927, %v1622
    %v1939 = vmul.f32 %v1930, %v1623
    %v1940 = vmul.f32 %v1933, %v1624
    %v1941 = vmul.f32 %v1936, %v1625
    %v1943 = vsel %vm786, %v1630, 0
    %1945 = vmatpush.msra.mxu0 0.0
    %1946 = vmatpush.msra.mxu0 0.0
    %1947 = vmatpush.msra.mxu0 0.0
    %1948 = vmatpush.msra.mxu0 0.0
    %1949 = vmatpush.msra.mxu0 0.0
    %1950 = vmatpush.msra.mxu0 0.0
    %1951 = vmatpush.msra.mxu0 0.0
    %1952 = vmatpush.msra.mxu0 0.0
    %1953 = vmatpush.msra.mxu0 0.0
    %1954 = vmatpush.msra.mxu0 0.0
    %1955 = vmatpush.msra.mxu0 0.0
    %1956 = vmatpush.msra.mxu0 0.0
    %1957 = vmatpush.msra.mxu0 %v1941
    %1958 = vmatpush.msra.mxu0 %v1940
    %1959 = vmatpush.msra.mxu0 %v1939
    %1960 = vmatpush.msra.mxu0 %v1938
    %1961 = vmatmul.f32.gmra.mxu0 %v1943
    %v1962 = vpop.f32.mrf.mxu0
    %v1963 = vadd.f32 0.0, %v1962
    %1964 = vdwg.mxu0
    %v1966 = vperm.slane %v1671, 0
    %v1969 = vsel %vm786, %v1963, 0
    %1971 = vmatpush.msra.mxu0 0.0
    %1972 = vmatpush.msra.mxu0 0.0
    %1973 = vmatpush.msra.mxu0 0.0
    %1974 = vmatpush.msra.mxu0 0.0
    %1975 = vmatpush.msra.mxu0 0.0
    %1976 = vmatpush.msra.mxu0 0.0
    %1977 = vmatpush.msra.mxu0 0.0
    %1978 = vmatpush.msra.mxu0 0.0
    %1979 = vmatpush.msra.mxu0 0.0
    %1980 = vmatpush.msra.mxu0 0.0
    %1981 = vmatpush.msra.mxu0 0.0
    %1982 = vmatpush.msra.mxu0 0.0
    %1983 = vmatpush.msra.mxu0 %v1670
    %1984 = vmatpush.msra.mxu0 %v1669
    %1985 = vmatpush.msra.mxu0 %v1668
    %1986 = vmatpush.msra.mxu0 %v1667
    %1987 = vmatmul.f32.gmra.mxu0 %v1969
    %v1988 = vpop.f32.mrf.mxu0
    %v1989 = vadd.f32 %v1966, %v1988
    %1990 = vdwg.mxu0
    %v1991 = vadd.f32 %v1989, 0.0
    %v1992 = vld [vmem:[#allocation22] sm:$0x1]
    %v1993 = vld [vmem:[#allocation23] sm:$0x1]
    %v1994 = vsel %vm786, %v1991, 0.0
    %1995 = vadd.xlane.f32.xlu0 %v1994
    %v1996 = vpop.xlane.xlu0 %1995
    %v1997 = vmul.f32 %v1996, %v745
    %v1998 = vsub.f32 %v1991, %v1997
    %v1999 = vmul.f32 %v1998, %v1998
    %v2000 = vsel %vm786, %v1999, 0.0
    %2001 = vadd.xlane.f32.xlu0 %v2000
    %v2002 = vpop.xlane.xlu0 %2001
    %v2003 = vmul.f32 %v2002, %v745
    %v2004 = vadd.f32 %v2003, 1e-05
    %v2005 = vrsqrt.pop %v2004
    %v2006 = vmul.f32 %v2005, %v2004
    %v2007 = vmul.f32 %v2006, %v2005
    %v2008 = vmul.f32 0.5, %v2007
    %v2009 = vsub.f32 1.5, %v2008
    %v2010 = vmul.f32 %v2005, %v2009
    %vm2011 = vweird.f32 %v2004
    %vm2012 = vweird.f32 %v2005
    %vm2013 = vmor %vm2011, %vm2012
    %v2014 = vsel %vm2013, %v2005, %v2010
    %v2015 = vmul.f32 %v1998, %v2014
    %v2017 = vperm.slane %v1992, 0
    %v2019 = vmul.f32 %v2015, %v2017
    %v2021 = vperm.slane %v1993, 0
    %v2023 = vadd.f32 %v2019, %v2021
    %v2024 = vld [vmem:[#allocation25] sm:$0xff]
    %v2025 = vld [vmem:[#allocation25 + $0x8] sm:$0xff]
    %v2026 = vld [vmem:[#allocation25 + $0x10] sm:$0xff]
    %v2027 = vld [vmem:[#allocation25 + $0x18] sm:$0xff]
    %v2028 = vld [vmem:[#allocation26] sm:$0x1]
    %v2029 = vld [vmem:[#allocation28] sm:$0xff]
    %v2030 = vld [vmem:[#allocation28 + $0x8] sm:$0xff]
    %v2031 = vld [vmem:[#allocation28 + $0x10] sm:$0xff]
    %v2032 = vld [vmem:[#allocation28 + $0x18] sm:$0xff]
    %v2033 = vld [vmem:[#allocation29] sm:$0x1]
    %v2035 = vperm.slane %v2028, 0
    %v2038 = vsel %vm786, %v2023, 0
    %2040 = vmatpush.msra.mxu0 0.0
    %2041 = vmatpush.msra.mxu0 0.0
    %2042 = vmatpush.msra.mxu0 0.0
    %2043 = vmatpush.msra.mxu0 0.0
    %2044 = vmatpush.msra.mxu0 0.0
    %2045 = vmatpush.msra.mxu0 0.0
    %2046 = vmatpush.msra.mxu0 0.0
    %2047 = vmatpush.msra.mxu0 0.0
    %2048 = vmatpush.msra.mxu0 0.0
    %2049 = vmatpush.msra.mxu0 0.0
    %2050 = vmatpush.msra.mxu0 0.0
    %2051 = vmatpush.msra.mxu0 0.0
    %2052 = vmatpush.msra.mxu0 %v2027
    %2053 = vmatpush.msra.mxu0 %v2026
    %2054 = vmatpush.msra.mxu0 %v2025
    %2055 = vmatpush.msra.mxu0 %v2024
    %2056 = vmatmul.f32.gmra.mxu0 %v2038
    %v2057 = vpop.f32.mrf.mxu0
    %v2058 = vadd.f32 %v2035, %v2057
    %2059 = vdwg.mxu0
    %2064 = vrot.lane.b32.xlu0 %v2024, 96
    %v2065 = vpop.permute.xlu0 %2064
    %2066 = vrot.lane.b32.xlu0 %v2025, 96
    %v2067 = vpop.permute.xlu0 %2066
    %2068 = vrot.lane.b32.xlu0 %v2026, 96
    %v2069 = vpop.permute.xlu0 %2068
    %2070 = vrot.lane.b32.xlu0 %v2027, 96
    %v2071 = vpop.permute.xlu0 %2070
    %2076 = vrot.lane.b32.xlu0 %v2035, 96
    %v2077 = vpop.permute.xlu0 %2076
    %v2080 = vsel %vm786, %v1613, 0
    %2082 = vmatpush.msra.mxu0 0.0
    %2083 = vmatpush.msra.mxu0 0.0
    %2084 = vmatpush.msra.mxu0 0.0
    %2085 = vmatpush.msra.mxu0 0.0
    %2086 = vmatpush.msra.mxu0 0.0
    %2087 = vmatpush.msra.mxu0 0.0
    %2088 = vmatpush.msra.mxu0 0.0
    %2089 = vmatpush.msra.mxu0 0.0
    %2090 = vmatpush.msra.mxu0 0.0
    %2091 = vmatpush.msra.mxu0 0.0
    %2092 = vmatpush.msra.mxu0 0.0
    %2093 = vmatpush.msra.mxu0 0.0
    %2094 = vmatpush.msra.mxu0 %v2071
    %2095 = vmatpush.msra.mxu0 %v2069
    %2096 = vmatpush.msra.mxu0 %v2067
    %2097 = vmatpush.msra.mxu0 %v2065
    %2098 = vmatmul.f32.gmra.mxu0 %v2080
    %v2099 = vpop.f32.mrf.mxu0
    %v2100 = vadd.f32 %v2077, %v2099
    %2101 = vdwg.mxu0
    %2102 = vmatpush.msra.mxu0 0.0
    %2103 = vmatpush.msra.mxu0 0.0
    %2104 = vmatpush.msra.mxu0 0.0
    %2105 = vmatpush.msra.mxu0 0.0
    %2106 = vmatpush.msra.mxu0 0.0
    %2107 = vmatpush.msra.mxu0 0.0
    %2108 = vmatpush.msra.mxu0 0.0
    %2109 = vmatpush.msra.mxu0 0.0
    %2110 = vmatpush.msra.mxu0 0.0
    %2111 = vmatpush.msra.mxu0 0.0
    %2112 = vmatpush.msra.mxu0 0.0
    %2113 = vmatpush.msra.mxu0 0.0
    %2114 = vmatpush.msra.mxu0 0.0
    %2115 = vmatpush.msra.mxu0 0.0
    %2116 = vmatpush.msra.mxu0 0.0
    %2117 = vmatpush.msra.mxu0 %v2058
    %2118 = vmatmul.f32.gmra.mxu0 %v1700
    %v2119 = vpop.f32.mrf.mxu0
    %v2120 = vadd.f32 0.0, %v2119
    %2121 = vmatmul.f32.gmra.mxu0 %v1703
    %v2122 = vpop.f32.mrf.mxu0
    %v2123 = vadd.f32 0.0, %v2122
    %2124 = vmatmul.f32.gmra.mxu0 %v1706
    %v2125 = vpop.f32.mrf.mxu0
    %v2126 = vadd.f32 0.0, %v2125
    %2127 = vmatmul.f32.gmra.mxu0 %v1709
    %v2128 = vpop.f32.mrf.mxu0
    %v2129 = vadd.f32 0.0, %v2128
    %2130 = vdwg.mxu0
    %v2131 = vmul.f32 %v2120, %v1622
    %v2132 = vmul.f32 %v2123, %v1623
    %v2133 = vmul.f32 %v2126, %v1624
    %v2134 = vmul.f32 %v2129, %v1625
    %v2136 = vsel %vm786, %v2131, 0
    %v2139 = vsel %vm786, %v2132, 0
    %v2142 = vsel %vm786, %v2133, 0
    %v2145 = vsel %vm786, %v2134, 0
    %v2148 = vsel %vm786, %v2100, 0
    %2150 = vmatpush.xpose.msra.mxu0 0.0
    %2151 = vmatpush.xpose.msra.mxu0 0.0
    %2152 = vmatpush.xpose.msra.mxu0 0.0
    %2153 = vmatpush.xpose.msra.mxu0 0.0
    %2154 = vmatpush.xpose.msra.mxu0 0.0
    %2155 = vmatpush.xpose.msra.mxu0 0.0
    %2156 = vmatpush.xpose.msra.mxu0 0.0
    %2157 = vmatpush.xpose.msra.mxu0 0.0
    %2158 = vmatpush.xpose.msra.mxu0 0.0
    %2159 = vmatpush.xpose.msra.mxu0 0.0
    %2160 = vmatpush.xpose.msra.mxu0 0.0
    %2161 = vmatpush.xpose.msra.mxu0 0.0
    %2162 = vmatpush.xpose.msra.mxu0 0.0
    %2163 = vmatpush.xpose.msra.mxu0 0.0
    %2164 = vmatpush.xpose.msra.mxu0 0.0
    %2165 = vmatpush.xpose.msra.mxu0 %v2148
    %2166 = vmatmul.f32.gmra.mxu0 %v2136
    %v2167 = vpop.f32.mrf.mxu0
    %v2168 = vadd.f32 0.0, %v2167
    %2169 = vmatmul.f32.gmra.mxu0 %v2139
    %v2170 = vpop.f32.mrf.mxu0
    %v2171 = vadd.f32 0.0, %v2170
    %2172 = vmatmul.f32.gmra.mxu0 %v2142
    %v2173 = vpop.f32.mrf.mxu0
    %v2174 = vadd.f32 0.0, %v2173
    %2175 = vmatmul.f32.gmra.mxu0 %v2145
    %v2176 = vpop.f32.mrf.mxu0
    %v2177 = vadd.f32 0.0, %v2176
    %2178 = vdwg.mxu0
    %v2179 = vmul.f32 %v2168, 0.35355338
    %v2180 = vmul.f32 %v2171, 0.35355338
    %v2181 = vmul.f32 %v2174, 0.35355338
    %v2182 = vmul.f32 %v2177, 0.35355338
    %v2183 = vadd.f32 %v2179, %v1618
    %v2184 = vadd.f32 %v2180, %v1619
    %v2185 = vadd.f32 %v2181, %v1620
    %v2186 = vadd.f32 %v2182, %v1621
    %v2187 = vsel %vm810, %v2183, -inf
    %2188 = vmax.xlane.f32.xlu0 %v2187
    %v2189 = vpop.xlane.xlu0 %2188
    %v2190 = vsel %vm810, %v2184, -inf
    %2191 = vmax.xlane.f32.xlu0 %v2190
    %v2192 = vpop.xlane.xlu0 %2191
    %v2193 = vsel %vm810, %v2185, -inf
    %2194 = vmax.xlane.f32.xlu0 %v2193
    %v2195 = vpop.xlane.xlu0 %2194
    %v2196 = vsel %vm810, %v2186, -inf
    %2197 = vmax.xlane.f32.xlu0 %v2196
    %v2198 = vpop.xlane.xlu0 %2197
    %v2199 = vsub.f32 %v2183, %v2189
    %v2200 = vsub.f32 %v2184, %v2192
    %v2201 = vsub.f32 %v2185, %v2195
    %v2202 = vsub.f32 %v2186, %v2198
    %v2203 = vmul.f32 %v2199, 1.442695
    %v2204 = vpow.pop %v2203
    %v2205 = vmul.f32 %v2200, 1.442695
    %v2206 = vpow.pop %v2205
    %v2207 = vmul.f32 %v2201, 1.442695
    %v2208 = vpow.pop %v2207
    %v2209 = vmul.f32 %v2202, 1.442695
    %v2210 = vpow.pop %v2209
    %v2211 = vsel %vm810, %v2204, 0.0
    %2212 = vadd.xlane.f32.xlu0 %v2211
    %v2213 = vpop.xlane.xlu0 %2212
    %v2214 = vsel %vm810, %v2206, 0.0
    %2215 = vadd.xlane.f32.xlu0 %v2214
    %v2216 = vpop.xlane.xlu0 %2215
    %v2217 = vsel %vm810, %v2208, 0.0
    %2218 = vadd.xlane.f32.xlu0 %v2217
    %v2219 = vpop.xlane.xlu0 %2218
    %v2220 = vsel %vm810, %v2210, 0.0
    %2221 = vadd.xlane.f32.xlu0 %v2220
    %v2222 = vpop.xlane.xlu0 %2221
    %v2223 = vrcp.pop %v2213
    %v2224 = vmul.f32 %v2213, %v2223
    %v2225 = vsub.f32 1.0, %v2224
    %v2226 = vmul.f32 %v2223, %v2225
    %v2227 = vadd.f32 %v2223, %v2226
    %vm2228 = vweird.f32 %v2213
    %vm2229 = vweird.f32 %v2223
    %vm2230 = vmor %vm2228, %vm2229
    %v2231 = vsel %vm2230, %v2223, %v2227
    %v2232 = vand.u32 2147483647, %v2213
    %vm2233 = vcmp.eq.f32.partialorder %v2232, 8.507059e+37
    %v2234 = vand.u32 %v2213, 2147483648
    %v2235 = vor.u32 1.1754944e-38, %v2234
    %v2236 = vsel %vm2233, %v2235, %v2231
    %v2237 = vmul.f32 %v2204, %v2236
    %v2238 = vrcp.pop %v2216
    %v2239 = vmul.f32 %v2216, %v2238
    %v2240 = vsub.f32 1.0, %v2239
    %v2241 = vmul.f32 %v2238, %v2240
    %v2242 = vadd.f32 %v2238, %v2241
    %vm2243 = vweird.f32 %v2216
    %vm2244 = vweird.f32 %v2238
    %vm2245 = vmor %vm2243, %vm2244
    %v2246 = vsel %vm2245, %v2238, %v2242
    %v2247 = vand.u32 2147483647, %v2216
    %vm2248 = vcmp.eq.f32.partialorder %v2247, 8.507059e+37
    %v2249 = vand.u32 %v2216, 2147483648
    %v2250 = vor.u32 1.1754944e-38, %v2249
    %v2251 = vsel %vm2248, %v2250, %v2246
    %v2252 = vmul.f32 %v2206, %v2251
    %v2253 = vrcp.pop %v2219
    %v2254 = vmul.f32 %v2219, %v2253
    %v2255 = vsub.f32 1.0, %v2254
    %v2256 = vmul.f32 %v2253, %v2255
    %v2257 = vadd.f32 %v2253, %v2256
    %vm2258 = vweird.f32 %v2219
    %vm2259 = vweird.f32 %v2253
    %vm2260 = vmor %vm2258, %vm2259
    %v2261 = vsel %vm2260, %v2253, %v2257
    %v2262 = vand.u32 2147483647, %v2219
    %vm2263 = vcmp.eq.f32.partialorder %v2262, 8.507059e+37
    %v2264 = vand.u32 %v2219, 2147483648
    %v2265 = vor.u32 1.1754944e-38, %v2264
    %v2266 = vsel %vm2263, %v2265, %v2261
    %v2267 = vmul.f32 %v2208, %v2266
    %v2268 = vrcp.pop %v2222
    %v2269 = vmul.f32 %v2222, %v2268
    %v2270 = vsub.f32 1.0, %v2269
    %v2271 = vmul.f32 %v2268, %v2270
    %v2272 = vadd.f32 %v2268, %v2271
    %vm2273 = vweird.f32 %v2222
    %vm2274 = vweird.f32 %v2268
    %vm2275 = vmor %vm2273, %vm2274
    %v2276 = vsel %vm2275, %v2268, %v2272
    %v2277 = vand.u32 2147483647, %v2222
    %vm2278 = vcmp.eq.f32.partialorder %v2277, 8.507059e+37
    %v2279 = vand.u32 %v2222, 2147483648
    %v2280 = vor.u32 1.1754944e-38, %v2279
    %v2281 = vsel %vm2278, %v2280, %v2276
    %v2282 = vmul.f32 %v2210, %v2281
    %2283 = vrot.lane.b32.xlu0 %v2100, 96
    %v2284 = vpop.permute.xlu0 %2283
    %v2286 = vsel %vm810, %v2237, 0
    %v2289 = vsel %vm810, %v2252, 0
    %v2292 = vsel %vm810, %v2267, 0
    %v2295 = vsel %vm810, %v2282, 0
    %v2297 = vsel %vm820, %v2284, 0
    %2299 = vmatpush.msra.mxu0 0.0
    %2300 = vmatpush.msra.mxu0 0.0
    %2301 = vmatpush.msra.mxu0 0.0
    %2302 = vmatpush.msra.mxu0 0.0
    %2303 = vmatpush.msra.mxu0 0.0
    %2304 = vmatpush.msra.mxu0 0.0
    %2305 = vmatpush.msra.mxu0 0.0
    %2306 = vmatpush.msra.mxu0 0.0
    %2307 = vmatpush.msra.mxu0 0.0
    %2308 = vmatpush.msra.mxu0 0.0
    %2309 = vmatpush.msra.mxu0 0.0
    %2310 = vmatpush.msra.mxu0 0.0
    %2311 = vmatpush.msra.mxu0 0.0
    %2312 = vmatpush.msra.mxu0 0.0
    %2313 = vmatpush.msra.mxu0 0.0
    %2314 = vmatpush.msra.mxu0 %v2297
    %2315 = vmatmul.f32.gmra.mxu0 %v2286
    %v2316 = vpop.f32.mrf.mxu0
    %v2317 = vadd.f32 0.0, %v2316
    %2318 = vmatmul.f32.gmra.mxu0 %v2289
    %v2319 = vpop.f32.mrf.mxu0
    %v2320 = vadd.f32 0.0, %v2319
    %2321 = vmatmul.f32.gmra.mxu0 %v2292
    %v2322 = vpop.f32.mrf.mxu0
    %v2323 = vadd.f32 0.0, %v2322
    %2324 = vmatmul.f32.gmra.mxu0 %v2295
    %v2325 = vpop.f32.mrf.mxu0
    %v2326 = vadd.f32 0.0, %v2325
    %2327 = vdwg.mxu0
    %v2328 = vmul.f32 %v2317, %v1622
    %v2329 = vmul.f32 %v2320, %v1623
    %v2330 = vmul.f32 %v2323, %v1624
    %v2331 = vmul.f32 %v2326, %v1625
    %2332 = vmatpush.msra.mxu0 0.0
    %2333 = vmatpush.msra.mxu0 0.0
    %2334 = vmatpush.msra.mxu0 0.0
    %2335 = vmatpush.msra.mxu0 0.0
    %2336 = vmatpush.msra.mxu0 0.0
    %2337 = vmatpush.msra.mxu0 0.0
    %2338 = vmatpush.msra.mxu0 0.0
    %2339 = vmatpush.msra.mxu0 0.0
    %2340 = vmatpush.msra.mxu0 0.0
    %2341 = vmatpush.msra.mxu0 0.0
    %2342 = vmatpush.msra.mxu0 0.0
    %2343 = vmatpush.msra.mxu0 0.0
    %2344 = vmatpush.msra.mxu0 %v2331
    %2345 = vmatpush.msra.mxu0 %v2330
    %2346 = vmatpush.msra.mxu0 %v2329
    %2347 = vmatpush.msra.mxu0 %v2328
    %2348 = vmatmul.f32.gmra.mxu0 %v1943
    %v2349 = vpop.f32.mrf.mxu0
    %v2350 = vadd.f32 0.0, %v2349
    %2351 = vdwg.mxu0
    %v2353 = vperm.slane %v2033, 0
    %v2356 = vsel %vm786, %v2350, 0
    %2358 = vmatpush.msra.mxu0 0.0
    %2359 = vmatpush.msra.mxu0 0.0
    %2360 = vmatpush.msra.mxu0 0.0
    %2361 = vmatpush.msra.mxu0 0.0
    %2362 = vmatpush.msra.mxu0 0.0
    %2363 = vmatpush.msra.mxu0 0.0
    %2364 = vmatpush.msra.mxu0 0.0
    %2365 = vmatpush.msra.mxu0 0.0
    %2366 = vmatpush.msra.mxu0 0.0
    %2367 = vmatpush.msra.mxu0 0.0
    %2368 = vmatpush.msra.mxu0 0.0
    %2369 = vmatpush.msra.mxu0 0.0
    %2370 = vmatpush.msra.mxu0 %v2032
    %2371 = vmatpush.msra.mxu0 %v2031
    %2372 = vmatpush.msra.mxu0 %v2030
    %2373 = vmatpush.msra.mxu0 %v2029
    %2374 = vmatmul.f32.gmra.mxu0 %v2356
    %v2375 = vpop.f32.mrf.mxu0
    %v2376 = vadd.f32 %v2353, %v2375
    %2377 = vdwg.mxu0
    %v2378 = vadd.f32 %v1991, %v2376
    %v2379 = vld [vmem:[#allocation31] sm:$0x1]
    %v2380 = vld [vmem:[#allocation32] sm:$0x1]
    %v2381 = vsel %vm786, %v2378, 0.0
    %2382 = vadd.xlane.f32.xlu0 %v2381
    %v2383 = vpop.xlane.xlu0 %2382
    %v2384 = vmul.f32 %v2383, %v745
    %v2385 = vsub.f32 %v2378, %v2384
    %v2386 = vmul.f32 %v2385, %v2385
    %v2387 = vsel %vm786, %v2386, 0.0
    %2388 = vadd.xlane.f32.xlu0 %v2387
    %v2389 = vpop.xlane.xlu0 %2388
    %v2390 = vmul.f32 %v2389, %v745
    %v2391 = vadd.f32 %v2390, 1e-05
    %v2392 = vrsqrt.pop %v2391
    %v2393 = vmul.f32 %v2392, %v2391
    %v2394 = vmul.f32 %v2393, %v2392
    %v2395 = vmul.f32 0.5, %v2394
    %v2396 = vsub.f32 1.5, %v2395
    %v2397 = vmul.f32 %v2392, %v2396
    %vm2398 = vweird.f32 %v2391
    %vm2399 = vweird.f32 %v2392
    %vm2400 = vmor %vm2398, %vm2399
    %v2401 = vsel %vm2400, %v2392, %v2397
    %v2402 = vmul.f32 %v2385, %v2401
    %v2404 = vperm.slane %v2379, 0
    %v2406 = vmul.f32 %v2402, %v2404
    %v2408 = vperm.slane %v2380, 0
    %v2410 = vadd.f32 %v2406, %v2408
    %v2411 = vld [vmem:[#allocation34] sm:$0xff]
    %v2412 = vld [vmem:[#allocation34 + $0x8] sm:$0xff]
    %v2413 = vld [vmem:[#allocation34 + $0x10] sm:$0xff]
    %v2414 = vld [vmem:[#allocation34 + $0x18] sm:$0xff]
    %v2415 = vld [vmem:[#allocation35] sm:$0x1]
    %v2416 = vld [vmem:[%s59] sm:$0xff]
    %v2417 = vld [vmem:[%s59 + $0x8] sm:$0xff]
    %v2418 = vld [vmem:[%s59 + $0x10] sm:$0xff]
    %v2419 = vld [vmem:[%s59 + $0x18] sm:$0xff]
    %v2420 = vld [vmem:[%s59 + $0x20] sm:$0xff]
    %v2421 = vld [vmem:[%s59 + $0x28] sm:$0xff]
    %v2422 = vld [vmem:[%s59 + $0x30] sm:$0xff]
    %v2423 = vld [vmem:[%s59 + $0x38] sm:$0xff]
    %v2424 = vld [vmem:[#allocation37] sm:$0x1]
    %v2426 = vperm.slane %v2415, 0
    %v2429 = vsel %vm786, %v2410, 0
    %2431 = vmatpush.msra.mxu0 0.0
    %2432 = vmatpush.msra.mxu0 0.0
    %2433 = vmatpush.msra.mxu0 0.0
    %2434 = vmatpush.msra.mxu0 0.0
    %2435 = vmatpush.msra.mxu0 0.0
    %2436 = vmatpush.msra.mxu0 0.0
    %2437 = vmatpush.msra.mxu0 0.0
    %2438 = vmatpush.msra.mxu0 0.0
    %2439 = vmatpush.msra.mxu0 0.0
    %2440 = vmatpush.msra.mxu0 0.0
    %2441 = vmatpush.msra.mxu0 0.0
    %2442 = vmatpush.msra.mxu0 0.0
    %2443 = vmatpush.msra.mxu0 %v2414
    %2444 = vmatpush.msra.mxu0 %v2413
    %2445 = vmatpush.msra.mxu0 %v2412
    %2446 = vmatpush.msra.mxu0 %v2411
    %2447 = vmatmul.f32.gmra.mxu0 %v2429
    %v2448 = vpop.f32.mrf.mxu0
    %v2449 = vadd.f32 %v2426, %v2448
    %2450 = vdwg.mxu0
    %v2451 = vmax.f32 %v2449, 0.0
    %v2453 = vperm.slane %v2424, 0
    %v2456 = vsel %vm1139, %v2451, 0
    %2458 = vmatpush.msra.mxu0 0.0
    %2459 = vmatpush.msra.mxu0 0.0
    %2460 = vmatpush.msra.mxu0 0.0
    %2461 = vmatpush.msra.mxu0 0.0
    %2462 = vmatpush.msra.mxu0 0.0
    %2463 = vmatpush.msra.mxu0 0.0
    %2464 = vmatpush.msra.mxu0 0.0
    %2465 = vmatpush.msra.mxu0 0.0
    %2466 = vmatpush.msra.mxu0 %v2423
    %2467 = vmatpush.msra.mxu0 %v2422
    %2468 = vmatpush.msra.mxu0 %v2421
    %2469 = vmatpush.msra.mxu0 %v2420
    %2470 = vmatpush.msra.mxu0 %v2419
    %2471 = vmatpush.msra.mxu0 %v2418
    %2472 = vmatpush.msra.mxu0 %v2417
    %2473 = vmatpush.msra.mxu0 %v2416
    %2474 = vmatmul.f32.gmra.mxu0 %v2456
    %v2475 = vpop.f32.mrf.mxu0
    %v2476 = vadd.f32 %v2453, %v2475
    %2477 = vdwg.mxu0
    %v2478 = vadd.f32 %v2378, %v2476
    %s2479 = scalar_lea.vmem [#allocation16], 1
    %v2480 = vld [vmem:[%s2479] sm:$0x1]
    %s2481 = scalar_lea.vmem [#allocation17], 1
    %v2482 = vld [vmem:[%s2481] sm:$0x1]
    %v2483 = vsel %vm786, %v2478, 0.0
    %2484 = vadd.xlane.f32.xlu0 %v2483
    %v2485 = vpop.xlane.xlu0 %2484
    %v2486 = vmul.f32 %v2485, %v745
    %v2487 = vsub.f32 %v2478, %v2486
    %v2488 = vmul.f32 %v2487, %v2487
    %v2489 = vsel %vm786, %v2488, 0.0
    %2490 = vadd.xlane.f32.xlu0 %v2489
    %v2491 = vpop.xlane.xlu0 %2490
    %v2492 = vmul.f32 %v2491, %v745
    %v2493 = vadd.f32 %v2492, 1e-05
    %v2494 = vrsqrt.pop %v2493
    %v2495 = vmul.f32 %v2494, %v2493
    %v2496 = vmul.f32 %v2495, %v2494
    %v2497 = vmul.f32 0.5, %v2496
    %v2498 = vsub.f32 1.5, %v2497
    %v2499 = vmul.f32 %v2494, %v2498
    %vm2500 = vweird.f32 %v2493
    %vm2501 = vweird.f32 %v2494
    %vm2502 = vmor %vm2500, %vm2501
    %v2503 = vsel %vm2502, %v2494, %v2499
    %v2504 = vmul.f32 %v2487, %v2503
    %v2506 = vperm.slane %v2480, 0
    %v2508 = vmul.f32 %v2504, %v2506
    %v2510 = vperm.slane %v2482, 0
    %v2512 = vadd.f32 %v2508, %v2510
    %s2513 = scalar_lea.vmem %s31, 32
    %v2514 = vld [vmem:[%s2513] sm:$0xff]
    %v2515 = vld [vmem:[%s2513 + $0x8] sm:$0xff]
    %v2516 = vld [vmem:[%s2513 + $0x10] sm:$0xff]
    %v2517 = vld [vmem:[%s2513 + $0x18] sm:$0xff]
    %s2518 = scalar_lea.vmem [#allocation19], 1
    %v2519 = vld [vmem:[%s2518] sm:$0x1]
    %s2520 = scalar_lea.vmem %s35, 32
    %v2521 = vld [vmem:[%s2520] sm:$0xff]
    %v2522 = vld [vmem:[%s2520 + $0x8] sm:$0xff]
    %v2523 = vld [vmem:[%s2520 + $0x10] sm:$0xff]
    %v2524 = vld [vmem:[%s2520 + $0x18] sm:$0xff]
    %s2525 = scalar_lea.vmem [#allocation20], 1
    %v2526 = vld [vmem:[%s2525] sm:$0x1]
    %v2528 = vperm.slane %v2519, 0
    %v2531 = vsel %vm786, %v2512, 0
    %2533 = vmatpush.msra.mxu0 0.0
    %2534 = vmatpush.msra.mxu0 0.0
    %2535 = vmatpush.msra.mxu0 0.0
    %2536 = vmatpush.msra.mxu0 0.0
    %2537 = vmatpush.msra.mxu0 0.0
    %2538 = vmatpush.msra.mxu0 0.0
    %2539 = vmatpush.msra.mxu0 0.0
    %2540 = vmatpush.msra.mxu0 0.0
    %2541 = vmatpush.msra.mxu0 0.0
    %2542 = vmatpush.msra.mxu0 0.0
    %2543 = vmatpush.msra.mxu0 0.0
    %2544 = vmatpush.msra.mxu0 0.0
    %2545 = vmatpush.msra.mxu0 %v2517
    %2546 = vmatpush.msra.mxu0 %v2516
    %2547 = vmatpush.msra.mxu0 %v2515
    %2548 = vmatpush.msra.mxu0 %v2514
    %2549 = vmatmul.f32.gmra.mxu0 %v2531
    %v2550 = vpop.f32.mrf.mxu0
    %v2551 = vadd.f32 %v2528, %v2550
    %2552 = vdwg.mxu0
    %2553 = vmatpush.msra.mxu0 0.0
    %2554 = vmatpush.msra.mxu0 0.0
    %2555 = vmatpush.msra.mxu0 0.0
    %2556 = vmatpush.msra.mxu0 0.0
    %2557 = vmatpush.msra.mxu0 0.0
    %2558 = vmatpush.msra.mxu0 0.0
    %2559 = vmatpush.msra.mxu0 0.0
    %2560 = vmatpush.msra.mxu0 0.0
    %2561 = vmatpush.msra.mxu0 0.0
    %2562 = vmatpush.msra.mxu0 0.0
    %2563 = vmatpush.msra.mxu0 0.0
    %2564 = vmatpush.msra.mxu0 0.0
    %2565 = vmatpush.msra.mxu0 0.0
    %2566 = vmatpush.msra.mxu0 0.0
    %2567 = vmatpush.msra.mxu0 0.0
    %2568 = vmatpush.msra.mxu0 %v2551
    %2569 = vmatmul.f32.gmra.mxu0 %v1700
    %v2570 = vpop.f32.mrf.mxu0
    %v2571 = vadd.f32 0.0, %v2570
    %2572 = vmatmul.f32.gmra.mxu0 %v1703
    %v2573 = vpop.f32.mrf.mxu0
    %v2574 = vadd.f32 0.0, %v2573
    %2575 = vmatmul.f32.gmra.mxu0 %v1706
    %v2576 = vpop.f32.mrf.mxu0
    %v2577 = vadd.f32 0.0, %v2576
    %2578 = vmatmul.f32.gmra.mxu0 %v1709
    %v2579 = vpop.f32.mrf.mxu0
    %v2580 = vadd.f32 0.0, %v2579
    %2581 = vdwg.mxu0
    %v2582 = vmul.f32 %v2571, %v1622
    %v2583 = vmul.f32 %v2574, %v1623
    %v2584 = vmul.f32 %v2577, %v1624
    %v2585 = vmul.f32 %v2580, %v1625
    %2587 = vrot.lane.b32.xlu0 %v2551, 96
    %v2588 = vpop.permute.xlu0 %2587
    %v2590 = vsel %vm786, %v2582, 0
    %v2593 = vsel %vm786, %v2583, 0
    %v2596 = vsel %vm786, %v2584, 0
    %v2599 = vsel %vm786, %v2585, 0
    %v2601 = vsel %vm786, %v2588, 0
    %2603 = vmatpush.xpose.msra.mxu0 0.0
    %2604 = vmatpush.xpose.msra.mxu0 0.0
    %2605 = vmatpush.xpose.msra.mxu0 0.0
    %2606 = vmatpush.xpose.msra.mxu0 0.0
    %2607 = vmatpush.xpose.msra.mxu0 0.0
    %2608 = vmatpush.xpose.msra.mxu0 0.0
    %2609 = vmatpush.xpose.msra.mxu0 0.0
    %2610 = vmatpush.xpose.msra.mxu0 0.0
    %2611 = vmatpush.xpose.msra.mxu0 0.0
    %2612 = vmatpush.xpose.msra.mxu0 0.0
    %2613 = vmatpush.xpose.msra.mxu0 0.0
    %2614 = vmatpush.xpose.msra.mxu0 0.0
    %2615 = vmatpush.xpose.msra.mxu0 0.0
    %2616 = vmatpush.xpose.msra.mxu0 0.0
    %2617 = vmatpush.xpose.msra.mxu0 0.0
    %2618 = vmatpush.xpose.msra.mxu0 %v2601
    %2619 = vmatmul.f32.gmra.mxu0 %v2590
    %v2620 = vpop.f32.mrf.mxu0
    %v2621 = vadd.f32 0.0, %v2620
    %2622 = vmatmul.f32.gmra.mxu0 %v2593
    %v2623 = vpop.f32.mrf.mxu0
    %v2624 = vadd.f32 0.0, %v2623
    %2625 = vmatmul.f32.gmra.mxu0 %v2596
    %v2626 = vpop.f32.mrf.mxu0
    %v2627 = vadd.f32 0.0, %v2626
    %2628 = vmatmul.f32.gmra.mxu0 %v2599
    %v2629 = vpop.f32.mrf.mxu0
    %v2630 = vadd.f32 0.0, %v2629
    %2631 = vdwg.mxu0
    %v2632 = vmul.f32 %v2621, 0.35355338
    %v2633 = vmul.f32 %v2624, 0.35355338
    %v2634 = vmul.f32 %v2627, 0.35355338
    %v2635 = vmul.f32 %v2630, 0.35355338
    %v2636 = vadd.f32 %v2632, %v1614
    %v2637 = vadd.f32 %v2633, %v1615
    %v2638 = vadd.f32 %v2634, %v1616
    %v2639 = vadd.f32 %v2635, %v1617
    %v2640 = vsel %vm1698, %v2636, -inf
    %2641 = vmax.xlane.f32.xlu0 %v2640
    %v2642 = vpop.xlane.xlu0 %2641
    %v2643 = vsel %vm1698, %v2637, -inf
    %2644 = vmax.xlane.f32.xlu0 %v2643
    %v2645 = vpop.xlane.xlu0 %2644
    %v2646 = vsel %vm1698, %v2638, -inf
    %2647 = vmax.xlane.f32.xlu0 %v2646
    %v2648 = vpop.xlane.xlu0 %2647
    %v2649 = vsel %vm1698, %v2639, -inf
    %2650 = vmax.xlane.f32.xlu0 %v2649
    %v2651 = vpop.xlane.xlu0 %2650
    %v2652 = vsub.f32 %v2636, %v2642
    %v2653 = vsub.f32 %v2637, %v2645
    %v2654 = vsub.f32 %v2638, %v2648
    %v2655 = vsub.f32 %v2639, %v2651
    %v2656 = vmul.f32 %v2652, 1.442695
    %v2657 = vpow.pop %v2656
    %v2658 = vmul.f32 %v2653, 1.442695
    %v2659 = vpow.pop %v2658
    %v2660 = vmul.f32 %v2654, 1.442695
    %v2661 = vpow.pop %v2660
    %v2662 = vmul.f32 %v2655, 1.442695
    %v2663 = vpow.pop %v2662
    %v2664 = vsel %vm1698, %v2657, 0.0
    %2665 = vadd.xlane.f32.xlu0 %v2664
    %v2666 = vpop.xlane.xlu0 %2665
    %v2667 = vsel %vm1698, %v2659, 0.0
    %2668 = vadd.xlane.f32.xlu0 %v2667
    %v2669 = vpop.xlane.xlu0 %2668
    %v2670 = vsel %vm1698, %v2661, 0.0
    %2671 = vadd.xlane.f32.xlu0 %v2670
    %v2672 = vpop.xlane.xlu0 %2671
    %v2673 = vsel %vm1698, %v2663, 0.0
    %2674 = vadd.xlane.f32.xlu0 %v2673
    %v2675 = vpop.xlane.xlu0 %2674
    %v2676 = vrcp.pop %v2666
    %v2677 = vmul.f32 %v2666, %v2676
    %v2678 = vsub.f32 1.0, %v2677
    %v2679 = vmul.f32 %v2676, %v2678
    %v2680 = vadd.f32 %v2676, %v2679
    %vm2681 = vweird.f32 %v2666
    %vm2682 = vweird.f32 %v2676
    %vm2683 = vmor %vm2681, %vm2682
    %v2684 = vsel %vm2683, %v2676, %v2680
    %v2685 = vand.u32 2147483647, %v2666
    %vm2686 = vcmp.eq.f32.partialorder %v2685, 8.507059e+37
    %v2687 = vand.u32 %v2666, 2147483648
    %v2688 = vor.u32 1.1754944e-38, %v2687
    %v2689 = vsel %vm2686, %v2688, %v2684
    %v2690 = vmul.f32 %v2657, %v2689
    %v2691 = vrcp.pop %v2669
    %v2692 = vmul.f32 %v2669, %v2691
    %v2693 = vsub.f32 1.0, %v2692
    %v2694 = vmul.f32 %v2691, %v2693
    %v2695 = vadd.f32 %v2691, %v2694
    %vm2696 = vweird.f32 %v2669
    %vm2697 = vweird.f32 %v2691
    %vm2698 = vmor %vm2696, %vm2697
    %v2699 = vsel %vm2698, %v2691, %v2695
    %v2700 = vand.u32 2147483647, %v2669
    %vm2701 = vcmp.eq.f32.partialorder %v2700, 8.507059e+37
    %v2702 = vand.u32 %v2669, 2147483648
    %v2703 = vor.u32 1.1754944e-38, %v2702
    %v2704 = vsel %vm2701, %v2703, %v2699
    %v2705 = vmul.f32 %v2659, %v2704
    %v2706 = vrcp.pop %v2672
    %v2707 = vmul.f32 %v2672, %v2706
    %v2708 = vsub.f32 1.0, %v2707
    %v2709 = vmul.f32 %v2706, %v2708
    %v2710 = vadd.f32 %v2706, %v2709
    %vm2711 = vweird.f32 %v2672
    %vm2712 = vweird.f32 %v2706
    %vm2713 = vmor %vm2711, %vm2712
    %v2714 = vsel %vm2713, %v2706, %v2710
    %v2715 = vand.u32 2147483647, %v2672
    %vm2716 = vcmp.eq.f32.partialorder %v2715, 8.507059e+37
    %v2717 = vand.u32 %v2672, 2147483648
    %v2718 = vor.u32 1.1754944e-38, %v2717
    %v2719 = vsel %vm2716, %v2718, %v2714
    %v2720 = vmul.f32 %v2661, %v2719
    %v2721 = vrcp.pop %v2675
    %v2722 = vmul.f32 %v2675, %v2721
    %v2723 = vsub.f32 1.0, %v2722
    %v2724 = vmul.f32 %v2721, %v2723
    %v2725 = vadd.f32 %v2721, %v2724
    %vm2726 = vweird.f32 %v2675
    %vm2727 = vweird.f32 %v2721
    %vm2728 = vmor %vm2726, %vm2727
    %v2729 = vsel %vm2728, %v2721, %v2725
    %v2730 = vand.u32 2147483647, %v2675
    %vm2731 = vcmp.eq.f32.partialorder %v2730, 8.507059e+37
    %v2732 = vand.u32 %v2675, 2147483648
    %v2733 = vor.u32 1.1754944e-38, %v2732
    %v2734 = vsel %vm2731, %v2733, %v2729
    %v2735 = vmul.f32 %v2663, %v2734
    %2736 = vrot.lane.b32.xlu0 %v2551, 64
    %v2737 = vpop.permute.xlu0 %2736
    %v2740 = vsel %vm1698, %v2690, 0
    %v2743 = vsel %vm1698, %v2705, 0
    %v2746 = vsel %vm1698, %v2720, 0
    %v2749 = vsel %vm1698, %v2735, 0
    %2751 = vmatpush.msra.mxu0 0.0
    %2752 = vmatpush.msra.mxu0 0.0
    %2753 = vmatpush.msra.mxu0 0.0
    %2754 = vmatpush.msra.mxu0 0.0
    %2755 = vmatpush.msra.mxu0 0.0
    %2756 = vmatpush.msra.mxu0 0.0
    %2757 = vmatpush.msra.mxu0 0.0
    %2758 = vmatpush.msra.mxu0 0.0
    %2759 = vmatpush.msra.mxu0 0.0
    %2760 = vmatpush.msra.mxu0 0.0
    %2761 = vmatpush.msra.mxu0 0.0
    %2762 = vmatpush.msra.mxu0 0.0
    %2763 = vmatpush.msra.mxu0 0.0
    %2764 = vmatpush.msra.mxu0 0.0
    %2765 = vmatpush.msra.mxu0 0.0
    %2766 = vmatpush.msra.mxu0 %v2737
    %2767 = vmatmul.f32.gmra.mxu0 %v2740
    %v2768 = vpop.f32.mrf.mxu0
    %v2769 = vadd.f32 0.0, %v2768
    %2770 = vmatmul.f32.gmra.mxu0 %v2743
    %v2771 = vpop.f32.mrf.mxu0
    %v2772 = vadd.f32 0.0, %v2771
    %2773 = vmatmul.f32.gmra.mxu0 %v2746
    %v2774 = vpop.f32.mrf.mxu0
    %v2775 = vadd.f32 0.0, %v2774
    %2776 = vmatmul.f32.gmra.mxu0 %v2749
    %v2777 = vpop.f32.mrf.mxu0
    %v2778 = vadd.f32 0.0, %v2777
    %2779 = vdwg.mxu0
    %v2780 = vmul.f32 %v2769, %v1622
    %v2781 = vmul.f32 %v2772, %v1623
    %v2782 = vmul.f32 %v2775, %v1624
    %v2783 = vmul.f32 %v2778, %v1625
    %2784 = vmatpush.msra.mxu0 0.0
    %2785 = vmatpush.msra.mxu0 0.0
    %2786 = vmatpush.msra.mxu0 0.0
    %2787 = vmatpush.msra.mxu0 0.0
    %2788 = vmatpush.msra.mxu0 0.0
    %2789 = vmatpush.msra.mxu0 0.0
    %2790 = vmatpush.msra.mxu0 0.0
    %2791 = vmatpush.msra.mxu0 0.0
    %2792 = vmatpush.msra.mxu0 0.0
    %2793 = vmatpush.msra.mxu0 0.0
    %2794 = vmatpush.msra.mxu0 0.0
    %2795 = vmatpush.msra.mxu0 0.0
    %2796 = vmatpush.msra.mxu0 %v2783
    %2797 = vmatpush.msra.mxu0 %v2782
    %2798 = vmatpush.msra.mxu0 %v2781
    %2799 = vmatpush.msra.mxu0 %v2780
    %2800 = vmatmul.f32.gmra.mxu0 %v1943
    %v2801 = vpop.f32.mrf.mxu0
    %v2802 = vadd.f32 0.0, %v2801
    %2803 = vdwg.mxu0
    %v2805 = vperm.slane %v2526, 0
    %v2808 = vsel %vm786, %v2802, 0
    %2810 = vmatpush.msra.mxu0 0.0
    %2811 = vmatpush.msra.mxu0 0.0
    %2812 = vmatpush.msra.mxu0 0.0
    %2813 = vmatpush.msra.mxu0 0.0
    %2814 = vmatpush.msra.mxu0 0.0
    %2815 = vmatpush.msra.mxu0 0.0
    %2816 = vmatpush.msra.mxu0 0.0
    %2817 = vmatpush.msra.mxu0 0.0
    %2818 = vmatpush.msra.mxu0 0.0
    %2819 = vmatpush.msra.mxu0 0.0
    %2820 = vmatpush.msra.mxu0 0.0
    %2821 = vmatpush.msra.mxu0 0.0
    %2822 = vmatpush.msra.mxu0 %v2524
    %2823 = vmatpush.msra.mxu0 %v2523
    %2824 = vmatpush.msra.mxu0 %v2522
    %2825 = vmatpush.msra.mxu0 %v2521
    %2826 = vmatmul.f32.gmra.mxu0 %v2808
    %v2827 = vpop.f32.mrf.mxu0
    %v2828 = vadd.f32 %v2805, %v2827
    %2829 = vdwg.mxu0
    %v2830 = vadd.f32 %v2478, %v2828
    %s2831 = scalar_lea.vmem [#allocation22], 1
    %v2832 = vld [vmem:[%s2831] sm:$0x1]
    %s2833 = scalar_lea.vmem [#allocation23], 1
    %v2834 = vld [vmem:[%s2833] sm:$0x1]
    %v2835 = vsel %vm786, %v2830, 0.0
    %2836 = vadd.xlane.f32.xlu0 %v2835
    %v2837 = vpop.xlane.xlu0 %2836
    %v2838 = vmul.f32 %v2837, %v745
    %v2839 = vsub.f32 %v2830, %v2838
    %v2840 = vmul.f32 %v2839, %v2839
    %v2841 = vsel %vm786, %v2840, 0.0
    %2842 = vadd.xlane.f32.xlu0 %v2841
    %v2843 = vpop.xlane.xlu0 %2842
    %v2844 = vmul.f32 %v2843, %v745
    %v2845 = vadd.f32 %v2844, 1e-05
    %v2846 = vrsqrt.pop %v2845
    %v2847 = vmul.f32 %v2846, %v2845
    %v2848 = vmul.f32 %v2847, %v2846
    %v2849 = vmul.f32 0.5, %v2848
    %v2850 = vsub.f32 1.5, %v2849
    %v2851 = vmul.f32 %v2846, %v2850
    %vm2852 = vweird.f32 %v2845
    %vm2853 = vweird.f32 %v2846
    %vm2854 = vmor %vm2852, %vm2853
    %v2855 = vsel %vm2854, %v2846, %v2851
    %v2856 = vmul.f32 %v2839, %v2855
    %v2858 = vperm.slane %v2832, 0
    %v2860 = vmul.f32 %v2856, %v2858
    %v2862 = vperm.slane %v2834, 0
    %v2864 = vadd.f32 %v2860, %v2862
    %s2865 = scalar_lea.vmem [#allocation25], 32
    %v2866 = vld [vmem:[%s2865] sm:$0xff]
    %v2867 = vld [vmem:[%s2865 + $0x8] sm:$0xff]
    %v2868 = vld [vmem:[%s2865 + $0x10] sm:$0xff]
    %v2869 = vld [vmem:[%s2865 + $0x18] sm:$0xff]
    %s2870 = scalar_lea.vmem [#allocation26], 1
    %v2871 = vld [vmem:[%s2870] sm:$0x1]
    %s2872 = scalar_lea.vmem [#allocation28], 32
    %v2873 = vld [vmem:[%s2872] sm:$0xff]
    %v2874 = vld [vmem:[%s2872 + $0x8] sm:$0xff]
    %v2875 = vld [vmem:[%s2872 + $0x10] sm:$0xff]
    %v2876 = vld [vmem:[%s2872 + $0x18] sm:$0xff]
    %s2877 = scalar_lea.vmem [#allocation29], 1
    %v2878 = vld [vmem:[%s2877] sm:$0x1]
    %v2880 = vperm.slane %v2871, 0
    %v2883 = vsel %vm786, %v2864, 0
    %2885 = vmatpush.msra.mxu0 0.0
    %2886 = vmatpush.msra.mxu0 0.0
    %2887 = vmatpush.msra.mxu0 0.0
    %2888 = vmatpush.msra.mxu0 0.0
    %2889 = vmatpush.msra.mxu0 0.0
    %2890 = vmatpush.msra.mxu0 0.0
    %2891 = vmatpush.msra.mxu0 0.0
    %2892 = vmatpush.msra.mxu0 0.0
    %2893 = vmatpush.msra.mxu0 0.0
    %2894 = vmatpush.msra.mxu0 0.0
    %2895 = vmatpush.msra.mxu0 0.0
    %2896 = vmatpush.msra.mxu0 0.0
    %2897 = vmatpush.msra.mxu0 %v2869
    %2898 = vmatpush.msra.mxu0 %v2868
    %2899 = vmatpush.msra.mxu0 %v2867
    %2900 = vmatpush.msra.mxu0 %v2866
    %2901 = vmatmul.f32.gmra.mxu0 %v2883
    %v2902 = vpop.f32.mrf.mxu0
    %v2903 = vadd.f32 %v2880, %v2902
    %2904 = vdwg.mxu0
    %2909 = vrot.lane.b32.xlu0 %v2866, 96
    %v2910 = vpop.permute.xlu0 %2909
    %2911 = vrot.lane.b32.xlu0 %v2867, 96
    %v2912 = vpop.permute.xlu0 %2911
    %2913 = vrot.lane.b32.xlu0 %v2868, 96
    %v2914 = vpop.permute.xlu0 %2913
    %2915 = vrot.lane.b32.xlu0 %v2869, 96
    %v2916 = vpop.permute.xlu0 %2915
    %2921 = vrot.lane.b32.xlu0 %v2880, 96
    %v2922 = vpop.permute.xlu0 %2921
    %2924 = vmatpush.msra.mxu0 0.0
    %2925 = vmatpush.msra.mxu0 0.0
    %2926 = vmatpush.msra.mxu0 0.0
    %2927 = vmatpush.msra.mxu0 0.0
    %2928 = vmatpush.msra.mxu0 0.0
    %2929 = vmatpush.msra.mxu0 0.0
    %2930 = vmatpush.msra.mxu0 0.0
    %2931 = vmatpush.msra.mxu0 0.0
    %2932 = vmatpush.msra.mxu0 0.0
    %2933 = vmatpush.msra.mxu0 0.0
    %2934 = vmatpush.msra.mxu0 0.0
    %2935 = vmatpush.msra.mxu0 0.0
    %2936 = vmatpush.msra.mxu0 %v2916
    %2937 = vmatpush.msra.mxu0 %v2914
    %2938 = vmatpush.msra.mxu0 %v2912
    %2939 = vmatpush.msra.mxu0 %v2910
    %2940 = vmatmul.f32.gmra.mxu0 %v2080
    %v2941 = vpop.f32.mrf.mxu0
    %v2942 = vadd.f32 %v2922, %v2941
    %2943 = vdwg.mxu0
    %2944 = vmatpush.msra.mxu0 0.0
    %2945 = vmatpush.msra.mxu0 0.0
    %2946 = vmatpush.msra.mxu0 0.0
    %2947 = vmatpush.msra.mxu0 0.0
    %2948 = vmatpush.msra.mxu0 0.0
    %2949 = vmatpush.msra.mxu0 0.0
    %2950 = vmatpush.msra.mxu0 0.0
    %2951 = vmatpush.msra.mxu0 0.0
    %2952 = vmatpush.msra.mxu0 0.0
    %2953 = vmatpush.msra.mxu0 0.0
    %2954 = vmatpush.msra.mxu0 0.0
    %2955 = vmatpush.msra.mxu0 0.0
    %2956 = vmatpush.msra.mxu0 0.0
    %2957 = vmatpush.msra.mxu0 0.0
    %2958 = vmatpush.msra.mxu0 0.0
    %2959 = vmatpush.msra.mxu0 %v2903
    %2960 = vmatmul.f32.gmra.mxu0 %v1700
    %v2961 = vpop.f32.mrf.mxu0
    %v2962 = vadd.f32 0.0, %v2961
    %2963 = vmatmul.f32.gmra.mxu0 %v1703
    %v2964 = vpop.f32.mrf.mxu0
    %v2965 = vadd.f32 0.0, %v2964
    %2966 = vmatmul.f32.gmra.mxu0 %v1706
    %v2967 = vpop.f32.mrf.mxu0
    %v2968 = vadd.f32 0.0, %v2967
    %2969 = vmatmul.f32.gmra.mxu0 %v1709
    %v2970 = vpop.f32.mrf.mxu0
    %v2971 = vadd.f32 0.0, %v2970
    %2972 = vdwg.mxu0
    %v2973 = vmul.f32 %v2962, %v1622
    %v2974 = vmul.f32 %v2965, %v1623
    %v2975 = vmul.f32 %v2968, %v1624
    %v2976 = vmul.f32 %v2971, %v1625
    %v2978 = vsel %vm786, %v2973, 0
    %v2981 = vsel %vm786, %v2974, 0
    %v2984 = vsel %vm786, %v2975, 0
    %v2987 = vsel %vm786, %v2976, 0
    %v2990 = vsel %vm786, %v2942, 0
    %2992 = vmatpush.xpose.msra.mxu0 0.0
    %2993 = vmatpush.xpose.msra.mxu0 0.0
    %2994 = vmatpush.xpose.msra.mxu0 0.0
    %2995 = vmatpush.xpose.msra.mxu0 0.0
    %2996 = vmatpush.xpose.msra.mxu0 0.0
    %2997 = vmatpush.xpose.msra.mxu0 0.0
    %2998 = vmatpush.xpose.msra.mxu0 0.0
    %2999 = vmatpush.xpose.msra.mxu0 0.0
    %3000 = vmatpush.xpose.msra.mxu0 0.0
    %3001 = vmatpush.xpose.msra.mxu0 0.0
    %3002 = vmatpush.xpose.msra.mxu0 0.0
    %3003 = vmatpush.xpose.msra.mxu0 0.0
    %3004 = vmatpush.xpose.msra.mxu0 0.0
    %3005 = vmatpush.xpose.msra.mxu0 0.0
    %3006 = vmatpush.xpose.msra.mxu0 0.0
    %3007 = vmatpush.xpose.msra.mxu0 %v2990
    %3008 = vmatmul.f32.gmra.mxu0 %v2978
    %v3009 = vpop.f32.mrf.mxu0
    %v3010 = vadd.f32 0.0, %v3009
    %3011 = vmatmul.f32.gmra.mxu0 %v2981
    %v3012 = vpop.f32.mrf.mxu0
    %v3013 = vadd.f32 0.0, %v3012
    %3014 = vmatmul.f32.gmra.mxu0 %v2984
    %v3015 = vpop.f32.mrf.mxu0
    %v3016 = vadd.f32 0.0, %v3015
    %3017 = vmatmul.f32.gmra.mxu0 %v2987
    %v3018 = vpop.f32.mrf.mxu0
    %v3019 = vadd.f32 0.0, %v3018
    %3020 = vdwg.mxu0
    %v3021 = vmul.f32 %v3010, 0.35355338
    %v3022 = vmul.f32 %v3013, 0.35355338
    %v3023 = vmul.f32 %v3016, 0.35355338
    %v3024 = vmul.f32 %v3019, 0.35355338
    %v3025 = vadd.f32 %v3021, %v1618
    %v3026 = vadd.f32 %v3022, %v1619
    %v3027 = vadd.f32 %v3023, %v1620
    %v3028 = vadd.f32 %v3024, %v1621
    %v3029 = vsel %vm810, %v3025, -inf
    %3030 = vmax.xlane.f32.xlu0 %v3029
    %v3031 = vpop.xlane.xlu0 %3030
    %v3032 = vsel %vm810, %v3026, -inf
    %3033 = vmax.xlane.f32.xlu0 %v3032
    %v3034 = vpop.xlane.xlu0 %3033
    %v3035 = vsel %vm810, %v3027, -inf
    %3036 = vmax.xlane.f32.xlu0 %v3035
    %v3037 = vpop.xlane.xlu0 %3036
    %v3038 = vsel %vm810, %v3028, -inf
    %3039 = vmax.xlane.f32.xlu0 %v3038
    %v3040 = vpop.xlane.xlu0 %3039
    %v3041 = vsub.f32 %v3025, %v3031
    %v3042 = vsub.f32 %v3026, %v3034
    %v3043 = vsub.f32 %v3027, %v3037
    %v3044 = vsub.f32 %v3028, %v3040
    %v3045 = vmul.f32 %v3041, 1.442695
    %v3046 = vpow.pop %v3045
    %v3047 = vmul.f32 %v3042, 1.442695
    %v3048 = vpow.pop %v3047
    %v3049 = vmul.f32 %v3043, 1.442695
    %v3050 = vpow.pop %v3049
    %v3051 = vmul.f32 %v3044, 1.442695
    %v3052 = vpow.pop %v3051
    %v3053 = vsel %vm810, %v3046, 0.0
    %3054 = vadd.xlane.f32.xlu0 %v3053
    %v3055 = vpop.xlane.xlu0 %3054
    %v3056 = vsel %vm810, %v3048, 0.0
    %3057 = vadd.xlane.f32.xlu0 %v3056
    %v3058 = vpop.xlane.xlu0 %3057
    %v3059 = vsel %vm810, %v3050, 0.0
    %3060 = vadd.xlane.f32.xlu0 %v3059
    %v3061 = vpop.xlane.xlu0 %3060
    %v3062 = vsel %vm810, %v3052, 0.0
    %3063 = vadd.xlane.f32.xlu0 %v3062
    %v3064 = vpop.xlane.xlu0 %3063
    %v3065 = vrcp.pop %v3055
    %v3066 = vmul.f32 %v3055, %v3065
    %v3067 = vsub.f32 1.0, %v3066
    %v3068 = vmul.f32 %v3065, %v3067
    %v3069 = vadd.f32 %v3065, %v3068
    %vm3070 = vweird.f32 %v3055
    %vm3071 = vweird.f32 %v3065
    %vm3072 = vmor %vm3070, %vm3071
    %v3073 = vsel %vm3072, %v3065, %v3069
    %v3074 = vand.u32 2147483647, %v3055
    %vm3075 = vcmp.eq.f32.partialorder %v3074, 8.507059e+37
    %v3076 = vand.u32 %v3055, 2147483648
    %v3077 = vor.u32 1.1754944e-38, %v3076
    %v3078 = vsel %vm3075, %v3077, %v3073
    %v3079 = vmul.f32 %v3046, %v3078
    %v3080 = vrcp.pop %v3058
    %v3081 = vmul.f32 %v3058, %v3080
    %v3082 = vsub.f32 1.0, %v3081
    %v3083 = vmul.f32 %v3080, %v3082
    %v3084 = vadd.f32 %v3080, %v3083
    %vm3085 = vweird.f32 %v3058
    %vm3086 = vweird.f32 %v3080
    %vm3087 = vmor %vm3085, %vm3086
    %v3088 = vsel %vm3087, %v3080, %v3084
    %v3089 = vand.u32 2147483647, %v3058
    %vm3090 = vcmp.eq.f32.partialorder %v3089, 8.507059e+37
    %v3091 = vand.u32 %v3058, 2147483648
    %v3092 = vor.u32 1.1754944e-38, %v3091
    %v3093 = vsel %vm3090, %v3092, %v3088
    %v3094 = vmul.f32 %v3048, %v3093
    %v3095 = vrcp.pop %v3061
    %v3096 = vmul.f32 %v3061, %v3095
    %v3097 = vsub.f32 1.0, %v3096
    %v3098 = vmul.f32 %v3095, %v3097
    %v3099 = vadd.f32 %v3095, %v3098
    %vm3100 = vweird.f32 %v3061
    %vm3101 = vweird.f32 %v3095
    %vm3102 = vmor %vm3100, %vm3101
    %v3103 = vsel %vm3102, %v3095, %v3099
    %v3104 = vand.u32 2147483647, %v3061
    %vm3105 = vcmp.eq.f32.partialorder %v3104, 8.507059e+37
    %v3106 = vand.u32 %v3061, 2147483648
    %v3107 = vor.u32 1.1754944e-38, %v3106
    %v3108 = vsel %vm3105, %v3107, %v3103
    %v3109 = vmul.f32 %v3050, %v3108
    %v3110 = vrcp.pop %v3064
    %v3111 = vmul.f32 %v3064, %v3110
    %v3112 = vsub.f32 1.0, %v3111
    %v3113 = vmul.f32 %v3110, %v3112
    %v3114 = vadd.f32 %v3110, %v3113
    %vm3115 = vweird.f32 %v3064
    %vm3116 = vweird.f32 %v3110
    %vm3117 = vmor %vm3115, %vm3116
    %v3118 = vsel %vm3117, %v3110, %v3114
    %v3119 = vand.u32 2147483647, %v3064
    %vm3120 = vcmp.eq.f32.partialorder %v3119, 8.507059e+37
    %v3121 = vand.u32 %v3064, 2147483648
    %v3122 = vor.u32 1.1754944e-38, %v3121
    %v3123 = vsel %vm3120, %v3122, %v3118
    %v3124 = vmul.f32 %v3052, %v3123
    %3125 = vrot.lane.b32.xlu0 %v2942, 96
    %v3126 = vpop.permute.xlu0 %3125
    %v3128 = vsel %vm810, %v3079, 0
    %v3131 = vsel %vm810, %v3094, 0
    %v3134 = vsel %vm810, %v3109, 0
    %v3137 = vsel %vm810, %v3124, 0
    %v3139 = vsel %vm820, %v3126, 0
    %3141 = vmatpush.msra.mxu0 0.0
    %3142 = vmatpush.msra.mxu0 0.0
    %3143 = vmatpush.msra.mxu0 0.0
    %3144 = vmatpush.msra.mxu0 0.0
    %3145 = vmatpush.msra.mxu0 0.0
    %3146 = vmatpush.msra.mxu0 0.0
    %3147 = vmatpush.msra.mxu0 0.0
    %3148 = vmatpush.msra.mxu0 0.0
    %3149 = vmatpush.msra.mxu0 0.0
    %3150 = vmatpush.msra.mxu0 0.0
    %3151 = vmatpush.msra.mxu0 0.0
    %3152 = vmatpush.msra.mxu0 0.0
    %3153 = vmatpush.msra.mxu0 0.0
    %3154 = vmatpush.msra.mxu0 0.0
    %3155 = vmatpush.msra.mxu0 0.0
    %3156 = vmatpush.msra.mxu0 %v3139
    %3157 = vmatmul.f32.gmra.mxu0 %v3128
    %v3158 = vpop.f32.mrf.mxu0
    %v3159 = vadd.f32 0.0, %v3158
    %3160 = vmatmul.f32.gmra.mxu0 %v3131
    %v3161 = vpop.f32.mrf.mxu0
    %v3162 = vadd.f32 0.0, %v3161
    %3163 = vmatmul.f32.gmra.mxu0 %v3134
    %v3164 = vpop.f32.mrf.mxu0
    %v3165 = vadd.f32 0.0, %v3164
    %3166 = vmatmul.f32.gmra.mxu0 %v3137
    %v3167 = vpop.f32.mrf.mxu0
    %v3168 = vadd.f32 0.0, %v3167
    %3169 = vdwg.mxu0
    %v3170 = vmul.f32 %v3159, %v1622
    %v3171 = vmul.f32 %v3162, %v1623
    %v3172 = vmul.f32 %v3165, %v1624
    %v3173 = vmul.f32 %v3168, %v1625
    %3174 = vmatpush.msra.mxu0 0.0
    %3175 = vmatpush.msra.mxu0 0.0
    %3176 = vmatpush.msra.mxu0 0.0
    %3177 = vmatpush.msra.mxu0 0.0
    %3178 = vmatpush.msra.mxu0 0.0
    %3179 = vmatpush.msra.mxu0 0.0
    %3180 = vmatpush.msra.mxu0 0.0
    %3181 = vmatpush.msra.mxu0 0.0
    %3182 = vmatpush.msra.mxu0 0.0
    %3183 = vmatpush.msra.mxu0 0.0
    %3184 = vmatpush.msra.mxu0 0.0
    %3185 = vmatpush.msra.mxu0 0.0
    %3186 = vmatpush.msra.mxu0 %v3173
    %3187 = vmatpush.msra.mxu0 %v3172
    %3188 = vmatpush.msra.mxu0 %v3171
    %3189 = vmatpush.msra.mxu0 %v3170
    %3190 = vmatmul.f32.gmra.mxu0 %v1943
    %v3191 = vpop.f32.mrf.mxu0
    %v3192 = vadd.f32 0.0, %v3191
    %3193 = vdwg.mxu0
    %v3195 = vperm.slane %v2878, 0
    %v3198 = vsel %vm786, %v3192, 0
    %3200 = vmatpush.msra.mxu0 0.0
    %3201 = vmatpush.msra.mxu0 0.0
    %3202 = vmatpush.msra.mxu0 0.0
    %3203 = vmatpush.msra.mxu0 0.0
    %3204 = vmatpush.msra.mxu0 0.0
    %3205 = vmatpush.msra.mxu0 0.0
    %3206 = vmatpush.msra.mxu0 0.0
    %3207 = vmatpush.msra.mxu0 0.0
    %3208 = vmatpush.msra.mxu0 0.0
    %3209 = vmatpush.msra.mxu0 0.0
    %3210 = vmatpush.msra.mxu0 0.0
    %3211 = vmatpush.msra.mxu0 0.0
    %3212 = vmatpush.msra.mxu0 %v2876
    %3213 = vmatpush.msra.mxu0 %v2875
    %3214 = vmatpush.msra.mxu0 %v2874
    %3215 = vmatpush.msra.mxu0 %v2873
    %3216 = vmatmul.f32.gmra.mxu0 %v3198
    %v3217 = vpop.f32.mrf.mxu0
    %v3218 = vadd.f32 %v3195, %v3217
    %3219 = vdwg.mxu0
    %v3220 = vadd.f32 %v2830, %v3218
    %s3221 = scalar_lea.vmem [#allocation31], 1
    %v3222 = vld [vmem:[%s3221] sm:$0x1]
    %s3223 = scalar_lea.vmem [#allocation32], 1
    %v3224 = vld [vmem:[%s3223] sm:$0x1]
    %v3225 = vsel %vm786, %v3220, 0.0
    %3226 = vadd.xlane.f32.xlu0 %v3225
    %v3227 = vpop.xlane.xlu0 %3226
    %v3228 = vmul.f32 %v3227, %v745
    %v3229 = vsub.f32 %v3220, %v3228
    %v3230 = vmul.f32 %v3229, %v3229
    %v3231 = vsel %vm786, %v3230, 0.0
    %3232 = vadd.xlane.f32.xlu0 %v3231
    %v3233 = vpop.xlane.xlu0 %3232
    %v3234 = vmul.f32 %v3233, %v745
    %v3235 = vadd.f32 %v3234, 1e-05
    %v3236 = vrsqrt.pop %v3235
    %v3237 = vmul.f32 %v3236, %v3235
    %v3238 = vmul.f32 %v3237, %v3236
    %v3239 = vmul.f32 0.5, %v3238
    %v3240 = vsub.f32 1.5, %v3239
    %v3241 = vmul.f32 %v3236, %v3240
    %vm3242 = vweird.f32 %v3235
    %vm3243 = vweird.f32 %v3236
    %vm3244 = vmor %vm3242, %vm3243
    %v3245 = vsel %vm3244, %v3236, %v3241
    %v3246 = vmul.f32 %v3229, %v3245
    %v3248 = vperm.slane %v3222, 0
    %v3250 = vmul.f32 %v3246, %v3248
    %v3252 = vperm.slane %v3224, 0
    %v3254 = vadd.f32 %v3250, %v3252
    %s3255 = scalar_lea.vmem [#allocation34], 32
    %v3256 = vld [vmem:[%s3255] sm:$0xff]
    %v3257 = vld [vmem:[%s3255 + $0x8] sm:$0xff]
    %v3258 = vld [vmem:[%s3255 + $0x10] sm:$0xff]
    %v3259 = vld [vmem:[%s3255 + $0x18] sm:$0xff]
    %s3260 = scalar_lea.vmem [#allocation35], 1
    %v3261 = vld [vmem:[%s3260] sm:$0x1]
    %s3262 = scalar_lea.vmem %s59, 64
    %v3263 = vld [vmem:[%s3262] sm:$0xff]
    %v3264 = vld [vmem:[%s3262 + $0x8] sm:$0xff]
    %v3265 = vld [vmem:[%s3262 + $0x10] sm:$0xff]
    %v3266 = vld [vmem:[%s3262 + $0x18] sm:$0xff]
    %v3267 = vld [vmem:[%s3262 + $0x20] sm:$0xff]
    %v3268 = vld [vmem:[%s3262 + $0x28] sm:$0xff]
    %v3269 = vld [vmem:[%s3262 + $0x30] sm:$0xff]
    %v3270 = vld [vmem:[%s3262 + $0x38] sm:$0xff]
    %s3271 = scalar_lea.vmem [#allocation37], 1
    %v3272 = vld [vmem:[%s3271] sm:$0x1]
    %v3274 = vperm.slane %v3261, 0
    %v3277 = vsel %vm786, %v3254, 0
    %3279 = vmatpush.msra.mxu0 0.0
    %3280 = vmatpush.msra.mxu0 0.0
    %3281 = vmatpush.msra.mxu0 0.0
    %3282 = vmatpush.msra.mxu0 0.0
    %3283 = vmatpush.msra.mxu0 0.0
    %3284 = vmatpush.msra.mxu0 0.0
    %3285 = vmatpush.msra.mxu0 0.0
    %3286 = vmatpush.msra.mxu0 0.0
    %3287 = vmatpush.msra.mxu0 0.0
    %3288 = vmatpush.msra.mxu0 0.0
    %3289 = vmatpush.msra.mxu0 0.0
    %3290 = vmatpush.msra.mxu0 0.0
    %3291 = vmatpush.msra.mxu0 %v3259
    %3292 = vmatpush.msra.mxu0 %v3258
    %3293 = vmatpush.msra.mxu0 %v3257
    %3294 = vmatpush.msra.mxu0 %v3256
    %3295 = vmatmul.f32.gmra.mxu0 %v3277
    %v3296 = vpop.f32.mrf.mxu0
    %v3297 = vadd.f32 %v3274, %v3296
    %3298 = vdwg.mxu0
    %v3299 = vmax.f32 %v3297, 0.0
    %v3301 = vperm.slane %v3272, 0
    %v3304 = vsel %vm1139, %v3299, 0
    %3306 = vmatpush.msra.mxu0 0.0
    %3307 = vmatpush.msra.mxu0 0.0
    %3308 = vmatpush.msra.mxu0 0.0
    %3309 = vmatpush.msra.mxu0 0.0
    %3310 = vmatpush.msra.mxu0 0.0
    %3311 = vmatpush.msra.mxu0 0.0
    %3312 = vmatpush.msra.mxu0 0.0
    %3313 = vmatpush.msra.mxu0 0.0
    %3314 = vmatpush.msra.mxu0 %v3270
    %3315 = vmatpush.msra.mxu0 %v3269
    %3316 = vmatpush.msra.mxu0 %v3268
    %3317 = vmatpush.msra.mxu0 %v3267
    %3318 = vmatpush.msra.mxu0 %v3266
    %3319 = vmatpush.msra.mxu0 %v3265
    %3320 = vmatpush.msra.mxu0 %v3264
    %3321 = vmatpush.msra.mxu0 %v3263
    %3322 = vmatmul.f32.gmra.mxu0 %v3304
    %v3323 = vpop.f32.mrf.mxu0
    %v3324 = vadd.f32 %v3301, %v3323
    %3325 = vdwg.mxu0
    %v3326 = vadd.f32 %v3220, %v3324
    %v3327 = vld [vmem:[#allocation41] sm:$0x1]
    %v3328 = vld [vmem:[#allocation43] sm:$0x1]
    %v3329 = vsel %vm786, %v3326, 0.0
    %3330 = vadd.xlane.f32.xlu0 %v3329
    %v3331 = vpop.xlane.xlu0 %3330
    %v3332 = vmul.f32 %v3331, %v745
    %v3333 = vsub.f32 %v3326, %v3332
    %v3334 = vmul.f32 %v3333, %v3333
    %v3335 = vsel %vm786, %v3334, 0.0
    %3336 = vadd.xlane.f32.xlu0 %v3335
    %v3337 = vpop.xlane.xlu0 %3336
    %v3338 = vmul.f32 %v3337, %v745
    %v3339 = vadd.f32 %v3338, 1e-05
    %v3340 = vrsqrt.pop %v3339
    %v3341 = vmul.f32 %v3340, %v3339
    %v3342 = vmul.f32 %v3341, %v3340
    %v3343 = vmul.f32 0.5, %v3342
    %v3344 = vsub.f32 1.5, %v3343
    %v3345 = vmul.f32 %v3340, %v3344
    %vm3346 = vweird.f32 %v3339
    %vm3347 = vweird.f32 %v3340
    %vm3348 = vmor %vm3346, %vm3347
    %v3349 = vsel %vm3348, %v3340, %v3345
    %v3350 = vmul.f32 %v3333, %v3349
    %v3352 = vperm.slane %v3327, 0
    %v3354 = vmul.f32 %v3350, %v3352
    %v3356 = vperm.slane %v3328, 0
    %v3358 = vadd.f32 %v3354, %v3356
    %v3359 = vld [vmem:[%s71] sm:$0xff]
    %v3360 = vld [vmem:[%s71 + $0x8] sm:$0xff]
    %v3361 = vld [vmem:[%s71 + $0x10] sm:$0xff]
    %v3362 = vld [vmem:[%s71 + $0x18] sm:$0xff]
    %v3363 = vld [vmem:[#allocation44] sm:$0x1]
    %v3365 = vperm.slane %v3363, 0
    %v3368 = vsel %vm786, %v3358, 0
    %3370 = vmatpush.msra.mxu0 0.0
    %3371 = vmatpush.msra.mxu0 0.0
    %3372 = vmatpush.msra.mxu0 0.0
    %3373 = vmatpush.msra.mxu0 0.0
    %3374 = vmatpush.msra.mxu0 0.0
    %3375 = vmatpush.msra.mxu0 0.0
    %3376 = vmatpush.msra.mxu0 0.0
    %3377 = vmatpush.msra.mxu0 0.0
    %3378 = vmatpush.msra.mxu0 0.0
    %3379 = vmatpush.msra.mxu0 0.0
    %3380 = vmatpush.msra.mxu0 0.0
    %3381 = vmatpush.msra.mxu0 0.0
    %3382 = vmatpush.msra.mxu0 %v3362
    %3383 = vmatpush.msra.mxu0 %v3361
    %3384 = vmatpush.msra.mxu0 %v3360
    %3385 = vmatpush.msra.mxu0 %v3359
    %3386 = vmatmul.f32.gmra.mxu0 %v3368
    %v3387 = vpop.f32.mrf.mxu0
    %v3388 = vadd.f32 %v3365, %v3387
    %3389 = vdwg.mxu0
    %3390 = vst.msk [vmem:[#allocation56] sm:$0xff] %vm1698, %v3388
    // Predicated region
    $region326: #{dexterous_transformer_forward.1} parent=1 // pred_check
      _
    $region327: #{dexterous_transformer_forward.1} parent=1 // pred_check_branch
      %3392 = sbr.rel (0) target = $region329
    $region328: #{dexterous_transformer_forward.1} parent=1 // pred_region
      %3394 = vsyncadd [#allocation4], 0
      %s3396 = sshll.u32 [#allocation56], 4
      %s3397 = int_to_ptr.vmem [resolvable:$true] %s3396
      %s3398 = sshll.u32 %s93, 4
      %s3399 = int_to_ptr.hbm [resolvable:$true] %s3398
      %3401 = dma.vmem_to_hbm [thread:$0]  %s3397, 128, %s3399, [#allocation4]
    $region329: #{dexterous_transformer_forward.1} parent=1 // pred_fallthru
      _
    // Predicated region
    $region330: #{dexterous_transformer_forward.1} parent=1 // pred_check
      _
    $region331: #{dexterous_transformer_forward.1} parent=1 // pred_check_branch
      %3403 = sbr.rel (0) target = $region333
    $region332: #{dexterous_transformer_forward.1} parent=1 // pred_region
      %3405 = dma.done [#allocation4], 128
    $region333: #{dexterous_transformer_forward.1} parent=1 // pred_fallthru
      _
    %3406 = vsyncpa [#allocation3], 1
    %3407 = vsyncpa [#allocation6], 1
    %3408 = vsyncpa [#allocation9], 1
    %3409 = vsyncpa [#allocation12], 1
    %3410 = vsyncpa [#allocation15], 1
    %3411 = vsyncpa [#allocation18], 1
    %3412 = vsyncpa [#allocation21], 1
    %3413 = vsyncpa [#allocation24], 1
    %3414 = vsyncpa [#allocation27], 1
    %3415 = vsyncpa [#allocation30], 1
    %3416 = vsyncpa [#allocation33], 1
    %3417 = vsyncpa [#allocation36], 1
    %3418 = vsyncpa [#allocation39], 1
    %3419 = vsyncpa [#allocation42], 1
    %3420 = vsyncpa [#allocation45], 1
    %3421 = vsyncpa [#allocation48], 1
    %3422 = vsyncpa [#allocation51], 1
    %3423 = vsyncpa [#allocation54], 1
    %3424 = vsyncpa [#allocation4], 1

</llo_original>
